<compile_context>
chip_gen: v7x
topology: tpu7x:2x2x1
jax: 0.10.0
libtpu: 0.0.40
codegen_flags: <defaults>
</compile_context>

<pallas_src>
import math

import jax
import jax.numpy as jnp
import numpy as np
from jax import lax
from jax.experimental import pallas as pl
from jax.experimental.pallas import tpu as pltpu

# ----- module hyper-parameters (small, consistent with the PyTorch __init__) -----
N_LAYERS = 4
PREFIX_LEN = 8
INPUT_SIZE = 32
C2 = 2 * INPUT_SIZE                 # 64
SPARSITY = 0.25                     # k
N = PREFIX_LEN * C2                 # 512 elements per layer slice
J = int((1.0 - SPARSITY) * N)       # number of elements set to 0 (static, = 384)


def _subnet_kernel(layer_idx_ref, flat_ref, nat_ref, out_ref):
    """flat_ref: (1, 1, N)  selected layer's scores in row-major flat order (lanes = j).
    nat_ref:  (1, P, 2C) same data in its natural layout (for the i-side columns).
    out_ref:  (1, N) float32 binary mask in flat order (lane-dense store)."""
    del layer_idx_ref  # layer selection already handled by the BlockSpec index_maps

    s_flat = jnp.abs(flat_ref[0])                        # (1, N)   j along lanes
    s_nat = jnp.abs(nat_ref[0])                          # (P, C2)  natural layout

    # j-side operand: every sublane row holds the full flat score vector (hoisted).
    sj = jnp.broadcast_to(s_flat, (PREFIX_LEN, N))       # (P, N)

    # Tie-break helper (hoisted): element i = (r, c) of the natural layout has flat
    # index r*C2 + c, so "i sorts before j on an exact tie" iff (j - r*C2) > c.
    j_iota = lax.broadcasted_iota(jnp.int32, (PREFIX_LEN, N), 1)
    r_iota = lax.broadcasted_iota(jnp.int32, (PREFIX_LEN, N), 0)
    d = j_iota - C2 * r_iota                             # (P, N) int32

    # rank_acc[r, j] accumulates over lane-columns c whether element (r, c) sorts
    # strictly before element j (ascending order, stable tie-break on flat index).
    rank_acc = jnp.zeros((PREFIX_LEN, N), jnp.int32)
    for c in range(C2):                                  # 64 chunks, fully unrolled
        si = jnp.broadcast_to(s_nat[:, c:c + 1], (PREFIX_LEN, N))   # lane-broadcast
        lt = si < sj
        eq_tie = jnp.logical_and(si == sj, d > c)
        rank_acc = rank_acc + jnp.logical_or(lt, eq_tie).astype(jnp.int32)

    # rank[j] = number of elements sorting before j; GetSubnet keeps ranks >= J.
    rank = jnp.sum(rank_acc, axis=0, keepdims=True)      # (1, N) int32 (one XLU reduce)
    out_ref[...] = (rank >= J).astype(out_ref.dtype)     # unm asked-lane (4x128) store


def prefix_subnet_forward(adapters_mask, layer_idx):
    """adapters_mask: (N_LAYERS, PREFIX_LEN, 2*INPUT_SIZE) float32; layer_idx: int.
    Returns the (PREFIX_LEN, 2*INPUT_SIZE) float32 binary mask for that layer."""
    n_layers, p, c2 = adapters_mask.shape
    n = p * c2
    flat_view = adapters_mask.reshape(n_layers, 1, n)    # layout plumbing, free in XLA
    lidx = jnp.clip(jnp.asarray(layer_idx, jnp.int32), 0, n_layers - 1).reshape((1,))

    grid_spec = pltpu.PrefetchScalarGridSpec(
        num_scalar_prefetch=1,
        grid=(1,),
        in_specs=[
            # flat view of the selected layer: block = full (1, n) slab, lane-dense
            pl.BlockSpec((1, 1, n), lambda i, l: (l[0], 0, 0)),
            # natural view of the selected layer (i-side columns)
            pl.BlockSpec((1, p, c2), lambda i, l: (l[0], 0, 0)),
        ],
        out_specs=pl.BlockSpec((1, n), lambda i, l: (0, 0)),
    )
    out_flat = pl.pallas_call(
        _subnet_kernel,
        out_shape=jax.ShapeDtypeStruct((1, n), jnp.float32),
        grid_spec=grid_spec,
        compiler_params=pltpu.CompilerParams(dimension_semantics=("arbitrary",)),
    )(lidx, flat_view, adapters_mask)
    return out_flat.reshape(p, c2)                       # free reshape in the wrapper


def _reference(adapters_mask, layer_idx, sparsity):
    """Pure-JAX re-implementation of GetSubnet.forward for verification."""
    scores = jnp.abs(adapters_mask[layer_idx])
    flat = scores.reshape(-1)
    idx = jnp.argsort(flat)                              # stable ascending sort
    j = int((1.0 - sparsity) * flat.size)
    out = jnp.zeros_like(flat).at[idx[j:]].set(1.0)
    return out.reshape(scores.shape)


if __name__ == "__main__":
    key = jax.random.PRNGKey(0)

    # nn.init.kaiming_uniform_(tensor, a=sqrt(5)): bound = 1/sqrt(fan_in)
    fan_in = PREFIX_LEN * C2
    bound = 1.0 / math.sqrt(fan_in)
    adapters_mask = jax.random.uniform(
        key, (N_LAYERS, PREFIX_LEN, C2), jnp.float32, minval=-bound, maxval=bound
    )

    layer_idx = 2
    out = jax.block_until_ready(prefix_subnet_forward(adapters_mask, layer_idx))
    ref = jax.block_until_ready(_reference(adapters_mask, layer_idx, SPARSITY))

    assert out.shape == (PREFIX_LEN, C2) and out.dtype == jnp.float32
    assert np.array_equal(np.asarray(out), np.asarray(ref)), "mismatch vs reference"
    assert int(np.asarray(out).sum()) == N - J           # exactly N - J ones

    # second layer as an extra sanity check of the scalar-prefetch indexing
    out0 = jax.block_until_ready(prefix_subnet_forward(adapters_mask, 0))
    ref0 = jax.block_until_ready(_reference(adapters_mask, 0, SPARSITY))
    assert np.array_equal(np.asarray(out0), np.asarray(ref0)), "mismatch on layer 0"

    print("KERNEL_OK")
</pallas_src>

<mosaic_0001>
module attributes {stable_mosaic.version = 11 : i64} {
  func.func @_subnet_kernel(%arg0: i32, %arg1: memref<1xi32, #tpu.memory_space<smem>>, %arg2: memref<1x1x512xf32, #tpu.memory_space<vmem>>, %arg3: memref<1x8x64xf32, #tpu.memory_space<vmem>>, %arg4: memref<1x512xf32, #tpu.memory_space<vmem>>) attributes {dimension_semantics = [#tpu.dimension_semantics<arbitrary>], iteration_bounds = array<i64: 1>, scalar_prefetch = 1 : i64, scratch_operands = 0 : i64, tpu.core_type = #tpu.core_type<tc>, window_params = [{transform_indices = @transform_0, window_bounds = array<i64: 1, 1, 512>}, {transform_indices = @transform_1, window_bounds = array<i64: 1, 8, 64>}, {pipeline_mode = #tpu.pipeline_mode<synchronous>, transform_indices = @transform_2, window_bounds = array<i64: 1, 512>}]} {
    %c0 = arith.constant 0 : index
    %c0_0 = arith.constant 0 : index
    %c0_1 = arith.constant 0 : index
    %0 = vector.load %arg2[%c0, %c0_0, %c0_1] : memref<1x1x512xf32, #tpu.memory_space<vmem>>, vector<1x1x512xf32>
    %1 = vector.shape_cast %0 : vector<1x1x512xf32> to vector<1x512xf32>
    %2 = math.absf %1 : vector<1x512xf32>
    %c0_2 = arith.constant 0 : index
    %c0_3 = arith.constant 0 : index
    %c0_4 = arith.constant 0 : index
    %3 = vector.load %arg3[%c0_2, %c0_3, %c0_4] : memref<1x8x64xf32, #tpu.memory_space<vmem>>, vector<1x8x64xf32>
    %4 = vector.shape_cast %3 : vector<1x8x64xf32> to vector<8x64xf32>
    %5 = math.absf %4 : vector<8x64xf32>
    %6 = vector.shape_cast %2 : vector<1x512xf32> to vector<1x512xf32>
    %7 = vector.broadcast %6 : vector<1x512xf32> to vector<8x512xf32>
    %8 = tpu.iota {dimensions = array<i32: 1>} : vector<8x512xi32>
    %9 = tpu.iota {dimensions = array<i32: 0>} : vector<8x512xi32>
    %c64_i32 = arith.constant 64 : i32
    %10 = vector.broadcast %c64_i32 : i32 to vector<8x512xi32>
    %11 = arith.muli %10, %9 : vector<8x512xi32>
    %12 = arith.subi %8, %11 : vector<8x512xi32>
    %c0_i32 = arith.constant 0 : i32
    %13 = vector.broadcast %c0_i32 : i32 to vector<8x512xi32>
    %14 = vector.extract_strided_slice %5 {offsets = [0, 0], sizes = [8, 1], strides = [1, 1]} : vector<8x64xf32> to vector<8x1xf32>
    %15 = vector.shape_cast %14 : vector<8x1xf32> to vector<8x1xf32>
    %16 = vector.broadcast %15 : vector<8x1xf32> to vector<8x512xf32>
    %17 = arith.cmpf olt, %16, %7 : vector<8x512xf32>
    %18 = arith.cmpf oeq, %16, %7 : vector<8x512xf32>
    %c0_i32_5 = arith.constant 0 : i32
    %19 = vector.broadcast %c0_i32_5 : i32 to vector<8x512xi32>
    %20 = arith.cmpi sgt, %12, %19 : vector<8x512xi32>
    %21 = arith.andi %18, %20 : vector<8x512xi1>
    %22 = arith.ori %17, %21 : vector<8x512xi1>
    %23 = arith.extui %22 : vector<8x512xi1> to vector<8x512xi32>
    %24 = arith.addi %13, %23 : vector<8x512xi32>
    %25 = vector.extract_strided_slice %5 {offsets = [0, 1], sizes = [8, 1], strides = [1, 1]} : vector<8x64xf32> to vector<8x1xf32>
    %26 = vector.shape_cast %25 : vector<8x1xf32> to vector<8x1xf32>
    %27 = vector.broadcast %26 : vector<8x1xf32> to vector<8x512xf32>
    %28 = arith.cmpf olt, %27, %7 : vector<8x512xf32>
    %29 = arith.cmpf oeq, %27, %7 : vector<8x512xf32>
    %c1_i32 = arith.constant 1 : i32
    %30 = vector.broadcast %c1_i32 : i32 to vector<8x512xi32>
    %31 = arith.cmpi sgt, %12, %30 : vector<8x512xi32>
    %32 = arith.andi %29, %31 : vector<8x512xi1>
    %33 = arith.ori %28, %32 : vector<8x512xi1>
    %34 = arith.extui %33 : vector<8x512xi1> to vector<8x512xi32>
    %35 = arith.addi %24, %34 : vector<8x512xi32>
    %36 = vector.extract_strided_slice %5 {offsets = [0, 2], sizes = [8, 1], strides = [1, 1]} : vector<8x64xf32> to vector<8x1xf32>
    %37 = vector.shape_cast %36 : vector<8x1xf32> to vector<8x1xf32>
    %38 = vector.broadcast %37 : vector<8x1xf32> to vector<8x512xf32>
    %39 = arith.cmpf olt, %38, %7 : vector<8x512xf32>
    %40 = arith.cmpf oeq, %38, %7 : vector<8x512xf32>
    %c2_i32 = arith.constant 2 : i32
    %41 = vector.broadcast %c2_i32 : i32 to vector<8x512xi32>
    %42 = arith.cmpi sgt, %12, %41 : vector<8x512xi32>
    %43 = arith.andi %40, %42 : vector<8x512xi1>
    %44 = arith.ori %39, %43 : vector<8x512xi1>
    %45 = arith.extui %44 : vector<8x512xi1> to vector<8x512xi32>
    %46 = arith.addi %35, %45 : vector<8x512xi32>
    %47 = vector.extract_strided_slice %5 {offsets = [0, 3], sizes = [8, 1], strides = [1, 1]} : vector<8x64xf32> to vector<8x1xf32>
    %48 = vector.shape_cast %47 : vector<8x1xf32> to vector<8x1xf32>
    %49 = vector.broadcast %48 : vector<8x1xf32> to vector<8x512xf32>
    %50 = arith.cmpf olt, %49, %7 : vector<8x512xf32>
    %51 = arith.cmpf oeq, %49, %7 : vector<8x512xf32>
    %c3_i32 = arith.constant 3 : i32
    %52 = vector.broadcast %c3_i32 : i32 to vector<8x512xi32>
    %53 = arith.cmpi sgt, %12, %52 : vector<8x512xi32>
    %54 = arith.andi %51, %53 : vector<8x512xi1>
    %55 = arith.ori %50, %54 : vector<8x512xi1>
    %56 = arith.extui %55 : vector<8x512xi1> to vector<8x512xi32>
    %57 = arith.addi %46, %56 : vector<8x512xi32>
    %58 = vector.extract_strided_slice %5 {offsets = [0, 4], sizes = [8, 1], strides = [1, 1]} : vector<8x64xf32> to vector<8x1xf32>
    %59 = vector.shape_cast %58 : vector<8x1xf32> to vector<8x1xf32>
    %60 = vector.broadcast %59 : vector<8x1xf32> to vector<8x512xf32>
    %61 = arith.cmpf olt, %60, %7 : vector<8x512xf32>
    %62 = arith.cmpf oeq, %60, %7 : vector<8x512xf32>
    %c4_i32 = arith.constant 4 : i32
    %63 = vector.broadcast %c4_i32 : i32 to vector<8x512xi32>
    %64 = arith.cmpi sgt, %12, %63 : vector<8x512xi32>
    %65 = arith.andi %62, %64 : vector<8x512xi1>
    %66 = arith.ori %61, %65 : vector<8x512xi1>
    %67 = arith.extui %66 : vector<8x512xi1> to vector<8x512xi32>
    %68 = arith.addi %57, %67 : vector<8x512xi32>
    %69 = vector.extract_strided_slice %5 {offsets = [0, 5], sizes = [8, 1], strides = [1, 1]} : vector<8x64xf32> to vector<8x1xf32>
    %70 = vector.shape_cast %69 : vector<8x1xf32> to vector<8x1xf32>
    %71 = vector.broadcast %70 : vector<8x1xf32> to vector<8x512xf32>
    %72 = arith.cmpf olt, %71, %7 : vector<8x512xf32>
    %73 = arith.cmpf oeq, %71, %7 : vector<8x512xf32>
    %c5_i32 = arith.constant 5 : i32
    %74 = vector.broadcast %c5_i32 : i32 to vector<8x512xi32>
    %75 = arith.cmpi sgt, %12, %74 : vector<8x512xi32>
    %76 = arith.andi %73, %75 : vector<8x512xi1>
    %77 = arith.ori %72, %76 : vector<8x512xi1>
    %78 = arith.extui %77 : vector<8x512xi1> to vector<8x512xi32>
    %79 = arith.addi %68, %78 : vector<8x512xi32>
    %80 = vector.extract_strided_slice %5 {offsets = [0, 6], sizes = [8, 1], strides = [1, 1]} : vector<8x64xf32> to vector<8x1xf32>
    %81 = vector.shape_cast %80 : vector<8x1xf32> to vector<8x1xf32>
    %82 = vector.broadcast %81 : vector<8x1xf32> to vector<8x512xf32>
    %83 = arith.cmpf olt, %82, %7 : vector<8x512xf32>
    %84 = arith.cmpf oeq, %82, %7 : vector<8x512xf32>
    %c6_i32 = arith.constant 6 : i32
    %85 = vector.broadcast %c6_i32 : i32 to vector<8x512xi32>
    %86 = arith.cmpi sgt, %12, %85 : vector<8x512xi32>
    %87 = arith.andi %84, %86 : vector<8x512xi1>
    %88 = arith.ori %83, %87 : vector<8x512xi1>
    %89 = arith.extui %88 : vector<8x512xi1> to vector<8x512xi32>
    %90 = arith.addi %79, %89 : vector<8x512xi32>
    %91 = vector.extract_strided_slice %5 {offsets = [0, 7], sizes = [8, 1], strides = [1, 1]} : vector<8x64xf32> to vector<8x1xf32>
    %92 = vector.shape_cast %91 : vector<8x1xf32> to vector<8x1xf32>
    %93 = vector.broadcast %92 : vector<8x1xf32> to vector<8x512xf32>
    %94 = arith.cmpf olt, %93, %7 : vector<8x512xf32>
    %95 = arith.cmpf oeq, %93, %7 : vector<8x512xf32>
    %c7_i32 = arith.constant 7 : i32
    %96 = vector.broadcast %c7_i32 : i32 to vector<8x512xi32>
    %97 = arith.cmpi sgt, %12, %96 : vector<8x512xi32>
    %98 = arith.andi %95, %97 : vector<8x512xi1>
    %99 = arith.ori %94, %98 : vector<8x512xi1>
    %100 = arith.extui %99 : vector<8x512xi1> to vector<8x512xi32>
    %101 = arith.addi %90, %100 : vector<8x512xi32>
    %102 = vector.extract_strided_slice %5 {offsets = [0, 8], sizes = [8, 1], strides = [1, 1]} : vector<8x64xf32> to vector<8x1xf32>
    %103 = vector.shape_cast %102 : vector<8x1xf32> to vector<8x1xf32>
    %104 = vector.broadcast %103 : vector<8x1xf32> to vector<8x512xf32>
    %105 = arith.cmpf olt, %104, %7 : vector<8x512xf32>
    %106 = arith.cmpf oeq, %104, %7 : vector<8x512xf32>
    %c8_i32 = arith.constant 8 : i32
    %107 = vector.broadcast %c8_i32 : i32 to vector<8x512xi32>
    %108 = arith.cmpi sgt, %12, %107 : vector<8x512xi32>
    %109 = arith.andi %106, %108 : vector<8x512xi1>
    %110 = arith.ori %105, %109 : vector<8x512xi1>
    %111 = arith.extui %110 : vector<8x512xi1> to vector<8x512xi32>
    %112 = arith.addi %101, %111 : vector<8x512xi32>
    %113 = vector.extract_strided_slice %5 {offsets = [0, 9], sizes = [8, 1], strides = [1, 1]} : vector<8x64xf32> to vector<8x1xf32>
    %114 = vector.shape_cast %113 : vector<8x1xf32> to vector<8x1xf32>
    %115 = vector.broadcast %114 : vector<8x1xf32> to vector<8x512xf32>
    %116 = arith.cmpf olt, %115, %7 : vector<8x512xf32>
    %117 = arith.cmpf oeq, %115, %7 : vector<8x512xf32>
    %c9_i32 = arith.constant 9 : i32
    %118 = vector.broadcast %c9_i32 : i32 to vector<8x512xi32>
    %119 = arith.cmpi sgt, %12, %118 : vector<8x512xi32>
    %120 = arith.andi %117, %119 : vector<8x512xi1>
    %121 = arith.ori %116, %120 : vector<8x512xi1>
    %122 = arith.extui %121 : vector<8x512xi1> to vector<8x512xi32>
    %123 = arith.addi %112, %122 : vector<8x512xi32>
    %124 = vector.extract_strided_slice %5 {offsets = [0, 10], sizes = [8, 1], strides = [1, 1]} : vector<8x64xf32> to vector<8x1xf32>
    %125 = vector.shape_cast %124 : vector<8x1xf32> to vector<8x1xf32>
    %126 = vector.broadcast %125 : vector<8x1xf32> to vector<8x512xf32>
    %127 = arith.cmpf olt, %126, %7 : vector<8x512xf32>
    %128 = arith.cmpf oeq, %126, %7 : vector<8x512xf32>
    %c10_i32 = arith.constant 10 : i32
    %129 = vector.broadcast %c10_i32 : i32 to vector<8x512xi32>
    %130 = arith.cmpi sgt, %12, %129 : vector<8x512xi32>
    %131 = arith.andi %128, %130 : vector<8x512xi1>
    %132 = arith.ori %127, %131 : vector<8x512xi1>
    %133 = arith.extui %132 : vector<8x512xi1> to vector<8x512xi32>
    %134 = arith.addi %123, %133 : vector<8x512xi32>
    %135 = vector.extract_strided_slice %5 {offsets = [0, 11], sizes = [8, 1], strides = [1, 1]} : vector<8x64xf32> to vector<8x1xf32>
    %136 = vector.shape_cast %135 : vector<8x1xf32> to vector<8x1xf32>
    %137 = vector.broadcast %136 : vector<8x1xf32> to vector<8x512xf32>
    %138 = arith.cmpf olt, %137, %7 : vector<8x512xf32>
    %139 = arith.cmpf oeq, %137, %7 : vector<8x512xf32>
    %c11_i32 = arith.constant 11 : i32
    %140 = vector.broadcast %c11_i32 : i32 to vector<8x512xi32>
    %141 = arith.cmpi sgt, %12, %140 : vector<8x512xi32>
    %142 = arith.andi %139, %141 : vector<8x512xi1>
    %143 = arith.ori %138, %142 : vector<8x512xi1>
    %144 = arith.extui %143 : vector<8x512xi1> to vector<8x512xi32>
    %145 = arith.addi %134, %144 : vector<8x512xi32>
    %146 = vector.extract_strided_slice %5 {offsets = [0, 12], sizes = [8, 1], strides = [1, 1]} : vector<8x64xf32> to vector<8x1xf32>
    %147 = vector.shape_cast %146 : vector<8x1xf32> to vector<8x1xf32>
    %148 = vector.broadcast %147 : vector<8x1xf32> to vector<8x512xf32>
    %149 = arith.cmpf olt, %148, %7 : vector<8x512xf32>
    %150 = arith.cmpf oeq, %148, %7 : vector<8x512xf32>
    %c12_i32 = arith.constant 12 : i32
    %151 = vector.broadcast %c12_i32 : i32 to vector<8x512xi32>
    %152 = arith.cmpi sgt, %12, %151 : vector<8x512xi32>
    %153 = arith.andi %150, %152 : vector<8x512xi1>
    %154 = arith.ori %149, %153 : vector<8x512xi1>
    %155 = arith.extui %154 : vector<8x512xi1> to vector<8x512xi32>
    %156 = arith.addi %145, %155 : vector<8x512xi32>
    %157 = vector.extract_strided_slice %5 {offsets = [0, 13], sizes = [8, 1], strides = [1, 1]} : vector<8x64xf32> to vector<8x1xf32>
    %158 = vector.shape_cast %157 : vector<8x1xf32> to vector<8x1xf32>
    %159 = vector.broadcast %158 : vector<8x1xf32> to vector<8x512xf32>
    %160 = arith.cmpf olt, %159, %7 : vector<8x512xf32>
    %161 = arith.cmpf oeq, %159, %7 : vector<8x512xf32>
    %c13_i32 = arith.constant 13 : i32
    %162 = vector.broadcast %c13_i32 : i32 to vector<8x512xi32>
    %163 = arith.cmpi sgt, %12, %162 : vector<8x512xi32>
    %164 = arith.andi %161, %163 : vector<8x512xi1>
    %165 = arith.ori %160, %164 : vector<8x512xi1>
    %166 = arith.extui %165 : vector<8x512xi1> to vector<8x512xi32>
    %167 = arith.addi %156, %166 : vector<8x512xi32>
    %168 = vector.extract_strided_slice %5 {offsets = [0, 14], sizes = [8, 1], strides = [1, 1]} : vector<8x64xf32> to vector<8x1xf32>
    %169 = vector.shape_cast %168 : vector<8x1xf32> to vector<8x1xf32>
    %170 = vector.broadcast %169 : vector<8x1xf32> to vector<8x512xf32>
    %171 = arith.cmpf olt, %170, %7 : vector<8x512xf32>
    %172 = arith.cmpf oeq, %170, %7 : vector<8x512xf32>
    %c14_i32 = arith.constant 14 : i32
    %173 = vector.broadcast %c14_i32 : i32 to vector<8x512xi32>
    %174 = arith.cmpi sgt, %12, %173 : vector<8x512xi32>
    %175 = arith.andi %172, %174 : vector<8x512xi1>
    %176 = arith.ori %171, %175 : vector<8x512xi1>
    %177 = arith.extui %176 : vector<8x512xi1> to vector<8x512xi32>
    %178 = arith.addi %167, %177 : vector<8x512xi32>
    %179 = vector.extract_strided_slice %5 {offsets = [0, 15], sizes = [8, 1], strides = [1, 1]} : vector<8x64xf32> to vector<8x1xf32>
    %180 = vector.shape_cast %179 : vector<8x1xf32> to vector<8x1xf32>
    %181 = vector.broadcast %180 : vector<8x1xf32> to vector<8x512xf32>
    %182 = arith.cmpf olt, %181, %7 : vector<8x512xf32>
    %183 = arith.cmpf oeq, %181, %7 : vector<8x512xf32>
    %c15_i32 = arith.constant 15 : i32
    %184 = vector.broadcast %c15_i32 : i32 to vector<8x512xi32>
    %185 = arith.cmpi sgt, %12, %184 : vector<8x512xi32>
    %186 = arith.andi %183, %185 : vector<8x512xi1>
    %187 = arith.ori %182, %186 : vector<8x512xi1>
    %188 = arith.extui %187 : vector<8x512xi1> to vector<8x512xi32>
    %189 = arith.addi %178, %188 : vector<8x512xi32>
    %190 = vector.extract_strided_slice %5 {offsets = [0, 16], sizes = [8, 1], strides = [1, 1]} : vector<8x64xf32> to vector<8x1xf32>
    %191 = vector.shape_cast %190 : vector<8x1xf32> to vector<8x1xf32>
    %192 = vector.broadcast %191 : vector<8x1xf32> to vector<8x512xf32>
    %193 = arith.cmpf olt, %192, %7 : vector<8x512xf32>
    %194 = arith.cmpf oeq, %192, %7 : vector<8x512xf32>
    %c16_i32 = arith.constant 16 : i32
    %195 = vector.broadcast %c16_i32 : i32 to vector<8x512xi32>
    %196 = arith.cmpi sgt, %12, %195 : vector<8x512xi32>
    %197 = arith.andi %194, %196 : vector<8x512xi1>
    %198 = arith.ori %193, %197 : vector<8x512xi1>
    %199 = arith.extui %198 : vector<8x512xi1> to vector<8x512xi32>
    %200 = arith.addi %189, %199 : vector<8x512xi32>
    %201 = vector.extract_strided_slice %5 {offsets = [0, 17], sizes = [8, 1], strides = [1, 1]} : vector<8x64xf32> to vector<8x1xf32>
    %202 = vector.shape_cast %201 : vector<8x1xf32> to vector<8x1xf32>
    %203 = vector.broadcast %202 : vector<8x1xf32> to vector<8x512xf32>
    %204 = arith.cmpf olt, %203, %7 : vector<8x512xf32>
    %205 = arith.cmpf oeq, %203, %7 : vector<8x512xf32>
    %c17_i32 = arith.constant 17 : i32
    %206 = vector.broadcast %c17_i32 : i32 to vector<8x512xi32>
    %207 = arith.cmpi sgt, %12, %206 : vector<8x512xi32>
    %208 = arith.andi %205, %207 : vector<8x512xi1>
    %209 = arith.ori %204, %208 : vector<8x512xi1>
    %210 = arith.extui %209 : vector<8x512xi1> to vector<8x512xi32>
    %211 = arith.addi %200, %210 : vector<8x512xi32>
    %212 = vector.extract_strided_slice %5 {offsets = [0, 18], sizes = [8, 1], strides = [1, 1]} : vector<8x64xf32> to vector<8x1xf32>
    %213 = vector.shape_cast %212 : vector<8x1xf32> to vector<8x1xf32>
    %214 = vector.broadcast %213 : vector<8x1xf32> to vector<8x512xf32>
    %215 = arith.cmpf olt, %214, %7 : vector<8x512xf32>
    %216 = arith.cmpf oeq, %214, %7 : vector<8x512xf32>
    %c18_i32 = arith.constant 18 : i32
    %217 = vector.broadcast %c18_i32 : i32 to vector<8x512xi32>
    %218 = arith.cmpi sgt, %12, %217 : vector<8x512xi32>
    %219 = arith.andi %216, %218 : vector<8x512xi1>
    %220 = arith.ori %215, %219 : vector<8x512xi1>
    %221 = arith.extui %220 : vector<8x512xi1> to vector<8x512xi32>
    %222 = arith.addi %211, %221 : vector<8x512xi32>
    %223 = vector.extract_strided_slice %5 {offsets = [0, 19], sizes = [8, 1], strides = [1, 1]} : vector<8x64xf32> to vector<8x1xf32>
    %224 = vector.shape_cast %223 : vector<8x1xf32> to vector<8x1xf32>
    %225 = vector.broadcast %224 : vector<8x1xf32> to vector<8x512xf32>
    %226 = arith.cmpf olt, %225, %7 : vector<8x512xf32>
    %227 = arith.cmpf oeq, %225, %7 : vector<8x512xf32>
    %c19_i32 = arith.constant 19 : i32
    %228 = vector.broadcast %c19_i32 : i32 to vector<8x512xi32>
    %229 = arith.cmpi sgt, %12, %228 : vector<8x512xi32>
    %230 = arith.andi %227, %229 : vector<8x512xi1>
    %231 = arith.ori %226, %230 : vector<8x512xi1>
    %232 = arith.extui %231 : vector<8x512xi1> to vector<8x512xi32>
    %233 = arith.addi %222, %232 : vector<8x512xi32>
    %234 = vector.extract_strided_slice %5 {offsets = [0, 20], sizes = [8, 1], strides = [1, 1]} : vector<8x64xf32> to vector<8x1xf32>
    %235 = vector.shape_cast %234 : vector<8x1xf32> to vector<8x1xf32>
    %236 = vector.broadcast %235 : vector<8x1xf32> to vector<8x512xf32>
    %237 = arith.cmpf olt, %236, %7 : vector<8x512xf32>
    %238 = arith.cmpf oeq, %236, %7 : vector<8x512xf32>
    %c20_i32 = arith.constant 20 : i32
    %239 = vector.broadcast %c20_i32 : i32 to vector<8x512xi32>
    %240 = arith.cmpi sgt, %12, %239 : vector<8x512xi32>
    %241 = arith.andi %238, %240 : vector<8x512xi1>
    %242 = arith.ori %237, %241 : vector<8x512xi1>
    %243 = arith.extui %242 : vector<8x512xi1> to vector<8x512xi32>
    %244 = arith.addi %233, %243 : vector<8x512xi32>
    %245 = vector.extract_strided_slice %5 {offsets = [0, 21], sizes = [8, 1], strides = [1, 1]} : vector<8x64xf32> to vector<8x1xf32>
    %246 = vector.shape_cast %245 : vector<8x1xf32> to vector<8x1xf32>
    %247 = vector.broadcast %246 : vector<8x1xf32> to vector<8x512xf32>
    %248 = arith.cmpf olt, %247, %7 : vector<8x512xf32>
    %249 = arith.cmpf oeq, %247, %7 : vector<8x512xf32>
    %c21_i32 = arith.constant 21 : i32
    %250 = vector.broadcast %c21_i32 : i32 to vector<8x512xi32>
    %251 = arith.cmpi sgt, %12, %250 : vector<8x512xi32>
    %252 = arith.andi %249, %251 : vector<8x512xi1>
    %253 = arith.ori %248, %252 : vector<8x512xi1>
    %254 = arith.extui %253 : vector<8x512xi1> to vector<8x512xi32>
    %255 = arith.addi %244, %254 : vector<8x512xi32>
    %256 = vector.extract_strided_slice %5 {offsets = [0, 22], sizes = [8, 1], strides = [1, 1]} : vector<8x64xf32> to vector<8x1xf32>
    %257 = vector.shape_cast %256 : vector<8x1xf32> to vector<8x1xf32>
    %258 = vector.broadcast %257 : vector<8x1xf32> to vector<8x512xf32>
    %259 = arith.cmpf olt, %258, %7 : vector<8x512xf32>
    %260 = arith.cmpf oeq, %258, %7 : vector<8x512xf32>
    %c22_i32 = arith.constant 22 : i32
    %261 = vector.broadcast %c22_i32 : i32 to vector<8x512xi32>
    %262 = arith.cmpi sgt, %12, %261 : vector<8x512xi32>
    %263 = arith.andi %260, %262 : vector<8x512xi1>
    %264 = arith.ori %259, %263 : vector<8x512xi1>
    %265 = arith.extui %264 : vector<8x512xi1> to vector<8x512xi32>
    %266 = arith.addi %255, %265 : vector<8x512xi32>
    %267 = vector.extract_strided_slice %5 {offsets = [0, 23], sizes = [8, 1], strides = [1, 1]} : vector<8x64xf32> to vector<8x1xf32>
    %268 = vector.shape_cast %267 : vector<8x1xf32> to vector<8x1xf32>
    %269 = vector.broadcast %268 : vector<8x1xf32> to vector<8x512xf32>
    %270 = arith.cmpf olt, %269, %7 : vector<8x512xf32>
    %271 = arith.cmpf oeq, %269, %7 : vector<8x512xf32>
    %c23_i32 = arith.constant 23 : i32
    %272 = vector.broadcast %c23_i32 : i32 to vector<8x512xi32>
    %273 = arith.cmpi sgt, %12, %272 : vector<8x512xi32>
    %274 = arith.andi %271, %273 : vector<8x512xi1>
    %275 = arith.ori %270, %274 : vector<8x512xi1>
    %276 = arith.extui %275 : vector<8x512xi1> to vector<8x512xi32>
    %277 = arith.addi %266, %276 : vector<8x512xi32>
    %278 = vector.extract_strided_slice %5 {offsets = [0, 24], sizes = [8, 1], strides = [1, 1]} : vector<8x64xf32> to vector<8x1xf32>
    %279 = vector.shape_cast %278 : vector<8x1xf32> to vector<8x1xf32>
    %280 = vector.broadcast %279 : vector<8x1xf32> to vector<8x512xf32>
    %281 = arith.cmpf olt, %280, %7 : vector<8x512xf32>
    %282 = arith.cmpf oeq, %280, %7 : vector<8x512xf32>
    %c24_i32 = arith.constant 24 : i32
    %283 = vector.broadcast %c24_i32 : i32 to vector<8x512xi32>
    %284 = arith.cmpi sgt, %12, %283 : vector<8x512xi32>
    %285 = arith.andi %282, %284 : vector<8x512xi1>
    %286 = arith.ori %281, %285 : vector<8x512xi1>
    %287 = arith.extui %286 : vector<8x512xi1> to vector<8x512xi32>
    %288 = arith.addi %277, %287 : vector<8x512xi32>
    %289 = vector.extract_strided_slice %5 {offsets = [0, 25], sizes = [8, 1], strides = [1, 1]} : vector<8x64xf32> to vector<8x1xf32>
    %290 = vector.shape_cast %289 : vector<8x1xf32> to vector<8x1xf32>
    %291 = vector.broadcast %290 : vector<8x1xf32> to vector<8x512xf32>
    %292 = arith.cmpf olt, %291, %7 : vector<8x512xf32>
    %293 = arith.cmpf oeq, %291, %7 : vector<8x512xf32>
    %c25_i32 = arith.constant 25 : i32
    %294 = vector.broadcast %c25_i32 : i32 to vector<8x512xi32>
    %295 = arith.cmpi sgt, %12, %294 : vector<8x512xi32>
    %296 = arith.andi %293, %295 : vector<8x512xi1>
    %297 = arith.ori %292, %296 : vector<8x512xi1>
    %298 = arith.extui %297 : vector<8x512xi1> to vector<8x512xi32>
    %299 = arith.addi %288, %298 : vector<8x512xi32>
    %300 = vector.extract_strided_slice %5 {offsets = [0, 26], sizes = [8, 1], strides = [1, 1]} : vector<8x64xf32> to vector<8x1xf32>
    %301 = vector.shape_cast %300 : vector<8x1xf32> to vector<8x1xf32>
    %302 = vector.broadcast %301 : vector<8x1xf32> to vector<8x512xf32>
    %303 = arith.cmpf olt, %302, %7 : vector<8x512xf32>
    %304 = arith.cmpf oeq, %302, %7 : vector<8x512xf32>
    %c26_i32 = arith.constant 26 : i32
    %305 = vector.broadcast %c26_i32 : i32 to vector<8x512xi32>
    %306 = arith.cmpi sgt, %12, %305 : vector<8x512xi32>
    %307 = arith.andi %304, %306 : vector<8x512xi1>
    %308 = arith.ori %303, %307 : vector<8x512xi1>
    %309 = arith.extui %308 : vector<8x512xi1> to vector<8x512xi32>
    %310 = arith.addi %299, %309 : vector<8x512xi32>
    %311 = vector.extract_strided_slice %5 {offsets = [0, 27], sizes = [8, 1], strides = [1, 1]} : vector<8x64xf32> to vector<8x1xf32>
    %312 = vector.shape_cast %311 : vector<8x1xf32> to vector<8x1xf32>
    %313 = vector.broadcast %312 : vector<8x1xf32> to vector<8x512xf32>
    %314 = arith.cmpf olt, %313, %7 : vector<8x512xf32>
    %315 = arith.cmpf oeq, %313, %7 : vector<8x512xf32>
    %c27_i32 = arith.constant 27 : i32
    %316 = vector.broadcast %c27_i32 : i32 to vector<8x512xi32>
    %317 = arith.cmpi sgt, %12, %316 : vector<8x512xi32>
    %318 = arith.andi %315, %317 : vector<8x512xi1>
    %319 = arith.ori %314, %318 : vector<8x512xi1>
    %320 = arith.extui %319 : vector<8x512xi1> to vector<8x512xi32>
    %321 = arith.addi %310, %320 : vector<8x512xi32>
    %322 = vector.extract_strided_slice %5 {offsets = [0, 28], sizes = [8, 1], strides = [1, 1]} : vector<8x64xf32> to vector<8x1xf32>
    %323 = vector.shape_cast %322 : vector<8x1xf32> to vector<8x1xf32>
    %324 = vector.broadcast %323 : vector<8x1xf32> to vector<8x512xf32>
    %325 = arith.cmpf olt, %324, %7 : vector<8x512xf32>
    %326 = arith.cmpf oeq, %324, %7 : vector<8x512xf32>
    %c28_i32 = arith.constant 28 : i32
    %327 = vector.broadcast %c28_i32 : i32 to vector<8x512xi32>
    %328 = arith.cmpi sgt, %12, %327 : vector<8x512xi32>
    %329 = arith.andi %326, %328 : vector<8x512xi1>
    %330 = arith.ori %325, %329 : vector<8x512xi1>
    %331 = arith.extui %330 : vector<8x512xi1> to vector<8x512xi32>
    %332 = arith.addi %321, %331 : vector<8x512xi32>
    %333 = vector.extract_strided_slice %5 {offsets = [0, 29], sizes = [8, 1], strides = [1, 1]} : vector<8x64xf32> to vector<8x1xf32>
    %334 = vector.shape_cast %333 : vector<8x1xf32> to vector<8x1xf32>
    %335 = vector.broadcast %334 : vector<8x1xf32> to vector<8x512xf32>
    %336 = arith.cmpf olt, %335, %7 : vector<8x512xf32>
    %337 = arith.cmpf oeq, %335, %7 : vector<8x512xf32>
    %c29_i32 = arith.constant 29 : i32
    %338 = vector.broadcast %c29_i32 : i32 to vector<8x512xi32>
    %339 = arith.cmpi sgt, %12, %338 : vector<8x512xi32>
    %340 = arith.andi %337, %339 : vector<8x512xi1>
    %341 = arith.ori %336, %340 : vector<8x512xi1>
    %342 = arith.extui %341 : vector<8x512xi1> to vector<8x512xi32>
    %343 = arith.addi %332, %342 : vector<8x512xi32>
    %344 = vector.extract_strided_slice %5 {offsets = [0, 30], sizes = [8, 1], strides = [1, 1]} : vector<8x64xf32> to vector<8x1xf32>
    %345 = vector.shape_cast %344 : vector<8x1xf32> to vector<8x1xf32>
    %346 = vector.broadcast %345 : vector<8x1xf32> to vector<8x512xf32>
    %347 = arith.cmpf olt, %346, %7 : vector<8x512xf32>
    %348 = arith.cmpf oeq, %346, %7 : vector<8x512xf32>
    %c30_i32 = arith.constant 30 : i32
    %349 = vector.broadcast %c30_i32 : i32 to vector<8x512xi32>
    %350 = arith.cmpi sgt, %12, %349 : vector<8x512xi32>
    %351 = arith.andi %348, %350 : vector<8x512xi1>
    %352 = arith.ori %347, %351 : vector<8x512xi1>
    %353 = arith.extui %352 : vector<8x512xi1> to vector<8x512xi32>
    %354 = arith.addi %343, %353 : vector<8x512xi32>
    %355 = vector.extract_strided_slice %5 {offsets = [0, 31], sizes = [8, 1], strides = [1, 1]} : vector<8x64xf32> to vector<8x1xf32>
    %356 = vector.shape_cast %355 : vector<8x1xf32> to vector<8x1xf32>
    %357 = vector.broadcast %356 : vector<8x1xf32> to vector<8x512xf32>
    %358 = arith.cmpf olt, %357, %7 : vector<8x512xf32>
    %359 = arith.cmpf oeq, %357, %7 : vector<8x512xf32>
    %c31_i32 = arith.constant 31 : i32
    %360 = vector.broadcast %c31_i32 : i32 to vector<8x512xi32>
    %361 = arith.cmpi sgt, %12, %360 : vector<8x512xi32>
    %362 = arith.andi %359, %361 : vector<8x512xi1>
    %363 = arith.ori %358, %362 : vector<8x512xi1>
    %364 = arith.extui %363 : vector<8x512xi1> to vector<8x512xi32>
    %365 = arith.addi %354, %364 : vector<8x512xi32>
    %366 = vector.extract_strided_slice %5 {offsets = [0, 32], sizes = [8, 1], strides = [1, 1]} : vector<8x64xf32> to vector<8x1xf32>
    %367 = vector.shape_cast %366 : vector<8x1xf32> to vector<8x1xf32>
    %368 = vector.broadcast %367 : vector<8x1xf32> to vector<8x512xf32>
    %369 = arith.cmpf olt, %368, %7 : vector<8x512xf32>
    %370 = arith.cmpf oeq, %368, %7 : vector<8x512xf32>
    %c32_i32 = arith.constant 32 : i32
    %371 = vector.broadcast %c32_i32 : i32 to vector<8x512xi32>
    %372 = arith.cmpi sgt, %12, %371 : vector<8x512xi32>
    %373 = arith.andi %370, %372 : vector<8x512xi1>
    %374 = arith.ori %369, %373 : vector<8x512xi1>
    %375 = arith.extui %374 : vector<8x512xi1> to vector<8x512xi32>
    %376 = arith.addi %365, %375 : vector<8x512xi32>
    %377 = vector.extract_strided_slice %5 {offsets = [0, 33], sizes = [8, 1], strides = [1, 1]} : vector<8x64xf32> to vector<8x1xf32>
    %378 = vector.shape_cast %377 : vector<8x1xf32> to vector<8x1xf32>
    %379 = vector.broadcast %378 : vector<8x1xf32> to vector<8x512xf32>
    %380 = arith.cmpf olt, %379, %7 : vector<8x512xf32>
    %381 = arith.cmpf oeq, %379, %7 : vector<8x512xf32>
    %c33_i32 = arith.constant 33 : i32
    %382 = vector.broadcast %c33_i32 : i32 to vector<8x512xi32>
    %383 = arith.cmpi sgt, %12, %382 : vector<8x512xi32>
    %384 = arith.andi %381, %383 : vector<8x512xi1>
    %385 = arith.ori %380, %384 : vector<8x512xi1>
    %386 = arith.extui %385 : vector<8x512xi1> to vector<8x512xi32>
    %387 = arith.addi %376, %386 : vector<8x512xi32>
    %388 = vector.extract_strided_slice %5 {offsets = [0, 34], sizes = [8, 1], strides = [1, 1]} : vector<8x64xf32> to vector<8x1xf32>
    %389 = vector.shape_cast %388 : vector<8x1xf32> to vector<8x1xf32>
    %390 = vector.broadcast %389 : vector<8x1xf32> to vector<8x512xf32>
    %391 = arith.cmpf olt, %390, %7 : vector<8x512xf32>
    %392 = arith.cmpf oeq, %390, %7 : vector<8x512xf32>
    %c34_i32 = arith.constant 34 : i32
    %393 = vector.broadcast %c34_i32 : i32 to vector<8x512xi32>
    %394 = arith.cmpi sgt, %12, %393 : vector<8x512xi32>
    %395 = arith.andi %392, %394 : vector<8x512xi1>
    %396 = arith.ori %391, %395 : vector<8x512xi1>
    %397 = arith.extui %396 : vector<8x512xi1> to vector<8x512xi32>
    %398 = arith.addi %387, %397 : vector<8x512xi32>
    %399 = vector.extract_strided_slice %5 {offsets = [0, 35], sizes = [8, 1], strides = [1, 1]} : vector<8x64xf32> to vector<8x1xf32>
    %400 = vector.shape_cast %399 : vector<8x1xf32> to vector<8x1xf32>
    %401 = vector.broadcast %400 : vector<8x1xf32> to vector<8x512xf32>
    %402 = arith.cmpf olt, %401, %7 : vector<8x512xf32>
    %403 = arith.cmpf oeq, %401, %7 : vector<8x512xf32>
    %c35_i32 = arith.constant 35 : i32
    %404 = vector.broadcast %c35_i32 : i32 to vector<8x512xi32>
    %405 = arith.cmpi sgt, %12, %404 : vector<8x512xi32>
    %406 = arith.andi %403, %405 : vector<8x512xi1>
    %407 = arith.ori %402, %406 : vector<8x512xi1>
    %408 = arith.extui %407 : vector<8x512xi1> to vector<8x512xi32>
    %409 = arith.addi %398, %408 : vector<8x512xi32>
    %410 = vector.extract_strided_slice %5 {offsets = [0, 36], sizes = [8, 1], strides = [1, 1]} : vector<8x64xf32> to vector<8x1xf32>
    %411 = vector.shape_cast %410 : vector<8x1xf32> to vector<8x1xf32>
    %412 = vector.broadcast %411 : vector<8x1xf32> to vector<8x512xf32>
    %413 = arith.cmpf olt, %412, %7 : vector<8x512xf32>
    %414 = arith.cmpf oeq, %412, %7 : vector<8x512xf32>
    %c36_i32 = arith.constant 36 : i32
    %415 = vector.broadcast %c36_i32 : i32 to vector<8x512xi32>
    %416 = arith.cmpi sgt, %12, %415 : vector<8x512xi32>
    %417 = arith.andi %414, %416 : vector<8x512xi1>
    %418 = arith.ori %413, %417 : vector<8x512xi1>
    %419 = arith.extui %418 : vector<8x512xi1> to vector<8x512xi32>
    %420 = arith.addi %409, %419 : vector<8x512xi32>
    %421 = vector.extract_strided_slice %5 {offsets = [0, 37], sizes = [8, 1], strides = [1, 1]} : vector<8x64xf32> to vector<8x1xf32>
    %422 = vector.shape_cast %421 : vector<8x1xf32> to vector<8x1xf32>
    %423 = vector.broadcast %422 : vector<8x1xf32> to vector<8x512xf32>
    %424 = arith.cmpf olt, %423, %7 : vector<8x512xf32>
    %425 = arith.cmpf oeq, %423, %7 : vector<8x512xf32>
    %c37_i32 = arith.constant 37 : i32
    %426 = vector.broadcast %c37_i32 : i32 to vector<8x512xi32>
    %427 = arith.cmpi sgt, %12, %426 : vector<8x512xi32>
    %428 = arith.andi %425, %427 : vector<8x512xi1>
    %429 = arith.ori %424, %428 : vector<8x512xi1>
    %430 = arith.extui %429 : vector<8x512xi1> to vector<8x512xi32>
    %431 = arith.addi %420, %430 : vector<8x512xi32>
    %432 = vector.extract_strided_slice %5 {offsets = [0, 38], sizes = [8, 1], strides = [1, 1]} : vector<8x64xf32> to vector<8x1xf32>
    %433 = vector.shape_cast %432 : vector<8x1xf32> to vector<8x1xf32>
    %434 = vector.broadcast %433 : vector<8x1xf32> to vector<8x512xf32>
    %435 = arith.cmpf olt, %434, %7 : vector<8x512xf32>
    %436 = arith.cmpf oeq, %434, %7 : vector<8x512xf32>
    %c38_i32 = arith.constant 38 : i32
    %437 = vector.broadcast %c38_i32 : i32 to vector<8x512xi32>
    %438 = arith.cmpi sgt, %12, %437 : vector<8x512xi32>
    %439 = arith.andi %436, %438 : vector<8x512xi1>
    %440 = arith.ori %435, %439 : vector<8x512xi1>
    %441 = arith.extui %440 : vector<8x512xi1> to vector<8x512xi32>
    %442 = arith.addi %431, %441 : vector<8x512xi32>
    %443 = vector.extract_strided_slice %5 {offsets = [0, 39], sizes = [8, 1], strides = [1, 1]} : vector<8x64xf32> to vector<8x1xf32>
    %444 = vector.shape_cast %443 : vector<8x1xf32> to vector<8x1xf32>
    %445 = vector.broadcast %444 : vector<8x1xf32> to vector<8x512xf32>
    %446 = arith.cmpf olt, %445, %7 : vector<8x512xf32>
    %447 = arith.cmpf oeq, %445, %7 : vector<8x512xf32>
    %c39_i32 = arith.constant 39 : i32
    %448 = vector.broadcast %c39_i32 : i32 to vector<8x512xi32>
    %449 = arith.cmpi sgt, %12, %448 : vector<8x512xi32>
    %450 = arith.andi %447, %449 : vector<8x512xi1>
    %451 = arith.ori %446, %450 : vector<8x512xi1>
    %452 = arith.extui %451 : vector<8x512xi1> to vector<8x512xi32>
    %453 = arith.addi %442, %452 : vector<8x512xi32>
    %454 = vector.extract_strided_slice %5 {offsets = [0, 40], sizes = [8, 1], strides = [1, 1]} : vector<8x64xf32> to vector<8x1xf32>
    %455 = vector.shape_cast %454 : vector<8x1xf32> to vector<8x1xf32>
    %456 = vector.broadcast %455 : vector<8x1xf32> to vector<8x512xf32>
    %457 = arith.cmpf olt, %456, %7 : vector<8x512xf32>
    %458 = arith.cmpf oeq, %456, %7 : vector<8x512xf32>
    %c40_i32 = arith.constant 40 : i32
    %459 = vector.broadcast %c40_i32 : i32 to vector<8x512xi32>
    %460 = arith.cmpi sgt, %12, %459 : vector<8x512xi32>
    %461 = arith.andi %458, %460 : vector<8x512xi1>
    %462 = arith.ori %457, %461 : vector<8x512xi1>
    %463 = arith.extui %462 : vector<8x512xi1> to vector<8x512xi32>
    %464 = arith.addi %453, %463 : vector<8x512xi32>
    %465 = vector.extract_strided_slice %5 {offsets = [0, 41], sizes = [8, 1], strides = [1, 1]} : vector<8x64xf32> to vector<8x1xf32>
    %466 = vector.shape_cast %465 : vector<8x1xf32> to vector<8x1xf32>
    %467 = vector.broadcast %466 : vector<8x1xf32> to vector<8x512xf32>
    %468 = arith.cmpf olt, %467, %7 : vector<8x512xf32>
    %469 = arith.cmpf oeq, %467, %7 : vector<8x512xf32>
    %c41_i32 = arith.constant 41 : i32
    %470 = vector.broadcast %c41_i32 : i32 to vector<8x512xi32>
    %471 = arith.cmpi sgt, %12, %470 : vector<8x512xi32>
    %472 = arith.andi %469, %471 : vector<8x512xi1>
    %473 = arith.ori %468, %472 : vector<8x512xi1>
    %474 = arith.extui %473 : vector<8x512xi1> to vector<8x512xi32>
    %475 = arith.addi %464, %474 : vector<8x512xi32>
    %476 = vector.extract_strided_slice %5 {offsets = [0, 42], sizes = [8, 1], strides = [1, 1]} : vector<8x64xf32> to vector<8x1xf32>
    %477 = vector.shape_cast %476 : vector<8x1xf32> to vector<8x1xf32>
    %478 = vector.broadcast %477 : vector<8x1xf32> to vector<8x512xf32>
    %479 = arith.cmpf olt, %478, %7 : vector<8x512xf32>
    %480 = arith.cmpf oeq, %478, %7 : vector<8x512xf32>
    %c42_i32 = arith.constant 42 : i32
    %481 = vector.broadcast %c42_i32 : i32 to vector<8x512xi32>
    %482 = arith.cmpi sgt, %12, %481 : vector<8x512xi32>
    %483 = arith.andi %480, %482 : vector<8x512xi1>
    %484 = arith.ori %479, %483 : vector<8x512xi1>
    %485 = arith.extui %484 : vector<8x512xi1> to vector<8x512xi32>
    %486 = arith.addi %475, %485 : vector<8x512xi32>
    %487 = vector.extract_strided_slice %5 {offsets = [0, 43], sizes = [8, 1], strides = [1, 1]} : vector<8x64xf32> to vector<8x1xf32>
    %488 = vector.shape_cast %487 : vector<8x1xf32> to vector<8x1xf32>
    %489 = vector.broadcast %488 : vector<8x1xf32> to vector<8x512xf32>
    %490 = arith.cmpf olt, %489, %7 : vector<8x512xf32>
    %491 = arith.cmpf oeq, %489, %7 : vector<8x512xf32>
    %c43_i32 = arith.constant 43 : i32
    %492 = vector.broadcast %c43_i32 : i32 to vector<8x512xi32>
    %493 = arith.cmpi sgt, %12, %492 : vector<8x512xi32>
    %494 = arith.andi %491, %493 : vector<8x512xi1>
    %495 = arith.ori %490, %494 : vector<8x512xi1>
    %496 = arith.extui %495 : vector<8x512xi1> to vector<8x512xi32>
    %497 = arith.addi %486, %496 : vector<8x512xi32>
    %498 = vector.extract_strided_slice %5 {offsets = [0, 44], sizes = [8, 1], strides = [1, 1]} : vector<8x64xf32> to vector<8x1xf32>
    %499 = vector.shape_cast %498 : vector<8x1xf32> to vector<8x1xf32>
    %500 = vector.broadcast %499 : vector<8x1xf32> to vector<8x512xf32>
    %501 = arith.cmpf olt, %500, %7 : vector<8x512xf32>
    %502 = arith.cmpf oeq, %500, %7 : vector<8x512xf32>
    %c44_i32 = arith.constant 44 : i32
    %503 = vector.broadcast %c44_i32 : i32 to vector<8x512xi32>
    %504 = arith.cmpi sgt, %12, %503 : vector<8x512xi32>
    %505 = arith.andi %502, %504 : vector<8x512xi1>
    %506 = arith.ori %501, %505 : vector<8x512xi1>
    %507 = arith.extui %506 : vector<8x512xi1> to vector<8x512xi32>
    %508 = arith.addi %497, %507 : vector<8x512xi32>
    %509 = vector.extract_strided_slice %5 {offsets = [0, 45], sizes = [8, 1], strides = [1, 1]} : vector<8x64xf32> to vector<8x1xf32>
    %510 = vector.shape_cast %509 : vector<8x1xf32> to vector<8x1xf32>
    %511 = vector.broadcast %510 : vector<8x1xf32> to vector<8x512xf32>
    %512 = arith.cmpf olt, %511, %7 : vector<8x512xf32>
    %513 = arith.cmpf oeq, %511, %7 : vector<8x512xf32>
    %c45_i32 = arith.constant 45 : i32
    %514 = vector.broadcast %c45_i32 : i32 to vector<8x512xi32>
    %515 = arith.cmpi sgt, %12, %514 : vector<8x512xi32>
    %516 = arith.andi %513, %515 : vector<8x512xi1>
    %517 = arith.ori %512, %516 : vector<8x512xi1>
    %518 = arith.extui %517 : vector<8x512xi1> to vector<8x512xi32>
    %519 = arith.addi %508, %518 : vector<8x512xi32>
    %520 = vector.extract_strided_slice %5 {offsets = [0, 46], sizes = [8, 1], strides = [1, 1]} : vector<8x64xf32> to vector<8x1xf32>
    %521 = vector.shape_cast %520 : vector<8x1xf32> to vector<8x1xf32>
    %522 = vector.broadcast %521 : vector<8x1xf32> to vector<8x512xf32>
    %523 = arith.cmpf olt, %522, %7 : vector<8x512xf32>
    %524 = arith.cmpf oeq, %522, %7 : vector<8x512xf32>
    %c46_i32 = arith.constant 46 : i32
    %525 = vector.broadcast %c46_i32 : i32 to vector<8x512xi32>
    %526 = arith.cmpi sgt, %12, %525 : vector<8x512xi32>
    %527 = arith.andi %524, %526 : vector<8x512xi1>
    %528 = arith.ori %523, %527 : vector<8x512xi1>
    %529 = arith.extui %528 : vector<8x512xi1> to vector<8x512xi32>
    %530 = arith.addi %519, %529 : vector<8x512xi32>
    %531 = vector.extract_strided_slice %5 {offsets = [0, 47], sizes = [8, 1], strides = [1, 1]} : vector<8x64xf32> to vector<8x1xf32>
    %532 = vector.shape_cast %531 : vector<8x1xf32> to vector<8x1xf32>
    %533 = vector.broadcast %532 : vector<8x1xf32> to vector<8x512xf32>
    %534 = arith.cmpf olt, %533, %7 : vector<8x512xf32>
    %535 = arith.cmpf oeq, %533, %7 : vector<8x512xf32>
    %c47_i32 = arith.constant 47 : i32
    %536 = vector.broadcast %c47_i32 : i32 to vector<8x512xi32>
    %537 = arith.cmpi sgt, %12, %536 : vector<8x512xi32>
    %538 = arith.andi %535, %537 : vector<8x512xi1>
    %539 = arith.ori %534, %538 : vector<8x512xi1>
    %540 = arith.extui %539 : vector<8x512xi1> to vector<8x512xi32>
    %541 = arith.addi %530, %540 : vector<8x512xi32>
    %542 = vector.extract_strided_slice %5 {offsets = [0, 48], sizes = [8, 1], strides = [1, 1]} : vector<8x64xf32> to vector<8x1xf32>
    %543 = vector.shape_cast %542 : vector<8x1xf32> to vector<8x1xf32>
    %544 = vector.broadcast %543 : vector<8x1xf32> to vector<8x512xf32>
    %545 = arith.cmpf olt, %544, %7 : vector<8x512xf32>
    %546 = arith.cmpf oeq, %544, %7 : vector<8x512xf32>
    %c48_i32 = arith.constant 48 : i32
    %547 = vector.broadcast %c48_i32 : i32 to vector<8x512xi32>
    %548 = arith.cmpi sgt, %12, %547 : vector<8x512xi32>
    %549 = arith.andi %546, %548 : vector<8x512xi1>
    %550 = arith.ori %545, %549 : vector<8x512xi1>
    %551 = arith.extui %550 : vector<8x512xi1> to vector<8x512xi32>
    %552 = arith.addi %541, %551 : vector<8x512xi32>
    %553 = vector.extract_strided_slice %5 {offsets = [0, 49], sizes = [8, 1], strides = [1, 1]} : vector<8x64xf32> to vector<8x1xf32>
    %554 = vector.shape_cast %553 : vector<8x1xf32> to vector<8x1xf32>
    %555 = vector.broadcast %554 : vector<8x1xf32> to vector<8x512xf32>
    %556 = arith.cmpf olt, %555, %7 : vector<8x512xf32>
    %557 = arith.cmpf oeq, %555, %7 : vector<8x512xf32>
    %c49_i32 = arith.constant 49 : i32
    %558 = vector.broadcast %c49_i32 : i32 to vector<8x512xi32>
    %559 = arith.cmpi sgt, %12, %558 : vector<8x512xi32>
    %560 = arith.andi %557, %559 : vector<8x512xi1>
    %561 = arith.ori %556, %560 : vector<8x512xi1>
    %562 = arith.extui %561 : vector<8x512xi1> to vector<8x512xi32>
    %563 = arith.addi %552, %562 : vector<8x512xi32>
    %564 = vector.extract_strided_slice %5 {offsets = [0, 50], sizes = [8, 1], strides = [1, 1]} : vector<8x64xf32> to vector<8x1xf32>
    %565 = vector.shape_cast %564 : vector<8x1xf32> to vector<8x1xf32>
    %566 = vector.broadcast %565 : vector<8x1xf32> to vector<8x512xf32>
    %567 = arith.cmpf olt, %566, %7 : vector<8x512xf32>
    %568 = arith.cmpf oeq, %566, %7 : vector<8x512xf32>
    %c50_i32 = arith.constant 50 : i32
    %569 = vector.broadcast %c50_i32 : i32 to vector<8x512xi32>
    %570 = arith.cmpi sgt, %12, %569 : vector<8x512xi32>
    %571 = arith.andi %568, %570 : vector<8x512xi1>
    %572 = arith.ori %567, %571 : vector<8x512xi1>
    %573 = arith.extui %572 : vector<8x512xi1> to vector<8x512xi32>
    %574 = arith.addi %563, %573 : vector<8x512xi32>
    %575 = vector.extract_strided_slice %5 {offsets = [0, 51], sizes = [8, 1], strides = [1, 1]} : vector<8x64xf32> to vector<8x1xf32>
    %576 = vector.shape_cast %575 : vector<8x1xf32> to vector<8x1xf32>
    %577 = vector.broadcast %576 : vector<8x1xf32> to vector<8x512xf32>
    %578 = arith.cmpf olt, %577, %7 : vector<8x512xf32>
    %579 = arith.cmpf oeq, %577, %7 : vector<8x512xf32>
    %c51_i32 = arith.constant 51 : i32
    %580 = vector.broadcast %c51_i32 : i32 to vector<8x512xi32>
    %581 = arith.cmpi sgt, %12, %580 : vector<8x512xi32>
    %582 = arith.andi %579, %581 : vector<8x512xi1>
    %583 = arith.ori %578, %582 : vector<8x512xi1>
    %584 = arith.extui %583 : vector<8x512xi1> to vector<8x512xi32>
    %585 = arith.addi %574, %584 : vector<8x512xi32>
    %586 = vector.extract_strided_slice %5 {offsets = [0, 52], sizes = [8, 1], strides = [1, 1]} : vector<8x64xf32> to vector<8x1xf32>
    %587 = vector.shape_cast %586 : vector<8x1xf32> to vector<8x1xf32>
    %588 = vector.broadcast %587 : vector<8x1xf32> to vector<8x512xf32>
    %589 = arith.cmpf olt, %588, %7 : vector<8x512xf32>
    %590 = arith.cmpf oeq, %588, %7 : vector<8x512xf32>
    %c52_i32 = arith.constant 52 : i32
    %591 = vector.broadcast %c52_i32 : i32 to vector<8x512xi32>
    %592 = arith.cmpi sgt, %12, %591 : vector<8x512xi32>
    %593 = arith.andi %590, %592 : vector<8x512xi1>
    %594 = arith.ori %589, %593 : vector<8x512xi1>
    %595 = arith.extui %594 : vector<8x512xi1> to vector<8x512xi32>
    %596 = arith.addi %585, %595 : vector<8x512xi32>
    %597 = vector.extract_strided_slice %5 {offsets = [0, 53], sizes = [8, 1], strides = [1, 1]} : vector<8x64xf32> to vector<8x1xf32>
    %598 = vector.shape_cast %597 : vector<8x1xf32> to vector<8x1xf32>
    %599 = vector.broadcast %598 : vector<8x1xf32> to vector<8x512xf32>
    %600 = arith.cmpf olt, %599, %7 : vector<8x512xf32>
    %601 = arith.cmpf oeq, %599, %7 : vector<8x512xf32>
    %c53_i32 = arith.constant 53 : i32
    %602 = vector.broadcast %c53_i32 : i32 to vector<8x512xi32>
    %603 = arith.cmpi sgt, %12, %602 : vector<8x512xi32>
    %604 = arith.andi %601, %603 : vector<8x512xi1>
    %605 = arith.ori %600, %604 : vector<8x512xi1>
    %606 = arith.extui %605 : vector<8x512xi1> to vector<8x512xi32>
    %607 = arith.addi %596, %606 : vector<8x512xi32>
    %608 = vector.extract_strided_slice %5 {offsets = [0, 54], sizes = [8, 1], strides = [1, 1]} : vector<8x64xf32> to vector<8x1xf32>
    %609 = vector.shape_cast %608 : vector<8x1xf32> to vector<8x1xf32>
    %610 = vector.broadcast %609 : vector<8x1xf32> to vector<8x512xf32>
    %611 = arith.cmpf olt, %610, %7 : vector<8x512xf32>
    %612 = arith.cmpf oeq, %610, %7 : vector<8x512xf32>
    %c54_i32 = arith.constant 54 : i32
    %613 = vector.broadcast %c54_i32 : i32 to vector<8x512xi32>
    %614 = arith.cmpi sgt, %12, %613 : vector<8x512xi32>
    %615 = arith.andi %612, %614 : vector<8x512xi1>
    %616 = arith.ori %611, %615 : vector<8x512xi1>
    %617 = arith.extui %616 : vector<8x512xi1> to vector<8x512xi32>
    %618 = arith.addi %607, %617 : vector<8x512xi32>
    %619 = vector.extract_strided_slice %5 {offsets = [0, 55], sizes = [8, 1], strides = [1, 1]} : vector<8x64xf32> to vector<8x1xf32>
    %620 = vector.shape_cast %619 : vector<8x1xf32> to vector<8x1xf32>
    %621 = vector.broadcast %620 : vector<8x1xf32> to vector<8x512xf32>
    %622 = arith.cmpf olt, %621, %7 : vector<8x512xf32>
    %623 = arith.cmpf oeq, %621, %7 : vector<8x512xf32>
    %c55_i32 = arith.constant 55 : i32
    %624 = vector.broadcast %c55_i32 : i32 to vector<8x512xi32>
    %625 = arith.cmpi sgt, %12, %624 : vector<8x512xi32>
    %626 = arith.andi %623, %625 : vector<8x512xi1>
    %627 = arith.ori %622, %626 : vector<8x512xi1>
    %628 = arith.extui %627 : vector<8x512xi1> to vector<8x512xi32>
    %629 = arith.addi %618, %628 : vector<8x512xi32>
    %630 = vector.extract_strided_slice %5 {offsets = [0, 56], sizes = [8, 1], strides = [1, 1]} : vector<8x64xf32> to vector<8x1xf32>
    %631 = vector.shape_cast %630 : vector<8x1xf32> to vector<8x1xf32>
    %632 = vector.broadcast %631 : vector<8x1xf32> to vector<8x512xf32>
    %633 = arith.cmpf olt, %632, %7 : vector<8x512xf32>
    %634 = arith.cmpf oeq, %632, %7 : vector<8x512xf32>
    %c56_i32 = arith.constant 56 : i32
    %635 = vector.broadcast %c56_i32 : i32 to vector<8x512xi32>
    %636 = arith.cmpi sgt, %12, %635 : vector<8x512xi32>
    %637 = arith.andi %634, %636 : vector<8x512xi1>
    %638 = arith.ori %633, %637 : vector<8x512xi1>
    %639 = arith.extui %638 : vector<8x512xi1> to vector<8x512xi32>
    %640 = arith.addi %629, %639 : vector<8x512xi32>
    %641 = vector.extract_strided_slice %5 {offsets = [0, 57], sizes = [8, 1], strides = [1, 1]} : vector<8x64xf32> to vector<8x1xf32>
    %642 = vector.shape_cast %641 : vector<8x1xf32> to vector<8x1xf32>
    %643 = vector.broadcast %642 : vector<8x1xf32> to vector<8x512xf32>
    %644 = arith.cmpf olt, %643, %7 : vector<8x512xf32>
    %645 = arith.cmpf oeq, %643, %7 : vector<8x512xf32>
    %c57_i32 = arith.constant 57 : i32
    %646 = vector.broadcast %c57_i32 : i32 to vector<8x512xi32>
    %647 = arith.cmpi sgt, %12, %646 : vector<8x512xi32>
    %648 = arith.andi %645, %647 : vector<8x512xi1>
    %649 = arith.ori %644, %648 : vector<8x512xi1>
    %650 = arith.extui %649 : vector<8x512xi1> to vector<8x512xi32>
    %651 = arith.addi %640, %650 : vector<8x512xi32>
    %652 = vector.extract_strided_slice %5 {offsets = [0, 58], sizes = [8, 1], strides = [1, 1]} : vector<8x64xf32> to vector<8x1xf32>
    %653 = vector.shape_cast %652 : vector<8x1xf32> to vector<8x1xf32>
    %654 = vector.broadcast %653 : vector<8x1xf32> to vector<8x512xf32>
    %655 = arith.cmpf olt, %654, %7 : vector<8x512xf32>
    %656 = arith.cmpf oeq, %654, %7 : vector<8x512xf32>
    %c58_i32 = arith.constant 58 : i32
    %657 = vector.broadcast %c58_i32 : i32 to vector<8x512xi32>
    %658 = arith.cmpi sgt, %12, %657 : vector<8x512xi32>
    %659 = arith.andi %656, %658 : vector<8x512xi1>
    %660 = arith.ori %655, %659 : vector<8x512xi1>
    %661 = arith.extui %660 : vector<8x512xi1> to vector<8x512xi32>
    %662 = arith.addi %651, %661 : vector<8x512xi32>
    %663 = vector.extract_strided_slice %5 {offsets = [0, 59], sizes = [8, 1], strides = [1, 1]} : vector<8x64xf32> to vector<8x1xf32>
    %664 = vector.shape_cast %663 : vector<8x1xf32> to vector<8x1xf32>
    %665 = vector.broadcast %664 : vector<8x1xf32> to vector<8x512xf32>
    %666 = arith.cmpf olt, %665, %7 : vector<8x512xf32>
    %667 = arith.cmpf oeq, %665, %7 : vector<8x512xf32>
    %c59_i32 = arith.constant 59 : i32
    %668 = vector.broadcast %c59_i32 : i32 to vector<8x512xi32>
    %669 = arith.cmpi sgt, %12, %668 : vector<8x512xi32>
    %670 = arith.andi %667, %669 : vector<8x512xi1>
    %671 = arith.ori %666, %670 : vector<8x512xi1>
    %672 = arith.extui %671 : vector<8x512xi1> to vector<8x512xi32>
    %673 = arith.addi %662, %672 : vector<8x512xi32>
    %674 = vector.extract_strided_slice %5 {offsets = [0, 60], sizes = [8, 1], strides = [1, 1]} : vector<8x64xf32> to vector<8x1xf32>
    %675 = vector.shape_cast %674 : vector<8x1xf32> to vector<8x1xf32>
    %676 = vector.broadcast %675 : vector<8x1xf32> to vector<8x512xf32>
    %677 = arith.cmpf olt, %676, %7 : vector<8x512xf32>
    %678 = arith.cmpf oeq, %676, %7 : vector<8x512xf32>
    %c60_i32 = arith.constant 60 : i32
    %679 = vector.broadcast %c60_i32 : i32 to vector<8x512xi32>
    %680 = arith.cmpi sgt, %12, %679 : vector<8x512xi32>
    %681 = arith.andi %678, %680 : vector<8x512xi1>
    %682 = arith.ori %677, %681 : vector<8x512xi1>
    %683 = arith.extui %682 : vector<8x512xi1> to vector<8x512xi32>
    %684 = arith.addi %673, %683 : vector<8x512xi32>
    %685 = vector.extract_strided_slice %5 {offsets = [0, 61], sizes = [8, 1], strides = [1, 1]} : vector<8x64xf32> to vector<8x1xf32>
    %686 = vector.shape_cast %685 : vector<8x1xf32> to vector<8x1xf32>
    %687 = vector.broadcast %686 : vector<8x1xf32> to vector<8x512xf32>
    %688 = arith.cmpf olt, %687, %7 : vector<8x512xf32>
    %689 = arith.cmpf oeq, %687, %7 : vector<8x512xf32>
    %c61_i32 = arith.constant 61 : i32
    %690 = vector.broadcast %c61_i32 : i32 to vector<8x512xi32>
    %691 = arith.cmpi sgt, %12, %690 : vector<8x512xi32>
    %692 = arith.andi %689, %691 : vector<8x512xi1>
    %693 = arith.ori %688, %692 : vector<8x512xi1>
    %694 = arith.extui %693 : vector<8x512xi1> to vector<8x512xi32>
    %695 = arith.addi %684, %694 : vector<8x512xi32>
    %696 = vector.extract_strided_slice %5 {offsets = [0, 62], sizes = [8, 1], strides = [1, 1]} : vector<8x64xf32> to vector<8x1xf32>
    %697 = vector.shape_cast %696 : vector<8x1xf32> to vector<8x1xf32>
    %698 = vector.broadcast %697 : vector<8x1xf32> to vector<8x512xf32>
    %699 = arith.cmpf olt, %698, %7 : vector<8x512xf32>
    %700 = arith.cmpf oeq, %698, %7 : vector<8x512xf32>
    %c62_i32 = arith.constant 62 : i32
    %701 = vector.broadcast %c62_i32 : i32 to vector<8x512xi32>
    %702 = arith.cmpi sgt, %12, %701 : vector<8x512xi32>
    %703 = arith.andi %700, %702 : vector<8x512xi1>
    %704 = arith.ori %699, %703 : vector<8x512xi1>
    %705 = arith.extui %704 : vector<8x512xi1> to vector<8x512xi32>
    %706 = arith.addi %695, %705 : vector<8x512xi32>
    %707 = vector.extract_strided_slice %5 {offsets = [0, 63], sizes = [8, 1], strides = [1, 1]} : vector<8x64xf32> to vector<8x1xf32>
    %708 = vector.shape_cast %707 : vector<8x1xf32> to vector<8x1xf32>
    %709 = vector.broadcast %708 : vector<8x1xf32> to vector<8x512xf32>
    %710 = arith.cmpf olt, %709, %7 : vector<8x512xf32>
    %711 = arith.cmpf oeq, %709, %7 : vector<8x512xf32>
    %c63_i32 = arith.constant 63 : i32
    %712 = vector.broadcast %c63_i32 : i32 to vector<8x512xi32>
    %713 = arith.cmpi sgt, %12, %712 : vector<8x512xi32>
    %714 = arith.andi %711, %713 : vector<8x512xi1>
    %715 = arith.ori %710, %714 : vector<8x512xi1>
    %716 = arith.extui %715 : vector<8x512xi1> to vector<8x512xi32>
    %717 = arith.addi %706, %716 : vector<8x512xi32>
    %cst = arith.constant dense<0> : vector<512xi32>
    %718 = vector.multi_reduction <add>, %717, %cst [0] : vector<8x512xi32> to vector<512xi32>
    %719 = vector.shape_cast %718 : vector<512xi32> to vector<1x512xi32>
    %c384_i32 = arith.constant 384 : i32
    %720 = vector.broadcast %c384_i32 : i32 to vector<1x512xi32>
    %721 = arith.cmpi sge, %719, %720 : vector<1x512xi32>
    %722 = arith.extui %721 : vector<1x512xi1> to vector<1x512xi32>
    %723 = arith.sitofp %722 : vector<1x512xi32> to vector<1x512xf32>
    %c0_6 = arith.constant 0 : index
    %c0_7 = arith.constant 0 : index
    %724 = vector.load %arg4[%c0_6, %c0_7] : memref<1x512xf32, #tpu.memory_space<vmem>>, vector<1x512xf32>
    tpu.vector_store %arg4[%c0_6, %c0_7], %723 {strides = array<i32>} : memref<1x512xf32, #tpu.memory_space<vmem>>, vector<1x512xf32>,
    return
  }
  func.func @transform_0(%arg0: i32, %arg1: memref<1xi32, #tpu.memory_space<smem>>) -> (i32, i32, i32) {
    %c0 = arith.constant 0 : index
    %0 = memref.load %arg1[%c0] : memref<1xi32, #tpu.memory_space<smem>>
    %c0_i32 = arith.constant 0 : i32
    %c0_i32_0 = arith.constant 0 : i32
    %c0_i32_1 = arith.constant 0 : i32
    return %0, %c0_i32, %c0_i32_0 : i32, i32, i32
  }
  func.func @transform_1(%arg0: i32, %arg1: memref<1xi32, #tpu.memory_space<smem>>) -> (i32, i32, i32) {
    %c0 = arith.constant 0 : index
    %0 = memref.load %arg1[%c0] : memref<1xi32, #tpu.memory_space<smem>>
    %c0_i32 = arith.constant 0 : i32
    %c0_i32_0 = arith.constant 0 : i32
    %c0_i32_1 = arith.constant 0 : i32
    return %0, %c0_i32, %c0_i32_0 : i32, i32, i32
  }
  func.func @transform_2(%arg0: i32, %arg1: memref<1xi32, #tpu.memory_space<smem>>) -> (i32, i32) {
    %c0_i32 = arith.constant 0 : i32
    %c0_i32_0 = arith.constant 0 : i32
    %c0_i32_1 = arith.constant 0 : i32
    return %c0_i32, %c0_i32_0 : i32, i32
  }
}

</mosaic_0001>

<llo_original>
// kernel: tpu_custom_call.1
$region0: #{tpu_custom_call.1}
  #allocation0 [shape = 'u32[]', space=smem, size = 0x4, offset = 0x4, fixed_abs, tag = 'smem constant byte address 0x4 - core index']
  #allocation1 [shape = 'u32[144,128]{1,0:T(1,128)}', space=vmem, size = 0x12000, scoped, tag = 'internal scratch']
  #allocation2 [shape = 's32[1]{0}', space=sflag, size = 0x4, scoped, tag = 'scoped memory for tpu_custom_call.1']
  #allocation3 [shape = 's32[1]{0:T(128)S(6)}', space=smem, size = 0x200, scoped, tag = 'prefetched SMEM operand 0']
  %s0 = inlined_call_operand.<no memory space> [shape: s32[1], index: 0, kind: input, shape index: {}]
  %s1 = inlined_call_operand.hbm [shape: f32[4,1,512], index: 1, kind: input, shape index: {}]
  %s2 = inlined_call_operand.hbm [shape: f32[4,8,64], index: 2, kind: input, shape index: {}]
  %s3 = inlined_call_operand.hbm [shape: f32[1,512], index: 3, kind: output, shape index: {}]
  %s4 = sld [smem:[#allocation0]]
  $region26: #{tpu_custom_call.1} parent=0
    _
  %s6 = ssub.s32 1, %s4
  %s7 = scalar_select 0, %s6, %s4
  %8 = sst [smem:[#allocation3]] %s0
  $region1: #{tpu_custom_call.1} parent=0
    #allocation4 [shape = 'u8[2048]{0}', space=vmem, size = 0x800, scoped, tag = 'input window, operand 1, single buffered']
    #allocation5 [shape = 's32[1]{0}', space=sflag, size = 0x4, scoped, tag = 'scoped memory for tpu_custom_call.1']
    #allocation6 [shape = 's32[1]{0}', space=sflag, size = 0x4, scoped, tag = 'scoped memory for tpu_custom_call.1']
    #allocation7 [shape = 'u8[4096]{0}', space=vmem, size = 0x1000, scoped, tag = 'input window, operand 2, single buffered']
    #allocation8 [shape = 's32[1]{0}', space=sflag, size = 0x4, scoped, tag = 'scoped memory for tpu_custom_call.1']
    #allocation9 [shape = 'u8[2048]{0}', space=vmem, size = 0x800, scoped, tag = 'output window, operand 0, single buffered']
    %9 = vsyncpa [#allocation5], 0
    %10 = vsyncpa [#allocation8], 0
    %11 = vsyncpa [#allocation6], 0
    // Predicated region
    $region2: #{tpu_custom_call.1} parent=1 // pred_check
      _
    $region3: #{tpu_custom_call.1} parent=1 // pred_check_branch
      %13 = sbr.rel (0) target = $region5
    $region4: #{tpu_custom_call.1} parent=1 // pred_region
      %s14 = sld [smem:[#allocation3]]
      %s16 = ssub.s32 64, 64
      %17 = vsyncadd [#allocation5], %s16
      %s18 = smul.addr %s14, 4
      %s19 = smul.addr %s18, 16
      %s20 = scalar_lea.hbm %s1, %s19
      %s22 = sshll.u32 [#allocation4], 4
      %s23 = int_to_ptr.vmem [resolvable:$true] %s22
      %25 = dma.hbm_to_vmem [thread:$0]  %s20, 64, %s23, [#allocation5]
    $region5: #{tpu_custom_call.1} parent=1 // pred_fallthru
      _
    // Predicated region
    $region6: #{tpu_custom_call.1} parent=1 // pred_check
      _
    $region7: #{tpu_custom_call.1} parent=1 // pred_check_branch
      %27 = sbr.rel (0) target = $region9
    $region8: #{tpu_custom_call.1} parent=1 // pred_region
      %s28 = sld [smem:[#allocation3]]
      %s30 = ssub.s32 128, 128
      %31 = vsyncadd [#allocation8], %s30
      %s32 = smul.addr %s28, 128
      %s33 = scalar_lea.hbm %s2, %s32
      %s35 = sshll.u32 [#allocation7], 4
      %s36 = int_to_ptr.vmem [resolvable:$true] %s35
      %38 = dma.hbm_to_vmem [thread:$0]  %s33, 128, %s36, [#allocation8]
    $region9: #{tpu_custom_call.1} parent=1 // pred_fallthru
      _
    // Predicated region
    $region10: #{tpu_custom_call.1} parent=1 // pred_check
      _
    $region11: #{tpu_custom_call.1} parent=1 // pred_check_branch
      %40 = sbr.rel (0) target = $region13
    $region12: #{tpu_custom_call.1} parent=1 // pred_region
      %41 = dma.done [#allocation5], 64
    $region13: #{tpu_custom_call.1} parent=1 // pred_fallthru
      _
    // Predicated region
    $region14: #{tpu_custom_call.1} parent=1 // pred_check
      _
    $region15: #{tpu_custom_call.1} parent=1 // pred_check_branch
      %43 = sbr.rel (0) target = $region17
    $region16: #{tpu_custom_call.1} parent=1 // pred_region
      %44 = dma.done [#allocation8], 128
    $region17: #{tpu_custom_call.1} parent=1 // pred_fallthru
      _
    %s45 = sld [smem:[#allocation3]]
    %s46 = sld [smem:[#allocation3]]
    %v47 = vld [vmem:[#allocation4] sm:$0xf]
    %v48 = vand.u32 2147483647, %v47
    %v49 = vld [vmem:[#allocation7] sm:$0xff]
    %v50 = vand.u32 2147483647, %v49
    %v52 = vlaneseq
    %v53 = vshrl.u32 %v52, 7
    %v54 = vsub.s32 0, %v53
    %v55 = vrot.slane %v48, %v54
    %v56 = vlaneseq
    %v57 = vshrl.u32 %v56, 7
    %v58 = vsub.s32 1, %v57
    %v59 = vrot.slane %v48, %v58
    %v60 = vlaneseq
    %v61 = vshrl.u32 %v60, 7
    %v62 = vsub.s32 2, %v61
    %v63 = vrot.slane %v48, %v62
    %v64 = vlaneseq
    %v65 = vshrl.u32 %v64, 7
    %v66 = vsub.s32 3, %v65
    %v67 = vrot.slane %v48, %v66
    %v72 = vlaneseq
    %v73 = vand.u32 %v72, 127
    %v74 = vadd.s32 %v73, 128
    %v75 = vadd.s32 %v73, 256
    %v76 = vadd.s32 %v73, 384
    %v77 = vlaneseq
    %v78 = vshrl.u32 %v77, 7
    %v79 = vmul.u32 %v78, 64
    %v80 = vsub.s32 %v73, %v79
    %v81 = vsub.s32 %v74, %v79
    %v82 = vsub.s32 %v75, %v79
    %v83 = vsub.s32 %v76, %v79
    %85 = vset.pattern.permute.xlu0 0
    %86 = vperm.xlu0 %85, %v50
    %v87 = vpop.permute.xlu0 %86
    %vm89 = vcmp.lt.f32.partialorder %v87, %v55
    %vm90 = vcmp.lt.f32.partialorder %v87, %v59
    %vm91 = vcmp.lt.f32.partialorder %v87, %v63
    %vm92 = vcmp.lt.f32.partialorder %v87, %v67
    %vm93 = vcmp.eq.f32.partialorder %v87, %v55
    %vm94 = vcmp.eq.f32.partialorder %v87, %v59
    %vm95 = vcmp.eq.f32.partialorder %v87, %v63
    %vm96 = vcmp.eq.f32.partialorder %v87, %v67
    %vm97 = vcmp.gt.s32.totalorder %v80, 0
    %vm98 = vcmp.gt.s32.totalorder %v81, 0
    %vm99 = vcmp.gt.s32.totalorder %v82, 0
    %vm100 = vcmp.gt.s32.totalorder %v83, 0
    %vm101 = vmand %vm93, %vm97
    %vm102 = vmand %vm94, %vm98
    %vm103 = vmand %vm95, %vm99
    %vm104 = vmand %vm96, %vm100
    %vm105 = vmor %vm89, %vm101
    %vm106 = vmor %vm90, %vm102
    %vm107 = vmor %vm91, %vm103
    %vm108 = vmor %vm92, %vm104
    %v109 = vsel %vm105, 1, 0
    %v110 = vsel %vm106, 1, 0
    %v111 = vsel %vm107, 1, 0
    %v112 = vsel %vm108, 1, 0
    %113 = vset.pattern.permute.xlu0 1
    %114 = vperm.xlu0 %113, %v50
    %v115 = vpop.permute.xlu0 %114
    %vm117 = vcmp.lt.f32.partialorder %v115, %v55
    %vm118 = vcmp.lt.f32.partialorder %v115, %v59
    %vm119 = vcmp.lt.f32.partialorder %v115, %v63
    %vm120 = vcmp.lt.f32.partialorder %v115, %v67
    %vm121 = vcmp.eq.f32.partialorder %v115, %v55
    %vm122 = vcmp.eq.f32.partialorder %v115, %v59
    %vm123 = vcmp.eq.f32.partialorder %v115, %v63
    %vm124 = vcmp.eq.f32.partialorder %v115, %v67
    %vm125 = vcmp.gt.s32.totalorder %v80, 1
    %vm126 = vcmp.gt.s32.totalorder %v81, 1
    %vm127 = vcmp.gt.s32.totalorder %v82, 1
    %vm128 = vcmp.gt.s32.totalorder %v83, 1
    %vm129 = vmand %vm121, %vm125
    %vm130 = vmand %vm122, %vm126
    %vm131 = vmand %vm123, %vm127
    %vm132 = vmand %vm124, %vm128
    %vm133 = vmor %vm117, %vm129
    %vm134 = vmor %vm118, %vm130
    %vm135 = vmor %vm119, %vm131
    %vm136 = vmor %vm120, %vm132
    %v137 = vsel %vm133, 1, 0
    %v138 = vsel %vm134, 1, 0
    %v139 = vsel %vm135, 1, 0
    %v140 = vsel %vm136, 1, 0
    %v141 = vadd.s32 %v109, %v137
    %v142 = vadd.s32 %v110, %v138
    %v143 = vadd.s32 %v111, %v139
    %v144 = vadd.s32 %v112, %v140
    %145 = vset.pattern.permute.xlu0 2
    %146 = vperm.xlu0 %145, %v50
    %v147 = vpop.permute.xlu0 %146
    %vm149 = vcmp.lt.f32.partialorder %v147, %v55
    %vm150 = vcmp.lt.f32.partialorder %v147, %v59
    %vm151 = vcmp.lt.f32.partialorder %v147, %v63
    %vm152 = vcmp.lt.f32.partialorder %v147, %v67
    %vm153 = vcmp.eq.f32.partialorder %v147, %v55
    %vm154 = vcmp.eq.f32.partialorder %v147, %v59
    %vm155 = vcmp.eq.f32.partialorder %v147, %v63
    %vm156 = vcmp.eq.f32.partialorder %v147, %v67
    %vm157 = vcmp.gt.s32.totalorder %v80, 2
    %vm158 = vcmp.gt.s32.totalorder %v81, 2
    %vm159 = vcmp.gt.s32.totalorder %v82, 2
    %vm160 = vcmp.gt.s32.totalorder %v83, 2
    %vm161 = vmand %vm153, %vm157
    %vm162 = vmand %vm154, %vm158
    %vm163 = vmand %vm155, %vm159
    %vm164 = vmand %vm156, %vm160
    %vm165 = vmor %vm149, %vm161
    %vm166 = vmor %vm150, %vm162
    %vm167 = vmor %vm151, %vm163
    %vm168 = vmor %vm152, %vm164
    %v169 = vsel %vm165, 1, 0
    %v170 = vsel %vm166, 1, 0
    %v171 = vsel %vm167, 1, 0
    %v172 = vsel %vm168, 1, 0
    %v173 = vadd.s32 %v141, %v169
    %v174 = vadd.s32 %v142, %v170
    %v175 = vadd.s32 %v143, %v171
    %v176 = vadd.s32 %v144, %v172
    %177 = vset.pattern.permute.xlu0 3
    %178 = vperm.xlu0 %177, %v50
    %v179 = vpop.permute.xlu0 %178
    %vm181 = vcmp.lt.f32.partialorder %v179, %v55
    %vm182 = vcmp.lt.f32.partialorder %v179, %v59
    %vm183 = vcmp.lt.f32.partialorder %v179, %v63
    %vm184 = vcmp.lt.f32.partialorder %v179, %v67
    %vm185 = vcmp.eq.f32.partialorder %v179, %v55
    %vm186 = vcmp.eq.f32.partialorder %v179, %v59
    %vm187 = vcmp.eq.f32.partialorder %v179, %v63
    %vm188 = vcmp.eq.f32.partialorder %v179, %v67
    %vm189 = vcmp.gt.s32.totalorder %v80, 3
    %vm190 = vcmp.gt.s32.totalorder %v81, 3
    %vm191 = vcmp.gt.s32.totalorder %v82, 3
    %vm192 = vcmp.gt.s32.totalorder %v83, 3
    %vm193 = vmand %vm185, %vm189
    %vm194 = vmand %vm186, %vm190
    %vm195 = vmand %vm187, %vm191
    %vm196 = vmand %vm188, %vm192
    %vm197 = vmor %vm181, %vm193
    %vm198 = vmor %vm182, %vm194
    %vm199 = vmor %vm183, %vm195
    %vm200 = vmor %vm184, %vm196
    %v201 = vsel %vm197, 1, 0
    %v202 = vsel %vm198, 1, 0
    %v203 = vsel %vm199, 1, 0
    %v204 = vsel %vm200, 1, 0
    %v205 = vadd.s32 %v173, %v201
    %v206 = vadd.s32 %v174, %v202
    %v207 = vadd.s32 %v175, %v203
    %v208 = vadd.s32 %v176, %v204
    %209 = vset.pattern.permute.xlu0 4
    %210 = vperm.xlu0 %209, %v50
    %v211 = vpop.permute.xlu0 %210
    %vm213 = vcmp.lt.f32.partialorder %v211, %v55
    %vm214 = vcmp.lt.f32.partialorder %v211, %v59
    %vm215 = vcmp.lt.f32.partialorder %v211, %v63
    %vm216 = vcmp.lt.f32.partialorder %v211, %v67
    %vm217 = vcmp.eq.f32.partialorder %v211, %v55
    %vm218 = vcmp.eq.f32.partialorder %v211, %v59
    %vm219 = vcmp.eq.f32.partialorder %v211, %v63
    %vm220 = vcmp.eq.f32.partialorder %v211, %v67
    %vm221 = vcmp.gt.s32.totalorder %v80, 4
    %vm222 = vcmp.gt.s32.totalorder %v81, 4
    %vm223 = vcmp.gt.s32.totalorder %v82, 4
    %vm224 = vcmp.gt.s32.totalorder %v83, 4
    %vm225 = vmand %vm217, %vm221
    %vm226 = vmand %vm218, %vm222
    %vm227 = vmand %vm219, %vm223
    %vm228 = vmand %vm220, %vm224
    %vm229 = vmor %vm213, %vm225
    %vm230 = vmor %vm214, %vm226
    %vm231 = vmor %vm215, %vm227
    %vm232 = vmor %vm216, %vm228
    %v233 = vsel %vm229, 1, 0
    %v234 = vsel %vm230, 1, 0
    %v235 = vsel %vm231, 1, 0
    %v236 = vsel %vm232, 1, 0
    %v237 = vadd.s32 %v205, %v233
    %v238 = vadd.s32 %v206, %v234
    %v239 = vadd.s32 %v207, %v235
    %v240 = vadd.s32 %v208, %v236
    %241 = vset.pattern.permute.xlu0 5
    %242 = vperm.xlu0 %241, %v50
    %v243 = vpop.permute.xlu0 %242
    %vm245 = vcmp.lt.f32.partialorder %v243, %v55
    %vm246 = vcmp.lt.f32.partialorder %v243, %v59
    %vm247 = vcmp.lt.f32.partialorder %v243, %v63
    %vm248 = vcmp.lt.f32.partialorder %v243, %v67
    %vm249 = vcmp.eq.f32.partialorder %v243, %v55
    %vm250 = vcmp.eq.f32.partialorder %v243, %v59
    %vm251 = vcmp.eq.f32.partialorder %v243, %v63
    %vm252 = vcmp.eq.f32.partialorder %v243, %v67
    %vm253 = vcmp.gt.s32.totalorder %v80, 5
    %vm254 = vcmp.gt.s32.totalorder %v81, 5
    %vm255 = vcmp.gt.s32.totalorder %v82, 5
    %vm256 = vcmp.gt.s32.totalorder %v83, 5
    %vm257 = vmand %vm249, %vm253
    %vm258 = vmand %vm250, %vm254
    %vm259 = vmand %vm251, %vm255
    %vm260 = vmand %vm252, %vm256
    %vm261 = vmor %vm245, %vm257
    %vm262 = vmor %vm246, %vm258
    %vm263 = vmor %vm247, %vm259
    %vm264 = vmor %vm248, %vm260
    %v265 = vsel %vm261, 1, 0
    %v266 = vsel %vm262, 1, 0
    %v267 = vsel %vm263, 1, 0
    %v268 = vsel %vm264, 1, 0
    %v269 = vadd.s32 %v237, %v265
    %v270 = vadd.s32 %v238, %v266
    %v271 = vadd.s32 %v239, %v267
    %v272 = vadd.s32 %v240, %v268
    %273 = vset.pattern.permute.xlu0 6
    %274 = vperm.xlu0 %273, %v50
    %v275 = vpop.permute.xlu0 %274
    %vm277 = vcmp.lt.f32.partialorder %v275, %v55
    %vm278 = vcmp.lt.f32.partialorder %v275, %v59
    %vm279 = vcmp.lt.f32.partialorder %v275, %v63
    %vm280 = vcmp.lt.f32.partialorder %v275, %v67
    %vm281 = vcmp.eq.f32.partialorder %v275, %v55
    %vm282 = vcmp.eq.f32.partialorder %v275, %v59
    %vm283 = vcmp.eq.f32.partialorder %v275, %v63
    %vm284 = vcmp.eq.f32.partialorder %v275, %v67
    %vm285 = vcmp.gt.s32.totalorder %v80, 6
    %vm286 = vcmp.gt.s32.totalorder %v81, 6
    %vm287 = vcmp.gt.s32.totalorder %v82, 6
    %vm288 = vcmp.gt.s32.totalorder %v83, 6
    %vm289 = vmand %vm281, %vm285
    %vm290 = vmand %vm282, %vm286
    %vm291 = vmand %vm283, %vm287
    %vm292 = vmand %vm284, %vm288
    %vm293 = vmor %vm277, %vm289
    %vm294 = vmor %vm278, %vm290
    %vm295 = vmor %vm279, %vm291
    %vm296 = vmor %vm280, %vm292
    %v297 = vsel %vm293, 1, 0
    %v298 = vsel %vm294, 1, 0
    %v299 = vsel %vm295, 1, 0
    %v300 = vsel %vm296, 1, 0
    %v301 = vadd.s32 %v269, %v297
    %v302 = vadd.s32 %v270, %v298
    %v303 = vadd.s32 %v271, %v299
    %v304 = vadd.s32 %v272, %v300
    %305 = vset.pattern.permute.xlu0 7
    %306 = vperm.xlu0 %305, %v50
    %v307 = vpop.permute.xlu0 %306
    %vm309 = vcmp.lt.f32.partialorder %v307, %v55
    %vm310 = vcmp.lt.f32.partialorder %v307, %v59
    %vm311 = vcmp.lt.f32.partialorder %v307, %v63
    %vm312 = vcmp.lt.f32.partialorder %v307, %v67
    %vm313 = vcmp.eq.f32.partialorder %v307, %v55
    %vm314 = vcmp.eq.f32.partialorder %v307, %v59
    %vm315 = vcmp.eq.f32.partialorder %v307, %v63
    %vm316 = vcmp.eq.f32.partialorder %v307, %v67
    %vm317 = vcmp.gt.s32.totalorder %v80, 7
    %vm318 = vcmp.gt.s32.totalorder %v81, 7
    %vm319 = vcmp.gt.s32.totalorder %v82, 7
    %vm320 = vcmp.gt.s32.totalorder %v83, 7
    %vm321 = vmand %vm313, %vm317
    %vm322 = vmand %vm314, %vm318
    %vm323 = vmand %vm315, %vm319
    %vm324 = vmand %vm316, %vm320
    %vm325 = vmor %vm309, %vm321
    %vm326 = vmor %vm310, %vm322
    %vm327 = vmor %vm311, %vm323
    %vm328 = vmor %vm312, %vm324
    %v329 = vsel %vm325, 1, 0
    %v330 = vsel %vm326, 1, 0
    %v331 = vsel %vm327, 1, 0
    %v332 = vsel %vm328, 1, 0
    %v333 = vadd.s32 %v301, %v329
    %v334 = vadd.s32 %v302, %v330
    %v335 = vadd.s32 %v303, %v331
    %v336 = vadd.s32 %v304, %v332
    %337 = vset.pattern.permute.xlu0 8
    %338 = vperm.xlu0 %337, %v50
    %v339 = vpop.permute.xlu0 %338
    %vm341 = vcmp.lt.f32.partialorder %v339, %v55
    %vm342 = vcmp.lt.f32.partialorder %v339, %v59
    %vm343 = vcmp.lt.f32.partialorder %v339, %v63
    %vm344 = vcmp.lt.f32.partialorder %v339, %v67
    %vm345 = vcmp.eq.f32.partialorder %v339, %v55
    %vm346 = vcmp.eq.f32.partialorder %v339, %v59
    %vm347 = vcmp.eq.f32.partialorder %v339, %v63
    %vm348 = vcmp.eq.f32.partialorder %v339, %v67
    %vm349 = vcmp.gt.s32.totalorder %v80, 8
    %vm350 = vcmp.gt.s32.totalorder %v81, 8
    %vm351 = vcmp.gt.s32.totalorder %v82, 8
    %vm352 = vcmp.gt.s32.totalorder %v83, 8
    %vm353 = vmand %vm345, %vm349
    %vm354 = vmand %vm346, %vm350
    %vm355 = vmand %vm347, %vm351
    %vm356 = vmand %vm348, %vm352
    %vm357 = vmor %vm341, %vm353
    %vm358 = vmor %vm342, %vm354
    %vm359 = vmor %vm343, %vm355
    %vm360 = vmor %vm344, %vm356
    %v361 = vsel %vm357, 1, 0
    %v362 = vsel %vm358, 1, 0
    %v363 = vsel %vm359, 1, 0
    %v364 = vsel %vm360, 1, 0
    %v365 = vadd.s32 %v333, %v361
    %v366 = vadd.s32 %v334, %v362
    %v367 = vadd.s32 %v335, %v363
    %v368 = vadd.s32 %v336, %v364
    %369 = vset.pattern.permute.xlu0 9
    %370 = vperm.xlu0 %369, %v50
    %v371 = vpop.permute.xlu0 %370
    %vm373 = vcmp.lt.f32.partialorder %v371, %v55
    %vm374 = vcmp.lt.f32.partialorder %v371, %v59
    %vm375 = vcmp.lt.f32.partialorder %v371, %v63
    %vm376 = vcmp.lt.f32.partialorder %v371, %v67
    %vm377 = vcmp.eq.f32.partialorder %v371, %v55
    %vm378 = vcmp.eq.f32.partialorder %v371, %v59
    %vm379 = vcmp.eq.f32.partialorder %v371, %v63
    %vm380 = vcmp.eq.f32.partialorder %v371, %v67
    %vm381 = vcmp.gt.s32.totalorder %v80, 9
    %vm382 = vcmp.gt.s32.totalorder %v81, 9
    %vm383 = vcmp.gt.s32.totalorder %v82, 9
    %vm384 = vcmp.gt.s32.totalorder %v83, 9
    %vm385 = vmand %vm377, %vm381
    %vm386 = vmand %vm378, %vm382
    %vm387 = vmand %vm379, %vm383
    %vm388 = vmand %vm380, %vm384
    %vm389 = vmor %vm373, %vm385
    %vm390 = vmor %vm374, %vm386
    %vm391 = vmor %vm375, %vm387
    %vm392 = vmor %vm376, %vm388
    %v393 = vsel %vm389, 1, 0
    %v394 = vsel %vm390, 1, 0
    %v395 = vsel %vm391, 1, 0
    %v396 = vsel %vm392, 1, 0
    %v397 = vadd.s32 %v365, %v393
    %v398 = vadd.s32 %v366, %v394
    %v399 = vadd.s32 %v367, %v395
    %v400 = vadd.s32 %v368, %v396
    %401 = vset.pattern.permute.xlu0 10
    %402 = vperm.xlu0 %401, %v50
    %v403 = vpop.permute.xlu0 %402
    %vm405 = vcmp.lt.f32.partialorder %v403, %v55
    %vm406 = vcmp.lt.f32.partialorder %v403, %v59
    %vm407 = vcmp.lt.f32.partialorder %v403, %v63
    %vm408 = vcmp.lt.f32.partialorder %v403, %v67
    %vm409 = vcmp.eq.f32.partialorder %v403, %v55
    %vm410 = vcmp.eq.f32.partialorder %v403, %v59
    %vm411 = vcmp.eq.f32.partialorder %v403, %v63
    %vm412 = vcmp.eq.f32.partialorder %v403, %v67
    %vm413 = vcmp.gt.s32.totalorder %v80, 10
    %vm414 = vcmp.gt.s32.totalorder %v81, 10
    %vm415 = vcmp.gt.s32.totalorder %v82, 10
    %vm416 = vcmp.gt.s32.totalorder %v83, 10
    %vm417 = vmand %vm409, %vm413
    %vm418 = vmand %vm410, %vm414
    %vm419 = vmand %vm411, %vm415
    %vm420 = vmand %vm412, %vm416
    %vm421 = vmor %vm405, %vm417
    %vm422 = vmor %vm406, %vm418
    %vm423 = vmor %vm407, %vm419
    %vm424 = vmor %vm408, %vm420
    %v425 = vsel %vm421, 1, 0
    %v426 = vsel %vm422, 1, 0
    %v427 = vsel %vm423, 1, 0
    %v428 = vsel %vm424, 1, 0
    %v429 = vadd.s32 %v397, %v425
    %v430 = vadd.s32 %v398, %v426
    %v431 = vadd.s32 %v399, %v427
    %v432 = vadd.s32 %v400, %v428
    %433 = vset.pattern.permute.xlu0 11
    %434 = vperm.xlu0 %433, %v50
    %v435 = vpop.permute.xlu0 %434
    %vm437 = vcmp.lt.f32.partialorder %v435, %v55
    %vm438 = vcmp.lt.f32.partialorder %v435, %v59
    %vm439 = vcmp.lt.f32.partialorder %v435, %v63
    %vm440 = vcmp.lt.f32.partialorder %v435, %v67
    %vm441 = vcmp.eq.f32.partialorder %v435, %v55
    %vm442 = vcmp.eq.f32.partialorder %v435, %v59
    %vm443 = vcmp.eq.f32.partialorder %v435, %v63
    %vm444 = vcmp.eq.f32.partialorder %v435, %v67
    %vm445 = vcmp.gt.s32.totalorder %v80, 11
    %vm446 = vcmp.gt.s32.totalorder %v81, 11
    %vm447 = vcmp.gt.s32.totalorder %v82, 11
    %vm448 = vcmp.gt.s32.totalorder %v83, 11
    %vm449 = vmand %vm441, %vm445
    %vm450 = vmand %vm442, %vm446
    %vm451 = vmand %vm443, %vm447
    %vm452 = vmand %vm444, %vm448
    %vm453 = vmor %vm437, %vm449
    %vm454 = vmor %vm438, %vm450
    %vm455 = vmor %vm439, %vm451
    %vm456 = vmor %vm440, %vm452
    %v457 = vsel %vm453, 1, 0
    %v458 = vsel %vm454, 1, 0
    %v459 = vsel %vm455, 1, 0
    %v460 = vsel %vm456, 1, 0
    %v461 = vadd.s32 %v429, %v457
    %v462 = vadd.s32 %v430, %v458
    %v463 = vadd.s32 %v431, %v459
    %v464 = vadd.s32 %v432, %v460
    %465 = vset.pattern.permute.xlu0 12
    %466 = vperm.xlu0 %465, %v50
    %v467 = vpop.permute.xlu0 %466
    %vm469 = vcmp.lt.f32.partialorder %v467, %v55
    %vm470 = vcmp.lt.f32.partialorder %v467, %v59
    %vm471 = vcmp.lt.f32.partialorder %v467, %v63
    %vm472 = vcmp.lt.f32.partialorder %v467, %v67
    %vm473 = vcmp.eq.f32.partialorder %v467, %v55
    %vm474 = vcmp.eq.f32.partialorder %v467, %v59
    %vm475 = vcmp.eq.f32.partialorder %v467, %v63
    %vm476 = vcmp.eq.f32.partialorder %v467, %v67
    %vm477 = vcmp.gt.s32.totalorder %v80, 12
    %vm478 = vcmp.gt.s32.totalorder %v81, 12
    %vm479 = vcmp.gt.s32.totalorder %v82, 12
    %vm480 = vcmp.gt.s32.totalorder %v83, 12
    %vm481 = vmand %vm473, %vm477
    %vm482 = vmand %vm474, %vm478
    %vm483 = vmand %vm475, %vm479
    %vm484 = vmand %vm476, %vm480
    %vm485 = vmor %vm469, %vm481
    %vm486 = vmor %vm470, %vm482
    %vm487 = vmor %vm471, %vm483
    %vm488 = vmor %vm472, %vm484
    %v489 = vsel %vm485, 1, 0
    %v490 = vsel %vm486, 1, 0
    %v491 = vsel %vm487, 1, 0
    %v492 = vsel %vm488, 1, 0
    %v493 = vadd.s32 %v461, %v489
    %v494 = vadd.s32 %v462, %v490
    %v495 = vadd.s32 %v463, %v491
    %v496 = vadd.s32 %v464, %v492
    %497 = vset.pattern.permute.xlu0 13
    %498 = vperm.xlu0 %497, %v50
    %v499 = vpop.permute.xlu0 %498
    %vm501 = vcmp.lt.f32.partialorder %v499, %v55
    %vm502 = vcmp.lt.f32.partialorder %v499, %v59
    %vm503 = vcmp.lt.f32.partialorder %v499, %v63
    %vm504 = vcmp.lt.f32.partialorder %v499, %v67
    %vm505 = vcmp.eq.f32.partialorder %v499, %v55
    %vm506 = vcmp.eq.f32.partialorder %v499, %v59
    %vm507 = vcmp.eq.f32.partialorder %v499, %v63
    %vm508 = vcmp.eq.f32.partialorder %v499, %v67
    %vm509 = vcmp.gt.s32.totalorder %v80, 13
    %vm510 = vcmp.gt.s32.totalorder %v81, 13
    %vm511 = vcmp.gt.s32.totalorder %v82, 13
    %vm512 = vcmp.gt.s32.totalorder %v83, 13
    %vm513 = vmand %vm505, %vm509
    %vm514 = vmand %vm506, %vm510
    %vm515 = vmand %vm507, %vm511
    %vm516 = vmand %vm508, %vm512
    %vm517 = vmor %vm501, %vm513
    %vm518 = vmor %vm502, %vm514
    %vm519 = vmor %vm503, %vm515
    %vm520 = vmor %vm504, %vm516
    %v521 = vsel %vm517, 1, 0
    %v522 = vsel %vm518, 1, 0
    %v523 = vsel %vm519, 1, 0
    %v524 = vsel %vm520, 1, 0
    %v525 = vadd.s32 %v493, %v521
    %v526 = vadd.s32 %v494, %v522
    %v527 = vadd.s32 %v495, %v523
    %v528 = vadd.s32 %v496, %v524
    %529 = vset.pattern.permute.xlu0 14
    %530 = vperm.xlu0 %529, %v50
    %v531 = vpop.permute.xlu0 %530
    %vm533 = vcmp.lt.f32.partialorder %v531, %v55
    %vm534 = vcmp.lt.f32.partialorder %v531, %v59
    %vm535 = vcmp.lt.f32.partialorder %v531, %v63
    %vm536 = vcmp.lt.f32.partialorder %v531, %v67
    %vm537 = vcmp.eq.f32.partialorder %v531, %v55
    %vm538 = vcmp.eq.f32.partialorder %v531, %v59
    %vm539 = vcmp.eq.f32.partialorder %v531, %v63
    %vm540 = vcmp.eq.f32.partialorder %v531, %v67
    %vm541 = vcmp.gt.s32.totalorder %v80, 14
    %vm542 = vcmp.gt.s32.totalorder %v81, 14
    %vm543 = vcmp.gt.s32.totalorder %v82, 14
    %vm544 = vcmp.gt.s32.totalorder %v83, 14
    %vm545 = vmand %vm537, %vm541
    %vm546 = vmand %vm538, %vm542
    %vm547 = vmand %vm539, %vm543
    %vm548 = vmand %vm540, %vm544
    %vm549 = vmor %vm533, %vm545
    %vm550 = vmor %vm534, %vm546
    %vm551 = vmor %vm535, %vm547
    %vm552 = vmor %vm536, %vm548
    %v553 = vsel %vm549, 1, 0
    %v554 = vsel %vm550, 1, 0
    %v555 = vsel %vm551, 1, 0
    %v556 = vsel %vm552, 1, 0
    %v557 = vadd.s32 %v525, %v553
    %v558 = vadd.s32 %v526, %v554
    %v559 = vadd.s32 %v527, %v555
    %v560 = vadd.s32 %v528, %v556
    %561 = vset.pattern.permute.xlu0 15
    %562 = vperm.xlu0 %561, %v50
    %v563 = vpop.permute.xlu0 %562
    %vm565 = vcmp.lt.f32.partialorder %v563, %v55
    %vm566 = vcmp.lt.f32.partialorder %v563, %v59
    %vm567 = vcmp.lt.f32.partialorder %v563, %v63
    %vm568 = vcmp.lt.f32.partialorder %v563, %v67
    %vm569 = vcmp.eq.f32.partialorder %v563, %v55
    %vm570 = vcmp.eq.f32.partialorder %v563, %v59
    %vm571 = vcmp.eq.f32.partialorder %v563, %v63
    %vm572 = vcmp.eq.f32.partialorder %v563, %v67
    %vm573 = vcmp.gt.s32.totalorder %v80, 15
    %vm574 = vcmp.gt.s32.totalorder %v81, 15
    %vm575 = vcmp.gt.s32.totalorder %v82, 15
    %vm576 = vcmp.gt.s32.totalorder %v83, 15
    %vm577 = vmand %vm569, %vm573
    %vm578 = vmand %vm570, %vm574
    %vm579 = vmand %vm571, %vm575
    %vm580 = vmand %vm572, %vm576
    %vm581 = vmor %vm565, %vm577
    %vm582 = vmor %vm566, %vm578
    %vm583 = vmor %vm567, %vm579
    %vm584 = vmor %vm568, %vm580
    %v585 = vsel %vm581, 1, 0
    %v586 = vsel %vm582, 1, 0
    %v587 = vsel %vm583, 1, 0
    %v588 = vsel %vm584, 1, 0
    %v589 = vadd.s32 %v557, %v585
    %v590 = vadd.s32 %v558, %v586
    %v591 = vadd.s32 %v559, %v587
    %v592 = vadd.s32 %v560, %v588
    %593 = vset.pattern.permute.xlu0 16
    %594 = vperm.xlu0 %593, %v50
    %v595 = vpop.permute.xlu0 %594
    %vm597 = vcmp.lt.f32.partialorder %v595, %v55
    %vm598 = vcmp.lt.f32.partialorder %v595, %v59
    %vm599 = vcmp.lt.f32.partialorder %v595, %v63
    %vm600 = vcmp.lt.f32.partialorder %v595, %v67
    %vm601 = vcmp.eq.f32.partialorder %v595, %v55
    %vm602 = vcmp.eq.f32.partialorder %v595, %v59
    %vm603 = vcmp.eq.f32.partialorder %v595, %v63
    %vm604 = vcmp.eq.f32.partialorder %v595, %v67
    %vm605 = vcmp.gt.s32.totalorder %v80, 16
    %vm606 = vcmp.gt.s32.totalorder %v81, 16
    %vm607 = vcmp.gt.s32.totalorder %v82, 16
    %vm608 = vcmp.gt.s32.totalorder %v83, 16
    %vm609 = vmand %vm601, %vm605
    %vm610 = vmand %vm602, %vm606
    %vm611 = vmand %vm603, %vm607
    %vm612 = vmand %vm604, %vm608
    %vm613 = vmor %vm597, %vm609
    %vm614 = vmor %vm598, %vm610
    %vm615 = vmor %vm599, %vm611
    %vm616 = vmor %vm600, %vm612
    %v617 = vsel %vm613, 1, 0
    %v618 = vsel %vm614, 1, 0
    %v619 = vsel %vm615, 1, 0
    %v620 = vsel %vm616, 1, 0
    %v621 = vadd.s32 %v589, %v617
    %v622 = vadd.s32 %v590, %v618
    %v623 = vadd.s32 %v591, %v619
    %v624 = vadd.s32 %v592, %v620
    %625 = vset.pattern.permute.xlu0 17
    %626 = vperm.xlu0 %625, %v50
    %v627 = vpop.permute.xlu0 %626
    %vm629 = vcmp.lt.f32.partialorder %v627, %v55
    %vm630 = vcmp.lt.f32.partialorder %v627, %v59
    %vm631 = vcmp.lt.f32.partialorder %v627, %v63
    %vm632 = vcmp.lt.f32.partialorder %v627, %v67
    %vm633 = vcmp.eq.f32.partialorder %v627, %v55
    %vm634 = vcmp.eq.f32.partialorder %v627, %v59
    %vm635 = vcmp.eq.f32.partialorder %v627, %v63
    %vm636 = vcmp.eq.f32.partialorder %v627, %v67
    %vm637 = vcmp.gt.s32.totalorder %v80, 17
    %vm638 = vcmp.gt.s32.totalorder %v81, 17
    %vm639 = vcmp.gt.s32.totalorder %v82, 17
    %vm640 = vcmp.gt.s32.totalorder %v83, 17
    %vm641 = vmand %vm633, %vm637
    %vm642 = vmand %vm634, %vm638
    %vm643 = vmand %vm635, %vm639
    %vm644 = vmand %vm636, %vm640
    %vm645 = vmor %vm629, %vm641
    %vm646 = vmor %vm630, %vm642
    %vm647 = vmor %vm631, %vm643
    %vm648 = vmor %vm632, %vm644
    %v649 = vsel %vm645, 1, 0
    %v650 = vsel %vm646, 1, 0
    %v651 = vsel %vm647, 1, 0
    %v652 = vsel %vm648, 1, 0
    %v653 = vadd.s32 %v621, %v649
    %v654 = vadd.s32 %v622, %v650
    %v655 = vadd.s32 %v623, %v651
    %v656 = vadd.s32 %v624, %v652
    %657 = vset.pattern.permute.xlu0 18
    %658 = vperm.xlu0 %657, %v50
    %v659 = vpop.permute.xlu0 %658
    %vm661 = vcmp.lt.f32.partialorder %v659, %v55
    %vm662 = vcmp.lt.f32.partialorder %v659, %v59
    %vm663 = vcmp.lt.f32.partialorder %v659, %v63
    %vm664 = vcmp.lt.f32.partialorder %v659, %v67
    %vm665 = vcmp.eq.f32.partialorder %v659, %v55
    %vm666 = vcmp.eq.f32.partialorder %v659, %v59
    %vm667 = vcmp.eq.f32.partialorder %v659, %v63
    %vm668 = vcmp.eq.f32.partialorder %v659, %v67
    %vm669 = vcmp.gt.s32.totalorder %v80, 18
    %vm670 = vcmp.gt.s32.totalorder %v81, 18
    %vm671 = vcmp.gt.s32.totalorder %v82, 18
    %vm672 = vcmp.gt.s32.totalorder %v83, 18
    %vm673 = vmand %vm665, %vm669
    %vm674 = vmand %vm666, %vm670
    %vm675 = vmand %vm667, %vm671
    %vm676 = vmand %vm668, %vm672
    %vm677 = vmor %vm661, %vm673
    %vm678 = vmor %vm662, %vm674
    %vm679 = vmor %vm663, %vm675
    %vm680 = vmor %vm664, %vm676
    %v681 = vsel %vm677, 1, 0
    %v682 = vsel %vm678, 1, 0
    %v683 = vsel %vm679, 1, 0
    %v684 = vsel %vm680, 1, 0
    %v685 = vadd.s32 %v653, %v681
    %v686 = vadd.s32 %v654, %v682
    %v687 = vadd.s32 %v655, %v683
    %v688 = vadd.s32 %v656, %v684
    %689 = vset.pattern.permute.xlu0 19
    %690 = vperm.xlu0 %689, %v50
    %v691 = vpop.permute.xlu0 %690
    %vm693 = vcmp.lt.f32.partialorder %v691, %v55
    %vm694 = vcmp.lt.f32.partialorder %v691, %v59
    %vm695 = vcmp.lt.f32.partialorder %v691, %v63
    %vm696 = vcmp.lt.f32.partialorder %v691, %v67
    %vm697 = vcmp.eq.f32.partialorder %v691, %v55
    %vm698 = vcmp.eq.f32.partialorder %v691, %v59
    %vm699 = vcmp.eq.f32.partialorder %v691, %v63
    %vm700 = vcmp.eq.f32.partialorder %v691, %v67
    %vm701 = vcmp.gt.s32.totalorder %v80, 19
    %vm702 = vcmp.gt.s32.totalorder %v81, 19
    %vm703 = vcmp.gt.s32.totalorder %v82, 19
    %vm704 = vcmp.gt.s32.totalorder %v83, 19
    %vm705 = vmand %vm697, %vm701
    %vm706 = vmand %vm698, %vm702
    %vm707 = vmand %vm699, %vm703
    %vm708 = vmand %vm700, %vm704
    %vm709 = vmor %vm693, %vm705
    %vm710 = vmor %vm694, %vm706
    %vm711 = vmor %vm695, %vm707
    %vm712 = vmor %vm696, %vm708
    %v713 = vsel %vm709, 1, 0
    %v714 = vsel %vm710, 1, 0
    %v715 = vsel %vm711, 1, 0
    %v716 = vsel %vm712, 1, 0
    %v717 = vadd.s32 %v685, %v713
    %v718 = vadd.s32 %v686, %v714
    %v719 = vadd.s32 %v687, %v715
    %v720 = vadd.s32 %v688, %v716
    %721 = vset.pattern.permute.xlu0 20
    %722 = vperm.xlu0 %721, %v50
    %v723 = vpop.permute.xlu0 %722
    %vm725 = vcmp.lt.f32.partialorder %v723, %v55
    %vm726 = vcmp.lt.f32.partialorder %v723, %v59
    %vm727 = vcmp.lt.f32.partialorder %v723, %v63
    %vm728 = vcmp.lt.f32.partialorder %v723, %v67
    %vm729 = vcmp.eq.f32.partialorder %v723, %v55
    %vm730 = vcmp.eq.f32.partialorder %v723, %v59
    %vm731 = vcmp.eq.f32.partialorder %v723, %v63
    %vm732 = vcmp.eq.f32.partialorder %v723, %v67
    %vm733 = vcmp.gt.s32.totalorder %v80, 20
    %vm734 = vcmp.gt.s32.totalorder %v81, 20
    %vm735 = vcmp.gt.s32.totalorder %v82, 20
    %vm736 = vcmp.gt.s32.totalorder %v83, 20
    %vm737 = vmand %vm729, %vm733
    %vm738 = vmand %vm730, %vm734
    %vm739 = vmand %vm731, %vm735
    %vm740 = vmand %vm732, %vm736
    %vm741 = vmor %vm725, %vm737
    %vm742 = vmor %vm726, %vm738
    %vm743 = vmor %vm727, %vm739
    %vm744 = vmor %vm728, %vm740
    %v745 = vsel %vm741, 1, 0
    %v746 = vsel %vm742, 1, 0
    %v747 = vsel %vm743, 1, 0
    %v748 = vsel %vm744, 1, 0
    %v749 = vadd.s32 %v717, %v745
    %v750 = vadd.s32 %v718, %v746
    %v751 = vadd.s32 %v719, %v747
    %v752 = vadd.s32 %v720, %v748
    %753 = vset.pattern.permute.xlu0 21
    %754 = vperm.xlu0 %753, %v50
    %v755 = vpop.permute.xlu0 %754
    %vm757 = vcmp.lt.f32.partialorder %v755, %v55
    %vm758 = vcmp.lt.f32.partialorder %v755, %v59
    %vm759 = vcmp.lt.f32.partialorder %v755, %v63
    %vm760 = vcmp.lt.f32.partialorder %v755, %v67
    %vm761 = vcmp.eq.f32.partialorder %v755, %v55
    %vm762 = vcmp.eq.f32.partialorder %v755, %v59
    %vm763 = vcmp.eq.f32.partialorder %v755, %v63
    %vm764 = vcmp.eq.f32.partialorder %v755, %v67
    %vm765 = vcmp.gt.s32.totalorder %v80, 21
    %vm766 = vcmp.gt.s32.totalorder %v81, 21
    %vm767 = vcmp.gt.s32.totalorder %v82, 21
    %vm768 = vcmp.gt.s32.totalorder %v83, 21
    %vm769 = vmand %vm761, %vm765
    %vm770 = vmand %vm762, %vm766
    %vm771 = vmand %vm763, %vm767
    %vm772 = vmand %vm764, %vm768
    %vm773 = vmor %vm757, %vm769
    %vm774 = vmor %vm758, %vm770
    %vm775 = vmor %vm759, %vm771
    %vm776 = vmor %vm760, %vm772
    %v777 = vsel %vm773, 1, 0
    %v778 = vsel %vm774, 1, 0
    %v779 = vsel %vm775, 1, 0
    %v780 = vsel %vm776, 1, 0
    %v781 = vadd.s32 %v749, %v777
    %v782 = vadd.s32 %v750, %v778
    %v783 = vadd.s32 %v751, %v779
    %v784 = vadd.s32 %v752, %v780
    %785 = vset.pattern.permute.xlu0 22
    %786 = vperm.xlu0 %785, %v50
    %v787 = vpop.permute.xlu0 %786
    %vm789 = vcmp.lt.f32.partialorder %v787, %v55
    %vm790 = vcmp.lt.f32.partialorder %v787, %v59
    %vm791 = vcmp.lt.f32.partialorder %v787, %v63
    %vm792 = vcmp.lt.f32.partialorder %v787, %v67
    %vm793 = vcmp.eq.f32.partialorder %v787, %v55
    %vm794 = vcmp.eq.f32.partialorder %v787, %v59
    %vm795 = vcmp.eq.f32.partialorder %v787, %v63
    %vm796 = vcmp.eq.f32.partialorder %v787, %v67
    %vm797 = vcmp.gt.s32.totalorder %v80, 22
    %vm798 = vcmp.gt.s32.totalorder %v81, 22
    %vm799 = vcmp.gt.s32.totalorder %v82, 22
    %vm800 = vcmp.gt.s32.totalorder %v83, 22
    %vm801 = vmand %vm793, %vm797
    %vm802 = vmand %vm794, %vm798
    %vm803 = vmand %vm795, %vm799
    %vm804 = vmand %vm796, %vm800
    %vm805 = vmor %vm789, %vm801
    %vm806 = vmor %vm790, %vm802
    %vm807 = vmor %vm791, %vm803
    %vm808 = vmor %vm792, %vm804
    %v809 = vsel %vm805, 1, 0
    %v810 = vsel %vm806, 1, 0
    %v811 = vsel %vm807, 1, 0
    %v812 = vsel %vm808, 1, 0
    %v813 = vadd.s32 %v781, %v809
    %v814 = vadd.s32 %v782, %v810
    %v815 = vadd.s32 %v783, %v811
    %v816 = vadd.s32 %v784, %v812
    %817 = vset.pattern.permute.xlu0 23
    %818 = vperm.xlu0 %817, %v50
    %v819 = vpop.permute.xlu0 %818
    %vm821 = vcmp.lt.f32.partialorder %v819, %v55
    %vm822 = vcmp.lt.f32.partialorder %v819, %v59
    %vm823 = vcmp.lt.f32.partialorder %v819, %v63
    %vm824 = vcmp.lt.f32.partialorder %v819, %v67
    %vm825 = vcmp.eq.f32.partialorder %v819, %v55
    %vm826 = vcmp.eq.f32.partialorder %v819, %v59
    %vm827 = vcmp.eq.f32.partialorder %v819, %v63
    %vm828 = vcmp.eq.f32.partialorder %v819, %v67
    %vm829 = vcmp.gt.s32.totalorder %v80, 23
    %vm830 = vcmp.gt.s32.totalorder %v81, 23
    %vm831 = vcmp.gt.s32.totalorder %v82, 23
    %vm832 = vcmp.gt.s32.totalorder %v83, 23
    %vm833 = vmand %vm825, %vm829
    %vm834 = vmand %vm826, %vm830
    %vm835 = vmand %vm827, %vm831
    %vm836 = vmand %vm828, %vm832
    %vm837 = vmor %vm821, %vm833
    %vm838 = vmor %vm822, %vm834
    %vm839 = vmor %vm823, %vm835
    %vm840 = vmor %vm824, %vm836
    %v841 = vsel %vm837, 1, 0
    %v842 = vsel %vm838, 1, 0
    %v843 = vsel %vm839, 1, 0
    %v844 = vsel %vm840, 1, 0
    %v845 = vadd.s32 %v813, %v841
    %v846 = vadd.s32 %v814, %v842
    %v847 = vadd.s32 %v815, %v843
    %v848 = vadd.s32 %v816, %v844
    %849 = vset.pattern.permute.xlu0 24
    %850 = vperm.xlu0 %849, %v50
    %v851 = vpop.permute.xlu0 %850
    %vm853 = vcmp.lt.f32.partialorder %v851, %v55
    %vm854 = vcmp.lt.f32.partialorder %v851, %v59
    %vm855 = vcmp.lt.f32.partialorder %v851, %v63
    %vm856 = vcmp.lt.f32.partialorder %v851, %v67
    %vm857 = vcmp.eq.f32.partialorder %v851, %v55
    %vm858 = vcmp.eq.f32.partialorder %v851, %v59
    %vm859 = vcmp.eq.f32.partialorder %v851, %v63
    %vm860 = vcmp.eq.f32.partialorder %v851, %v67
    %vm861 = vcmp.gt.s32.totalorder %v80, 24
    %vm862 = vcmp.gt.s32.totalorder %v81, 24
    %vm863 = vcmp.gt.s32.totalorder %v82, 24
    %vm864 = vcmp.gt.s32.totalorder %v83, 24
    %vm865 = vmand %vm857, %vm861
    %vm866 = vmand %vm858, %vm862
    %vm867 = vmand %vm859, %vm863
    %vm868 = vmand %vm860, %vm864
    %vm869 = vmor %vm853, %vm865
    %vm870 = vmor %vm854, %vm866
    %vm871 = vmor %vm855, %vm867
    %vm872 = vmor %vm856, %vm868
    %v873 = vsel %vm869, 1, 0
    %v874 = vsel %vm870, 1, 0
    %v875 = vsel %vm871, 1, 0
    %v876 = vsel %vm872, 1, 0
    %v877 = vadd.s32 %v845, %v873
    %v878 = vadd.s32 %v846, %v874
    %v879 = vadd.s32 %v847, %v875
    %v880 = vadd.s32 %v848, %v876
    %881 = vset.pattern.permute.xlu0 25
    %882 = vperm.xlu0 %881, %v50
    %v883 = vpop.permute.xlu0 %882
    %vm885 = vcmp.lt.f32.partialorder %v883, %v55
    %vm886 = vcmp.lt.f32.partialorder %v883, %v59
    %vm887 = vcmp.lt.f32.partialorder %v883, %v63
    %vm888 = vcmp.lt.f32.partialorder %v883, %v67
    %vm889 = vcmp.eq.f32.partialorder %v883, %v55
    %vm890 = vcmp.eq.f32.partialorder %v883, %v59
    %vm891 = vcmp.eq.f32.partialorder %v883, %v63
    %vm892 = vcmp.eq.f32.partialorder %v883, %v67
    %vm893 = vcmp.gt.s32.totalorder %v80, 25
    %vm894 = vcmp.gt.s32.totalorder %v81, 25
    %vm895 = vcmp.gt.s32.totalorder %v82, 25
    %vm896 = vcmp.gt.s32.totalorder %v83, 25
    %vm897 = vmand %vm889, %vm893
    %vm898 = vmand %vm890, %vm894
    %vm899 = vmand %vm891, %vm895
    %vm900 = vmand %vm892, %vm896
    %vm901 = vmor %vm885, %vm897
    %vm902 = vmor %vm886, %vm898
    %vm903 = vmor %vm887, %vm899
    %vm904 = vmor %vm888, %vm900
    %v905 = vsel %vm901, 1, 0
    %v906 = vsel %vm902, 1, 0
    %v907 = vsel %vm903, 1, 0
    %v908 = vsel %vm904, 1, 0
    %v909 = vadd.s32 %v877, %v905
    %v910 = vadd.s32 %v878, %v906
    %v911 = vadd.s32 %v879, %v907
    %v912 = vadd.s32 %v880, %v908
    %913 = vset.pattern.permute.xlu0 26
    %914 = vperm.xlu0 %913, %v50
    %v915 = vpop.permute.xlu0 %914
    %vm917 = vcmp.lt.f32.partialorder %v915, %v55
    %vm918 = vcmp.lt.f32.partialorder %v915, %v59
    %vm919 = vcmp.lt.f32.partialorder %v915, %v63
    %vm920 = vcmp.lt.f32.partialorder %v915, %v67
    %vm921 = vcmp.eq.f32.partialorder %v915, %v55
    %vm922 = vcmp.eq.f32.partialorder %v915, %v59
    %vm923 = vcmp.eq.f32.partialorder %v915, %v63
    %vm924 = vcmp.eq.f32.partialorder %v915, %v67
    %vm925 = vcmp.gt.s32.totalorder %v80, 26
    %vm926 = vcmp.gt.s32.totalorder %v81, 26
    %vm927 = vcmp.gt.s32.totalorder %v82, 26
    %vm928 = vcmp.gt.s32.totalorder %v83, 26
    %vm929 = vmand %vm921, %vm925
    %vm930 = vmand %vm922, %vm926
    %vm931 = vmand %vm923, %vm927
    %vm932 = vmand %vm924, %vm928
    %vm933 = vmor %vm917, %vm929
    %vm934 = vmor %vm918, %vm930
    %vm935 = vmor %vm919, %vm931
    %vm936 = vmor %vm920, %vm932
    %v937 = vsel %vm933, 1, 0
    %v938 = vsel %vm934, 1, 0
    %v939 = vsel %vm935, 1, 0
    %v940 = vsel %vm936, 1, 0
    %v941 = vadd.s32 %v909, %v937
    %v942 = vadd.s32 %v910, %v938
    %v943 = vadd.s32 %v911, %v939
    %v944 = vadd.s32 %v912, %v940
    %945 = vset.pattern.permute.xlu0 27
    %946 = vperm.xlu0 %945, %v50
    %v947 = vpop.permute.xlu0 %946
    %vm949 = vcmp.lt.f32.partialorder %v947, %v55
    %vm950 = vcmp.lt.f32.partialorder %v947, %v59
    %vm951 = vcmp.lt.f32.partialorder %v947, %v63
    %vm952 = vcmp.lt.f32.partialorder %v947, %v67
    %vm953 = vcmp.eq.f32.partialorder %v947, %v55
    %vm954 = vcmp.eq.f32.partialorder %v947, %v59
    %vm955 = vcmp.eq.f32.partialorder %v947, %v63
    %vm956 = vcmp.eq.f32.partialorder %v947, %v67
    %vm957 = vcmp.gt.s32.totalorder %v80, 27
    %vm958 = vcmp.gt.s32.totalorder %v81, 27
    %vm959 = vcmp.gt.s32.totalorder %v82, 27
    %vm960 = vcmp.gt.s32.totalorder %v83, 27
    %vm961 = vmand %vm953, %vm957
    %vm962 = vmand %vm954, %vm958
    %vm963 = vmand %vm955, %vm959
    %vm964 = vmand %vm956, %vm960
    %vm965 = vmor %vm949, %vm961
    %vm966 = vmor %vm950, %vm962
    %vm967 = vmor %vm951, %vm963
    %vm968 = vmor %vm952, %vm964
    %v969 = vsel %vm965, 1, 0
    %v970 = vsel %vm966, 1, 0
    %v971 = vsel %vm967, 1, 0
    %v972 = vsel %vm968, 1, 0
    %v973 = vadd.s32 %v941, %v969
    %v974 = vadd.s32 %v942, %v970
    %v975 = vadd.s32 %v943, %v971
    %v976 = vadd.s32 %v944, %v972
    %977 = vset.pattern.permute.xlu0 28
    %978 = vperm.xlu0 %977, %v50
    %v979 = vpop.permute.xlu0 %978
    %vm981 = vcmp.lt.f32.partialorder %v979, %v55
    %vm982 = vcmp.lt.f32.partialorder %v979, %v59
    %vm983 = vcmp.lt.f32.partialorder %v979, %v63
    %vm984 = vcmp.lt.f32.partialorder %v979, %v67
    %vm985 = vcmp.eq.f32.partialorder %v979, %v55
    %vm986 = vcmp.eq.f32.partialorder %v979, %v59
    %vm987 = vcmp.eq.f32.partialorder %v979, %v63
    %vm988 = vcmp.eq.f32.partialorder %v979, %v67
    %vm989 = vcmp.gt.s32.totalorder %v80, 28
    %vm990 = vcmp.gt.s32.totalorder %v81, 28
    %vm991 = vcmp.gt.s32.totalorder %v82, 28
    %vm992 = vcmp.gt.s32.totalorder %v83, 28
    %vm993 = vmand %vm985, %vm989
    %vm994 = vmand %vm986, %vm990
    %vm995 = vmand %vm987, %vm991
    %vm996 = vmand %vm988, %vm992
    %vm997 = vmor %vm981, %vm993
    %vm998 = vmor %vm982, %vm994
    %vm999 = vmor %vm983, %vm995
    %vm1000 = vmor %vm984, %vm996
    %v1001 = vsel %vm997, 1, 0
    %v1002 = vsel %vm998, 1, 0
    %v1003 = vsel %vm999, 1, 0
    %v1004 = vsel %vm1000, 1, 0
    %v1005 = vadd.s32 %v973, %v1001
    %v1006 = vadd.s32 %v974, %v1002
    %v1007 = vadd.s32 %v975, %v1003
    %v1008 = vadd.s32 %v976, %v1004
    %1009 = vset.pattern.permute.xlu0 29
    %1010 = vperm.xlu0 %1009, %v50
    %v1011 = vpop.permute.xlu0 %1010
    %vm1013 = vcmp.lt.f32.partialorder %v1011, %v55
    %vm1014 = vcmp.lt.f32.partialorder %v1011, %v59
    %vm1015 = vcmp.lt.f32.partialorder %v1011, %v63
    %vm1016 = vcmp.lt.f32.partialorder %v1011, %v67
    %vm1017 = vcmp.eq.f32.partialorder %v1011, %v55
    %vm1018 = vcmp.eq.f32.partialorder %v1011, %v59
    %vm1019 = vcmp.eq.f32.partialorder %v1011, %v63
    %vm1020 = vcmp.eq.f32.partialorder %v1011, %v67
    %vm1021 = vcmp.gt.s32.totalorder %v80, 29
    %vm1022 = vcmp.gt.s32.totalorder %v81, 29
    %vm1023 = vcmp.gt.s32.totalorder %v82, 29
    %vm1024 = vcmp.gt.s32.totalorder %v83, 29
    %vm1025 = vmand %vm1017, %vm1021
    %vm1026 = vmand %vm1018, %vm1022
    %vm1027 = vmand %vm1019, %vm1023
    %vm1028 = vmand %vm1020, %vm1024
    %vm1029 = vmor %vm1013, %vm1025
    %vm1030 = vmor %vm1014, %vm1026
    %vm1031 = vmor %vm1015, %vm1027
    %vm1032 = vmor %vm1016, %vm1028
    %v1033 = vsel %vm1029, 1, 0
    %v1034 = vsel %vm1030, 1, 0
    %v1035 = vsel %vm1031, 1, 0
    %v1036 = vsel %vm1032, 1, 0
    %v1037 = vadd.s32 %v1005, %v1033
    %v1038 = vadd.s32 %v1006, %v1034
    %v1039 = vadd.s32 %v1007, %v1035
    %v1040 = vadd.s32 %v1008, %v1036
    %1041 = vset.pattern.permute.xlu0 30
    %1042 = vperm.xlu0 %1041, %v50
    %v1043 = vpop.permute.xlu0 %1042
    %vm1045 = vcmp.lt.f32.partialorder %v1043, %v55
    %vm1046 = vcmp.lt.f32.partialorder %v1043, %v59
    %vm1047 = vcmp.lt.f32.partialorder %v1043, %v63
    %vm1048 = vcmp.lt.f32.partialorder %v1043, %v67
    %vm1049 = vcmp.eq.f32.partialorder %v1043, %v55
    %vm1050 = vcmp.eq.f32.partialorder %v1043, %v59
    %vm1051 = vcmp.eq.f32.partialorder %v1043, %v63
    %vm1052 = vcmp.eq.f32.partialorder %v1043, %v67
    %vm1053 = vcmp.gt.s32.totalorder %v80, 30
    %vm1054 = vcmp.gt.s32.totalorder %v81, 30
    %vm1055 = vcmp.gt.s32.totalorder %v82, 30
    %vm1056 = vcmp.gt.s32.totalorder %v83, 30
    %vm1057 = vmand %vm1049, %vm1053
    %vm1058 = vmand %vm1050, %vm1054
    %vm1059 = vmand %vm1051, %vm1055
    %vm1060 = vmand %vm1052, %vm1056
    %vm1061 = vmor %vm1045, %vm1057
    %vm1062 = vmor %vm1046, %vm1058
    %vm1063 = vmor %vm1047, %vm1059
    %vm1064 = vmor %vm1048, %vm1060
    %v1065 = vsel %vm1061, 1, 0
    %v1066 = vsel %vm1062, 1, 0
    %v1067 = vsel %vm1063, 1, 0
    %v1068 = vsel %vm1064, 1, 0
    %v1069 = vadd.s32 %v1037, %v1065
    %v1070 = vadd.s32 %v1038, %v1066
    %v1071 = vadd.s32 %v1039, %v1067
    %v1072 = vadd.s32 %v1040, %v1068
    %1073 = vset.pattern.permute.xlu0 31
    %1074 = vperm.xlu0 %1073, %v50
    %v1075 = vpop.permute.xlu0 %1074
    %vm1077 = vcmp.lt.f32.partialorder %v1075, %v55
    %vm1078 = vcmp.lt.f32.partialorder %v1075, %v59
    %vm1079 = vcmp.lt.f32.partialorder %v1075, %v63
    %vm1080 = vcmp.lt.f32.partialorder %v1075, %v67
    %vm1081 = vcmp.eq.f32.partialorder %v1075, %v55
    %vm1082 = vcmp.eq.f32.partialorder %v1075, %v59
    %vm1083 = vcmp.eq.f32.partialorder %v1075, %v63
    %vm1084 = vcmp.eq.f32.partialorder %v1075, %v67
    %vm1085 = vcmp.gt.s32.totalorder %v80, 31
    %vm1086 = vcmp.gt.s32.totalorder %v81, 31
    %vm1087 = vcmp.gt.s32.totalorder %v82, 31
    %vm1088 = vcmp.gt.s32.totalorder %v83, 31
    %vm1089 = vmand %vm1081, %vm1085
    %vm1090 = vmand %vm1082, %vm1086
    %vm1091 = vmand %vm1083, %vm1087
    %vm1092 = vmand %vm1084, %vm1088
    %vm1093 = vmor %vm1077, %vm1089
    %vm1094 = vmor %vm1078, %vm1090
    %vm1095 = vmor %vm1079, %vm1091
    %vm1096 = vmor %vm1080, %vm1092
    %v1097 = vsel %vm1093, 1, 0
    %v1098 = vsel %vm1094, 1, 0
    %v1099 = vsel %vm1095, 1, 0
    %v1100 = vsel %vm1096, 1, 0
    %v1101 = vadd.s32 %v1069, %v1097
    %v1102 = vadd.s32 %v1070, %v1098
    %v1103 = vadd.s32 %v1071, %v1099
    %v1104 = vadd.s32 %v1072, %v1100
    %1105 = vset.pattern.permute.xlu0 32
    %1106 = vperm.xlu0 %1105, %v50
    %v1107 = vpop.permute.xlu0 %1106
    %vm1109 = vcmp.lt.f32.partialorder %v1107, %v55
    %vm1110 = vcmp.lt.f32.partialorder %v1107, %v59
    %vm1111 = vcmp.lt.f32.partialorder %v1107, %v63
    %vm1112 = vcmp.lt.f32.partialorder %v1107, %v67
    %vm1113 = vcmp.eq.f32.partialorder %v1107, %v55
    %vm1114 = vcmp.eq.f32.partialorder %v1107, %v59
    %vm1115 = vcmp.eq.f32.partialorder %v1107, %v63
    %vm1116 = vcmp.eq.f32.partialorder %v1107, %v67
    %vm1117 = vcmp.gt.s32.totalorder %v80, 32
    %vm1118 = vcmp.gt.s32.totalorder %v81, 32
    %vm1119 = vcmp.gt.s32.totalorder %v82, 32
    %vm1120 = vcmp.gt.s32.totalorder %v83, 32
    %vm1121 = vmand %vm1113, %vm1117
    %vm1122 = vmand %vm1114, %vm1118
    %vm1123 = vmand %vm1115, %vm1119
    %vm1124 = vmand %vm1116, %vm1120
    %vm1125 = vmor %vm1109, %vm1121
    %vm1126 = vmor %vm1110, %vm1122
    %vm1127 = vmor %vm1111, %vm1123
    %vm1128 = vmor %vm1112, %vm1124
    %v1129 = vsel %vm1125, 1, 0
    %v1130 = vsel %vm1126, 1, 0
    %v1131 = vsel %vm1127, 1, 0
    %v1132 = vsel %vm1128, 1, 0
    %v1133 = vadd.s32 %v1101, %v1129
    %v1134 = vadd.s32 %v1102, %v1130
    %v1135 = vadd.s32 %v1103, %v1131
    %v1136 = vadd.s32 %v1104, %v1132
    %1137 = vset.pattern.permute.xlu0 33
    %1138 = vperm.xlu0 %1137, %v50
    %v1139 = vpop.permute.xlu0 %1138
    %vm1141 = vcmp.lt.f32.partialorder %v1139, %v55
    %vm1142 = vcmp.lt.f32.partialorder %v1139, %v59
    %vm1143 = vcmp.lt.f32.partialorder %v1139, %v63
    %vm1144 = vcmp.lt.f32.partialorder %v1139, %v67
    %vm1145 = vcmp.eq.f32.partialorder %v1139, %v55
    %vm1146 = vcmp.eq.f32.partialorder %v1139, %v59
    %vm1147 = vcmp.eq.f32.partialorder %v1139, %v63
    %vm1148 = vcmp.eq.f32.partialorder %v1139, %v67
    %vm1149 = vcmp.gt.s32.totalorder %v80, 33
    %vm1150 = vcmp.gt.s32.totalorder %v81, 33
    %vm1151 = vcmp.gt.s32.totalorder %v82, 33
    %vm1152 = vcmp.gt.s32.totalorder %v83, 33
    %vm1153 = vmand %vm1145, %vm1149
    %vm1154 = vmand %vm1146, %vm1150
    %vm1155 = vmand %vm1147, %vm1151
    %vm1156 = vmand %vm1148, %vm1152
    %vm1157 = vmor %vm1141, %vm1153
    %vm1158 = vmor %vm1142, %vm1154
    %vm1159 = vmor %vm1143, %vm1155
    %vm1160 = vmor %vm1144, %vm1156
    %v1161 = vsel %vm1157, 1, 0
    %v1162 = vsel %vm1158, 1, 0
    %v1163 = vsel %vm1159, 1, 0
    %v1164 = vsel %vm1160, 1, 0
    %v1165 = vadd.s32 %v1133, %v1161
    %v1166 = vadd.s32 %v1134, %v1162
    %v1167 = vadd.s32 %v1135, %v1163
    %v1168 = vadd.s32 %v1136, %v1164
    %1169 = vset.pattern.permute.xlu0 34
    %1170 = vperm.xlu0 %1169, %v50
    %v1171 = vpop.permute.xlu0 %1170
    %vm1173 = vcmp.lt.f32.partialorder %v1171, %v55
    %vm1174 = vcmp.lt.f32.partialorder %v1171, %v59
    %vm1175 = vcmp.lt.f32.partialorder %v1171, %v63
    %vm1176 = vcmp.lt.f32.partialorder %v1171, %v67
    %vm1177 = vcmp.eq.f32.partialorder %v1171, %v55
    %vm1178 = vcmp.eq.f32.partialorder %v1171, %v59
    %vm1179 = vcmp.eq.f32.partialorder %v1171, %v63
    %vm1180 = vcmp.eq.f32.partialorder %v1171, %v67
    %vm1181 = vcmp.gt.s32.totalorder %v80, 34
    %vm1182 = vcmp.gt.s32.totalorder %v81, 34
    %vm1183 = vcmp.gt.s32.totalorder %v82, 34
    %vm1184 = vcmp.gt.s32.totalorder %v83, 34
    %vm1185 = vmand %vm1177, %vm1181
    %vm1186 = vmand %vm1178, %vm1182
    %vm1187 = vmand %vm1179, %vm1183
    %vm1188 = vmand %vm1180, %vm1184
    %vm1189 = vmor %vm1173, %vm1185
    %vm1190 = vmor %vm1174, %vm1186
    %vm1191 = vmor %vm1175, %vm1187
    %vm1192 = vmor %vm1176, %vm1188
    %v1193 = vsel %vm1189, 1, 0
    %v1194 = vsel %vm1190, 1, 0
    %v1195 = vsel %vm1191, 1, 0
    %v1196 = vsel %vm1192, 1, 0
    %v1197 = vadd.s32 %v1165, %v1193
    %v1198 = vadd.s32 %v1166, %v1194
    %v1199 = vadd.s32 %v1167, %v1195
    %v1200 = vadd.s32 %v1168, %v1196
    %1201 = vset.pattern.permute.xlu0 35
    %1202 = vperm.xlu0 %1201, %v50
    %v1203 = vpop.permute.xlu0 %1202
    %vm1205 = vcmp.lt.f32.partialorder %v1203, %v55
    %vm1206 = vcmp.lt.f32.partialorder %v1203, %v59
    %vm1207 = vcmp.lt.f32.partialorder %v1203, %v63
    %vm1208 = vcmp.lt.f32.partialorder %v1203, %v67
    %vm1209 = vcmp.eq.f32.partialorder %v1203, %v55
    %vm1210 = vcmp.eq.f32.partialorder %v1203, %v59
    %vm1211 = vcmp.eq.f32.partialorder %v1203, %v63
    %vm1212 = vcmp.eq.f32.partialorder %v1203, %v67
    %vm1213 = vcmp.gt.s32.totalorder %v80, 35
    %vm1214 = vcmp.gt.s32.totalorder %v81, 35
    %vm1215 = vcmp.gt.s32.totalorder %v82, 35
    %vm1216 = vcmp.gt.s32.totalorder %v83, 35
    %vm1217 = vmand %vm1209, %vm1213
    %vm1218 = vmand %vm1210, %vm1214
    %vm1219 = vmand %vm1211, %vm1215
    %vm1220 = vmand %vm1212, %vm1216
    %vm1221 = vmor %vm1205, %vm1217
    %vm1222 = vmor %vm1206, %vm1218
    %vm1223 = vmor %vm1207, %vm1219
    %vm1224 = vmor %vm1208, %vm1220
    %v1225 = vsel %vm1221, 1, 0
    %v1226 = vsel %vm1222, 1, 0
    %v1227 = vsel %vm1223, 1, 0
    %v1228 = vsel %vm1224, 1, 0
    %v1229 = vadd.s32 %v1197, %v1225
    %v1230 = vadd.s32 %v1198, %v1226
    %v1231 = vadd.s32 %v1199, %v1227
    %v1232 = vadd.s32 %v1200, %v1228
    %1233 = vset.pattern.permute.xlu0 36
    %1234 = vperm.xlu0 %1233, %v50
    %v1235 = vpop.permute.xlu0 %1234
    %vm1237 = vcmp.lt.f32.partialorder %v1235, %v55
    %vm1238 = vcmp.lt.f32.partialorder %v1235, %v59
    %vm1239 = vcmp.lt.f32.partialorder %v1235, %v63
    %vm1240 = vcmp.lt.f32.partialorder %v1235, %v67
    %vm1241 = vcmp.eq.f32.partialorder %v1235, %v55
    %vm1242 = vcmp.eq.f32.partialorder %v1235, %v59
    %vm1243 = vcmp.eq.f32.partialorder %v1235, %v63
    %vm1244 = vcmp.eq.f32.partialorder %v1235, %v67
    %vm1245 = vcmp.gt.s32.totalorder %v80, 36
    %vm1246 = vcmp.gt.s32.totalorder %v81, 36
    %vm1247 = vcmp.gt.s32.totalorder %v82, 36
    %vm1248 = vcmp.gt.s32.totalorder %v83, 36
    %vm1249 = vmand %vm1241, %vm1245
    %vm1250 = vmand %vm1242, %vm1246
    %vm1251 = vmand %vm1243, %vm1247
    %vm1252 = vmand %vm1244, %vm1248
    %vm1253 = vmor %vm1237, %vm1249
    %vm1254 = vmor %vm1238, %vm1250
    %vm1255 = vmor %vm1239, %vm1251
    %vm1256 = vmor %vm1240, %vm1252
    %v1257 = vsel %vm1253, 1, 0
    %v1258 = vsel %vm1254, 1, 0
    %v1259 = vsel %vm1255, 1, 0
    %v1260 = vsel %vm1256, 1, 0
    %v1261 = vadd.s32 %v1229, %v1257
    %v1262 = vadd.s32 %v1230, %v1258
    %v1263 = vadd.s32 %v1231, %v1259
    %v1264 = vadd.s32 %v1232, %v1260
    %1265 = vset.pattern.permute.xlu0 37
    %1266 = vperm.xlu0 %1265, %v50
    %v1267 = vpop.permute.xlu0 %1266
    %vm1269 = vcmp.lt.f32.partialorder %v1267, %v55
    %vm1270 = vcmp.lt.f32.partialorder %v1267, %v59
    %vm1271 = vcmp.lt.f32.partialorder %v1267, %v63
    %vm1272 = vcmp.lt.f32.partialorder %v1267, %v67
    %vm1273 = vcmp.eq.f32.partialorder %v1267, %v55
    %vm1274 = vcmp.eq.f32.partialorder %v1267, %v59
    %vm1275 = vcmp.eq.f32.partialorder %v1267, %v63
    %vm1276 = vcmp.eq.f32.partialorder %v1267, %v67
    %vm1277 = vcmp.gt.s32.totalorder %v80, 37
    %vm1278 = vcmp.gt.s32.totalorder %v81, 37
    %vm1279 = vcmp.gt.s32.totalorder %v82, 37
    %vm1280 = vcmp.gt.s32.totalorder %v83, 37
    %vm1281 = vmand %vm1273, %vm1277
    %vm1282 = vmand %vm1274, %vm1278
    %vm1283 = vmand %vm1275, %vm1279
    %vm1284 = vmand %vm1276, %vm1280
    %vm1285 = vmor %vm1269, %vm1281
    %vm1286 = vmor %vm1270, %vm1282
    %vm1287 = vmor %vm1271, %vm1283
    %vm1288 = vmor %vm1272, %vm1284
    %v1289 = vsel %vm1285, 1, 0
    %v1290 = vsel %vm1286, 1, 0
    %v1291 = vsel %vm1287, 1, 0
    %v1292 = vsel %vm1288, 1, 0
    %v1293 = vadd.s32 %v1261, %v1289
    %v1294 = vadd.s32 %v1262, %v1290
    %v1295 = vadd.s32 %v1263, %v1291
    %v1296 = vadd.s32 %v1264, %v1292
    %1297 = vset.pattern.permute.xlu0 38
    %1298 = vperm.xlu0 %1297, %v50
    %v1299 = vpop.permute.xlu0 %1298
    %vm1301 = vcmp.lt.f32.partialorder %v1299, %v55
    %vm1302 = vcmp.lt.f32.partialorder %v1299, %v59
    %vm1303 = vcmp.lt.f32.partialorder %v1299, %v63
    %vm1304 = vcmp.lt.f32.partialorder %v1299, %v67
    %vm1305 = vcmp.eq.f32.partialorder %v1299, %v55
    %vm1306 = vcmp.eq.f32.partialorder %v1299, %v59
    %vm1307 = vcmp.eq.f32.partialorder %v1299, %v63
    %vm1308 = vcmp.eq.f32.partialorder %v1299, %v67
    %vm1309 = vcmp.gt.s32.totalorder %v80, 38
    %vm1310 = vcmp.gt.s32.totalorder %v81, 38
    %vm1311 = vcmp.gt.s32.totalorder %v82, 38
    %vm1312 = vcmp.gt.s32.totalorder %v83, 38
    %vm1313 = vmand %vm1305, %vm1309
    %vm1314 = vmand %vm1306, %vm1310
    %vm1315 = vmand %vm1307, %vm1311
    %vm1316 = vmand %vm1308, %vm1312
    %vm1317 = vmor %vm1301, %vm1313
    %vm1318 = vmor %vm1302, %vm1314
    %vm1319 = vmor %vm1303, %vm1315
    %vm1320 = vmor %vm1304, %vm1316
    %v1321 = vsel %vm1317, 1, 0
    %v1322 = vsel %vm1318, 1, 0
    %v1323 = vsel %vm1319, 1, 0
    %v1324 = vsel %vm1320, 1, 0
    %v1325 = vadd.s32 %v1293, %v1321
    %v1326 = vadd.s32 %v1294, %v1322
    %v1327 = vadd.s32 %v1295, %v1323
    %v1328 = vadd.s32 %v1296, %v1324
    %1329 = vset.pattern.permute.xlu0 39
    %1330 = vperm.xlu0 %1329, %v50
    %v1331 = vpop.permute.xlu0 %1330
    %vm1333 = vcmp.lt.f32.partialorder %v1331, %v55
    %vm1334 = vcmp.lt.f32.partialorder %v1331, %v59
    %vm1335 = vcmp.lt.f32.partialorder %v1331, %v63
    %vm1336 = vcmp.lt.f32.partialorder %v1331, %v67
    %vm1337 = vcmp.eq.f32.partialorder %v1331, %v55
    %vm1338 = vcmp.eq.f32.partialorder %v1331, %v59
    %vm1339 = vcmp.eq.f32.partialorder %v1331, %v63
    %vm1340 = vcmp.eq.f32.partialorder %v1331, %v67
    %vm1341 = vcmp.gt.s32.totalorder %v80, 39
    %vm1342 = vcmp.gt.s32.totalorder %v81, 39
    %vm1343 = vcmp.gt.s32.totalorder %v82, 39
    %vm1344 = vcmp.gt.s32.totalorder %v83, 39
    %vm1345 = vmand %vm1337, %vm1341
    %vm1346 = vmand %vm1338, %vm1342
    %vm1347 = vmand %vm1339, %vm1343
    %vm1348 = vmand %vm1340, %vm1344
    %vm1349 = vmor %vm1333, %vm1345
    %vm1350 = vmor %vm1334, %vm1346
    %vm1351 = vmor %vm1335, %vm1347
    %vm1352 = vmor %vm1336, %vm1348
    %v1353 = vsel %vm1349, 1, 0
    %v1354 = vsel %vm1350, 1, 0
    %v1355 = vsel %vm1351, 1, 0
    %v1356 = vsel %vm1352, 1, 0
    %v1357 = vadd.s32 %v1325, %v1353
    %v1358 = vadd.s32 %v1326, %v1354
    %v1359 = vadd.s32 %v1327, %v1355
    %v1360 = vadd.s32 %v1328, %v1356
    %1361 = vset.pattern.permute.xlu0 40
    %1362 = vperm.xlu0 %1361, %v50
    %v1363 = vpop.permute.xlu0 %1362
    %vm1365 = vcmp.lt.f32.partialorder %v1363, %v55
    %vm1366 = vcmp.lt.f32.partialorder %v1363, %v59
    %vm1367 = vcmp.lt.f32.partialorder %v1363, %v63
    %vm1368 = vcmp.lt.f32.partialorder %v1363, %v67
    %vm1369 = vcmp.eq.f32.partialorder %v1363, %v55
    %vm1370 = vcmp.eq.f32.partialorder %v1363, %v59
    %vm1371 = vcmp.eq.f32.partialorder %v1363, %v63
    %vm1372 = vcmp.eq.f32.partialorder %v1363, %v67
    %vm1373 = vcmp.gt.s32.totalorder %v80, 40
    %vm1374 = vcmp.gt.s32.totalorder %v81, 40
    %vm1375 = vcmp.gt.s32.totalorder %v82, 40
    %vm1376 = vcmp.gt.s32.totalorder %v83, 40
    %vm1377 = vmand %vm1369, %vm1373
    %vm1378 = vmand %vm1370, %vm1374
    %vm1379 = vmand %vm1371, %vm1375
    %vm1380 = vmand %vm1372, %vm1376
    %vm1381 = vmor %vm1365, %vm1377
    %vm1382 = vmor %vm1366, %vm1378
    %vm1383 = vmor %vm1367, %vm1379
    %vm1384 = vmor %vm1368, %vm1380
    %v1385 = vsel %vm1381, 1, 0
    %v1386 = vsel %vm1382, 1, 0
    %v1387 = vsel %vm1383, 1, 0
    %v1388 = vsel %vm1384, 1, 0
    %v1389 = vadd.s32 %v1357, %v1385
    %v1390 = vadd.s32 %v1358, %v1386
    %v1391 = vadd.s32 %v1359, %v1387
    %v1392 = vadd.s32 %v1360, %v1388
    %1393 = vset.pattern.permute.xlu0 41
    %1394 = vperm.xlu0 %1393, %v50
    %v1395 = vpop.permute.xlu0 %1394
    %vm1397 = vcmp.lt.f32.partialorder %v1395, %v55
    %vm1398 = vcmp.lt.f32.partialorder %v1395, %v59
    %vm1399 = vcmp.lt.f32.partialorder %v1395, %v63
    %vm1400 = vcmp.lt.f32.partialorder %v1395, %v67
    %vm1401 = vcmp.eq.f32.partialorder %v1395, %v55
    %vm1402 = vcmp.eq.f32.partialorder %v1395, %v59
    %vm1403 = vcmp.eq.f32.partialorder %v1395, %v63
    %vm1404 = vcmp.eq.f32.partialorder %v1395, %v67
    %vm1405 = vcmp.gt.s32.totalorder %v80, 41
    %vm1406 = vcmp.gt.s32.totalorder %v81, 41
    %vm1407 = vcmp.gt.s32.totalorder %v82, 41
    %vm1408 = vcmp.gt.s32.totalorder %v83, 41
    %vm1409 = vmand %vm1401, %vm1405
    %vm1410 = vmand %vm1402, %vm1406
    %vm1411 = vmand %vm1403, %vm1407
    %vm1412 = vmand %vm1404, %vm1408
    %vm1413 = vmor %vm1397, %vm1409
    %vm1414 = vmor %vm1398, %vm1410
    %vm1415 = vmor %vm1399, %vm1411
    %vm1416 = vmor %vm1400, %vm1412
    %v1417 = vsel %vm1413, 1, 0
    %v1418 = vsel %vm1414, 1, 0
    %v1419 = vsel %vm1415, 1, 0
    %v1420 = vsel %vm1416, 1, 0
    %v1421 = vadd.s32 %v1389, %v1417
    %v1422 = vadd.s32 %v1390, %v1418
    %v1423 = vadd.s32 %v1391, %v1419
    %v1424 = vadd.s32 %v1392, %v1420
    %1425 = vset.pattern.permute.xlu0 42
    %1426 = vperm.xlu0 %1425, %v50
    %v1427 = vpop.permute.xlu0 %1426
    %vm1429 = vcmp.lt.f32.partialorder %v1427, %v55
    %vm1430 = vcmp.lt.f32.partialorder %v1427, %v59
    %vm1431 = vcmp.lt.f32.partialorder %v1427, %v63
    %vm1432 = vcmp.lt.f32.partialorder %v1427, %v67
    %vm1433 = vcmp.eq.f32.partialorder %v1427, %v55
    %vm1434 = vcmp.eq.f32.partialorder %v1427, %v59
    %vm1435 = vcmp.eq.f32.partialorder %v1427, %v63
    %vm1436 = vcmp.eq.f32.partialorder %v1427, %v67
    %vm1437 = vcmp.gt.s32.totalorder %v80, 42
    %vm1438 = vcmp.gt.s32.totalorder %v81, 42
    %vm1439 = vcmp.gt.s32.totalorder %v82, 42
    %vm1440 = vcmp.gt.s32.totalorder %v83, 42
    %vm1441 = vmand %vm1433, %vm1437
    %vm1442 = vmand %vm1434, %vm1438
    %vm1443 = vmand %vm1435, %vm1439
    %vm1444 = vmand %vm1436, %vm1440
    %vm1445 = vmor %vm1429, %vm1441
    %vm1446 = vmor %vm1430, %vm1442
    %vm1447 = vmor %vm1431, %vm1443
    %vm1448 = vmor %vm1432, %vm1444
    %v1449 = vsel %vm1445, 1, 0
    %v1450 = vsel %vm1446, 1, 0
    %v1451 = vsel %vm1447, 1, 0
    %v1452 = vsel %vm1448, 1, 0
    %v1453 = vadd.s32 %v1421, %v1449
    %v1454 = vadd.s32 %v1422, %v1450
    %v1455 = vadd.s32 %v1423, %v1451
    %v1456 = vadd.s32 %v1424, %v1452
    %1457 = vset.pattern.permute.xlu0 43
    %1458 = vperm.xlu0 %1457, %v50
    %v1459 = vpop.permute.xlu0 %1458
    %vm1461 = vcmp.lt.f32.partialorder %v1459, %v55
    %vm1462 = vcmp.lt.f32.partialorder %v1459, %v59
    %vm1463 = vcmp.lt.f32.partialorder %v1459, %v63
    %vm1464 = vcmp.lt.f32.partialorder %v1459, %v67
    %vm1465 = vcmp.eq.f32.partialorder %v1459, %v55
    %vm1466 = vcmp.eq.f32.partialorder %v1459, %v59
    %vm1467 = vcmp.eq.f32.partialorder %v1459, %v63
    %vm1468 = vcmp.eq.f32.partialorder %v1459, %v67
    %vm1469 = vcmp.gt.s32.totalorder %v80, 43
    %vm1470 = vcmp.gt.s32.totalorder %v81, 43
    %vm1471 = vcmp.gt.s32.totalorder %v82, 43
    %vm1472 = vcmp.gt.s32.totalorder %v83, 43
    %vm1473 = vmand %vm1465, %vm1469
    %vm1474 = vmand %vm1466, %vm1470
    %vm1475 = vmand %vm1467, %vm1471
    %vm1476 = vmand %vm1468, %vm1472
    %vm1477 = vmor %vm1461, %vm1473
    %vm1478 = vmor %vm1462, %vm1474
    %vm1479 = vmor %vm1463, %vm1475
    %vm1480 = vmor %vm1464, %vm1476
    %v1481 = vsel %vm1477, 1, 0
    %v1482 = vsel %vm1478, 1, 0
    %v1483 = vsel %vm1479, 1, 0
    %v1484 = vsel %vm1480, 1, 0
    %v1485 = vadd.s32 %v1453, %v1481
    %v1486 = vadd.s32 %v1454, %v1482
    %v1487 = vadd.s32 %v1455, %v1483
    %v1488 = vadd.s32 %v1456, %v1484
    %1489 = vset.pattern.permute.xlu0 44
    %1490 = vperm.xlu0 %1489, %v50
    %v1491 = vpop.permute.xlu0 %1490
    %vm1493 = vcmp.lt.f32.partialorder %v1491, %v55
    %vm1494 = vcmp.lt.f32.partialorder %v1491, %v59
    %vm1495 = vcmp.lt.f32.partialorder %v1491, %v63
    %vm1496 = vcmp.lt.f32.partialorder %v1491, %v67
    %vm1497 = vcmp.eq.f32.partialorder %v1491, %v55
    %vm1498 = vcmp.eq.f32.partialorder %v1491, %v59
    %vm1499 = vcmp.eq.f32.partialorder %v1491, %v63
    %vm1500 = vcmp.eq.f32.partialorder %v1491, %v67
    %vm1501 = vcmp.gt.s32.totalorder %v80, 44
    %vm1502 = vcmp.gt.s32.totalorder %v81, 44
    %vm1503 = vcmp.gt.s32.totalorder %v82, 44
    %vm1504 = vcmp.gt.s32.totalorder %v83, 44
    %vm1505 = vmand %vm1497, %vm1501
    %vm1506 = vmand %vm1498, %vm1502
    %vm1507 = vmand %vm1499, %vm1503
    %vm1508 = vmand %vm1500, %vm1504
    %vm1509 = vmor %vm1493, %vm1505
    %vm1510 = vmor %vm1494, %vm1506
    %vm1511 = vmor %vm1495, %vm1507
    %vm1512 = vmor %vm1496, %vm1508
    %v1513 = vsel %vm1509, 1, 0
    %v1514 = vsel %vm1510, 1, 0
    %v1515 = vsel %vm1511, 1, 0
    %v1516 = vsel %vm1512, 1, 0
    %v1517 = vadd.s32 %v1485, %v1513
    %v1518 = vadd.s32 %v1486, %v1514
    %v1519 = vadd.s32 %v1487, %v1515
    %v1520 = vadd.s32 %v1488, %v1516
    %1521 = vset.pattern.permute.xlu0 45
    %1522 = vperm.xlu0 %1521, %v50
    %v1523 = vpop.permute.xlu0 %1522
    %vm1525 = vcmp.lt.f32.partialorder %v1523, %v55
    %vm1526 = vcmp.lt.f32.partialorder %v1523, %v59
    %vm1527 = vcmp.lt.f32.partialorder %v1523, %v63
    %vm1528 = vcmp.lt.f32.partialorder %v1523, %v67
    %vm1529 = vcmp.eq.f32.partialorder %v1523, %v55
    %vm1530 = vcmp.eq.f32.partialorder %v1523, %v59
    %vm1531 = vcmp.eq.f32.partialorder %v1523, %v63
    %vm1532 = vcmp.eq.f32.partialorder %v1523, %v67
    %vm1533 = vcmp.gt.s32.totalorder %v80, 45
    %vm1534 = vcmp.gt.s32.totalorder %v81, 45
    %vm1535 = vcmp.gt.s32.totalorder %v82, 45
    %vm1536 = vcmp.gt.s32.totalorder %v83, 45
    %vm1537 = vmand %vm1529, %vm1533
    %vm1538 = vmand %vm1530, %vm1534
    %vm1539 = vmand %vm1531, %vm1535
    %vm1540 = vmand %vm1532, %vm1536
    %vm1541 = vmor %vm1525, %vm1537
    %vm1542 = vmor %vm1526, %vm1538
    %vm1543 = vmor %vm1527, %vm1539
    %vm1544 = vmor %vm1528, %vm1540
    %v1545 = vsel %vm1541, 1, 0
    %v1546 = vsel %vm1542, 1, 0
    %v1547 = vsel %vm1543, 1, 0
    %v1548 = vsel %vm1544, 1, 0
    %v1549 = vadd.s32 %v1517, %v1545
    %v1550 = vadd.s32 %v1518, %v1546
    %v1551 = vadd.s32 %v1519, %v1547
    %v1552 = vadd.s32 %v1520, %v1548
    %1553 = vset.pattern.permute.xlu0 46
    %1554 = vperm.xlu0 %1553, %v50
    %v1555 = vpop.permute.xlu0 %1554
    %vm1557 = vcmp.lt.f32.partialorder %v1555, %v55
    %vm1558 = vcmp.lt.f32.partialorder %v1555, %v59
    %vm1559 = vcmp.lt.f32.partialorder %v1555, %v63
    %vm1560 = vcmp.lt.f32.partialorder %v1555, %v67
    %vm1561 = vcmp.eq.f32.partialorder %v1555, %v55
    %vm1562 = vcmp.eq.f32.partialorder %v1555, %v59
    %vm1563 = vcmp.eq.f32.partialorder %v1555, %v63
    %vm1564 = vcmp.eq.f32.partialorder %v1555, %v67
    %vm1565 = vcmp.gt.s32.totalorder %v80, 46
    %vm1566 = vcmp.gt.s32.totalorder %v81, 46
    %vm1567 = vcmp.gt.s32.totalorder %v82, 46
    %vm1568 = vcmp.gt.s32.totalorder %v83, 46
    %vm1569 = vmand %vm1561, %vm1565
    %vm1570 = vmand %vm1562, %vm1566
    %vm1571 = vmand %vm1563, %vm1567
    %vm1572 = vmand %vm1564, %vm1568
    %vm1573 = vmor %vm1557, %vm1569
    %vm1574 = vmor %vm1558, %vm1570
    %vm1575 = vmor %vm1559, %vm1571
    %vm1576 = vmor %vm1560, %vm1572
    %v1577 = vsel %vm1573, 1, 0
    %v1578 = vsel %vm1574, 1, 0
    %v1579 = vsel %vm1575, 1, 0
    %v1580 = vsel %vm1576, 1, 0
    %v1581 = vadd.s32 %v1549, %v1577
    %v1582 = vadd.s32 %v1550, %v1578
    %v1583 = vadd.s32 %v1551, %v1579
    %v1584 = vadd.s32 %v1552, %v1580
    %1585 = vset.pattern.permute.xlu0 47
    %1586 = vperm.xlu0 %1585, %v50
    %v1587 = vpop.permute.xlu0 %1586
    %vm1589 = vcmp.lt.f32.partialorder %v1587, %v55
    %vm1590 = vcmp.lt.f32.partialorder %v1587, %v59
    %vm1591 = vcmp.lt.f32.partialorder %v1587, %v63
    %vm1592 = vcmp.lt.f32.partialorder %v1587, %v67
    %vm1593 = vcmp.eq.f32.partialorder %v1587, %v55
    %vm1594 = vcmp.eq.f32.partialorder %v1587, %v59
    %vm1595 = vcmp.eq.f32.partialorder %v1587, %v63
    %vm1596 = vcmp.eq.f32.partialorder %v1587, %v67
    %vm1597 = vcmp.gt.s32.totalorder %v80, 47
    %vm1598 = vcmp.gt.s32.totalorder %v81, 47
    %vm1599 = vcmp.gt.s32.totalorder %v82, 47
    %vm1600 = vcmp.gt.s32.totalorder %v83, 47
    %vm1601 = vmand %vm1593, %vm1597
    %vm1602 = vmand %vm1594, %vm1598
    %vm1603 = vmand %vm1595, %vm1599
    %vm1604 = vmand %vm1596, %vm1600
    %vm1605 = vmor %vm1589, %vm1601
    %vm1606 = vmor %vm1590, %vm1602
    %vm1607 = vmor %vm1591, %vm1603
    %vm1608 = vmor %vm1592, %vm1604
    %v1609 = vsel %vm1605, 1, 0
    %v1610 = vsel %vm1606, 1, 0
    %v1611 = vsel %vm1607, 1, 0
    %v1612 = vsel %vm1608, 1, 0
    %v1613 = vadd.s32 %v1581, %v1609
    %v1614 = vadd.s32 %v1582, %v1610
    %v1615 = vadd.s32 %v1583, %v1611
    %v1616 = vadd.s32 %v1584, %v1612
    %1617 = vset.pattern.permute.xlu0 48
    %1618 = vperm.xlu0 %1617, %v50
    %v1619 = vpop.permute.xlu0 %1618
    %vm1621 = vcmp.lt.f32.partialorder %v1619, %v55
    %vm1622 = vcmp.lt.f32.partialorder %v1619, %v59
    %vm1623 = vcmp.lt.f32.partialorder %v1619, %v63
    %vm1624 = vcmp.lt.f32.partialorder %v1619, %v67
    %vm1625 = vcmp.eq.f32.partialorder %v1619, %v55
    %vm1626 = vcmp.eq.f32.partialorder %v1619, %v59
    %vm1627 = vcmp.eq.f32.partialorder %v1619, %v63
    %vm1628 = vcmp.eq.f32.partialorder %v1619, %v67
    %vm1629 = vcmp.gt.s32.totalorder %v80, 48
    %vm1630 = vcmp.gt.s32.totalorder %v81, 48
    %vm1631 = vcmp.gt.s32.totalorder %v82, 48
    %vm1632 = vcmp.gt.s32.totalorder %v83, 48
    %vm1633 = vmand %vm1625, %vm1629
    %vm1634 = vmand %vm1626, %vm1630
    %vm1635 = vmand %vm1627, %vm1631
    %vm1636 = vmand %vm1628, %vm1632
    %vm1637 = vmor %vm1621, %vm1633
    %vm1638 = vmor %vm1622, %vm1634
    %vm1639 = vmor %vm1623, %vm1635
    %vm1640 = vmor %vm1624, %vm1636
    %v1641 = vsel %vm1637, 1, 0
    %v1642 = vsel %vm1638, 1, 0
    %v1643 = vsel %vm1639, 1, 0
    %v1644 = vsel %vm1640, 1, 0
    %v1645 = vadd.s32 %v1613, %v1641
    %v1646 = vadd.s32 %v1614, %v1642
    %v1647 = vadd.s32 %v1615, %v1643
    %v1648 = vadd.s32 %v1616, %v1644
    %1649 = vset.pattern.permute.xlu0 49
    %1650 = vperm.xlu0 %1649, %v50
    %v1651 = vpop.permute.xlu0 %1650
    %vm1653 = vcmp.lt.f32.partialorder %v1651, %v55
    %vm1654 = vcmp.lt.f32.partialorder %v1651, %v59
    %vm1655 = vcmp.lt.f32.partialorder %v1651, %v63
    %vm1656 = vcmp.lt.f32.partialorder %v1651, %v67
    %vm1657 = vcmp.eq.f32.partialorder %v1651, %v55
    %vm1658 = vcmp.eq.f32.partialorder %v1651, %v59
    %vm1659 = vcmp.eq.f32.partialorder %v1651, %v63
    %vm1660 = vcmp.eq.f32.partialorder %v1651, %v67
    %vm1661 = vcmp.gt.s32.totalorder %v80, 49
    %vm1662 = vcmp.gt.s32.totalorder %v81, 49
    %vm1663 = vcmp.gt.s32.totalorder %v82, 49
    %vm1664 = vcmp.gt.s32.totalorder %v83, 49
    %vm1665 = vmand %vm1657, %vm1661
    %vm1666 = vmand %vm1658, %vm1662
    %vm1667 = vmand %vm1659, %vm1663
    %vm1668 = vmand %vm1660, %vm1664
    %vm1669 = vmor %vm1653, %vm1665
    %vm1670 = vmor %vm1654, %vm1666
    %vm1671 = vmor %vm1655, %vm1667
    %vm1672 = vmor %vm1656, %vm1668
    %v1673 = vsel %vm1669, 1, 0
    %v1674 = vsel %vm1670, 1, 0
    %v1675 = vsel %vm1671, 1, 0
    %v1676 = vsel %vm1672, 1, 0
    %v1677 = vadd.s32 %v1645, %v1673
    %v1678 = vadd.s32 %v1646, %v1674
    %v1679 = vadd.s32 %v1647, %v1675
    %v1680 = vadd.s32 %v1648, %v1676
    %1681 = vset.pattern.permute.xlu0 50
    %1682 = vperm.xlu0 %1681, %v50
    %v1683 = vpop.permute.xlu0 %1682
    %vm1685 = vcmp.lt.f32.partialorder %v1683, %v55
    %vm1686 = vcmp.lt.f32.partialorder %v1683, %v59
    %vm1687 = vcmp.lt.f32.partialorder %v1683, %v63
    %vm1688 = vcmp.lt.f32.partialorder %v1683, %v67
    %vm1689 = vcmp.eq.f32.partialorder %v1683, %v55
    %vm1690 = vcmp.eq.f32.partialorder %v1683, %v59
    %vm1691 = vcmp.eq.f32.partialorder %v1683, %v63
    %vm1692 = vcmp.eq.f32.partialorder %v1683, %v67
    %vm1693 = vcmp.gt.s32.totalorder %v80, 50
    %vm1694 = vcmp.gt.s32.totalorder %v81, 50
    %vm1695 = vcmp.gt.s32.totalorder %v82, 50
    %vm1696 = vcmp.gt.s32.totalorder %v83, 50
    %vm1697 = vmand %vm1689, %vm1693
    %vm1698 = vmand %vm1690, %vm1694
    %vm1699 = vmand %vm1691, %vm1695
    %vm1700 = vmand %vm1692, %vm1696
    %vm1701 = vmor %vm1685, %vm1697
    %vm1702 = vmor %vm1686, %vm1698
    %vm1703 = vmor %vm1687, %vm1699
    %vm1704 = vmor %vm1688, %vm1700
    %v1705 = vsel %vm1701, 1, 0
    %v1706 = vsel %vm1702, 1, 0
    %v1707 = vsel %vm1703, 1, 0
    %v1708 = vsel %vm1704, 1, 0
    %v1709 = vadd.s32 %v1677, %v1705
    %v1710 = vadd.s32 %v1678, %v1706
    %v1711 = vadd.s32 %v1679, %v1707
    %v1712 = vadd.s32 %v1680, %v1708
    %1713 = vset.pattern.permute.xlu0 51
    %1714 = vperm.xlu0 %1713, %v50
    %v1715 = vpop.permute.xlu0 %1714
    %vm1717 = vcmp.lt.f32.partialorder %v1715, %v55
    %vm1718 = vcmp.lt.f32.partialorder %v1715, %v59
    %vm1719 = vcmp.lt.f32.partialorder %v1715, %v63
    %vm1720 = vcmp.lt.f32.partialorder %v1715, %v67
    %vm1721 = vcmp.eq.f32.partialorder %v1715, %v55
    %vm1722 = vcmp.eq.f32.partialorder %v1715, %v59
    %vm1723 = vcmp.eq.f32.partialorder %v1715, %v63
    %vm1724 = vcmp.eq.f32.partialorder %v1715, %v67
    %vm1725 = vcmp.gt.s32.totalorder %v80, 51
    %vm1726 = vcmp.gt.s32.totalorder %v81, 51
    %vm1727 = vcmp.gt.s32.totalorder %v82, 51
    %vm1728 = vcmp.gt.s32.totalorder %v83, 51
    %vm1729 = vmand %vm1721, %vm1725
    %vm1730 = vmand %vm1722, %vm1726
    %vm1731 = vmand %vm1723, %vm1727
    %vm1732 = vmand %vm1724, %vm1728
    %vm1733 = vmor %vm1717, %vm1729
    %vm1734 = vmor %vm1718, %vm1730
    %vm1735 = vmor %vm1719, %vm1731
    %vm1736 = vmor %vm1720, %vm1732
    %v1737 = vsel %vm1733, 1, 0
    %v1738 = vsel %vm1734, 1, 0
    %v1739 = vsel %vm1735, 1, 0
    %v1740 = vsel %vm1736, 1, 0
    %v1741 = vadd.s32 %v1709, %v1737
    %v1742 = vadd.s32 %v1710, %v1738
    %v1743 = vadd.s32 %v1711, %v1739
    %v1744 = vadd.s32 %v1712, %v1740
    %1745 = vset.pattern.permute.xlu0 52
    %1746 = vperm.xlu0 %1745, %v50
    %v1747 = vpop.permute.xlu0 %1746
    %vm1749 = vcmp.lt.f32.partialorder %v1747, %v55
    %vm1750 = vcmp.lt.f32.partialorder %v1747, %v59
    %vm1751 = vcmp.lt.f32.partialorder %v1747, %v63
    %vm1752 = vcmp.lt.f32.partialorder %v1747, %v67
    %vm1753 = vcmp.eq.f32.partialorder %v1747, %v55
    %vm1754 = vcmp.eq.f32.partialorder %v1747, %v59
    %vm1755 = vcmp.eq.f32.partialorder %v1747, %v63
    %vm1756 = vcmp.eq.f32.partialorder %v1747, %v67
    %vm1757 = vcmp.gt.s32.totalorder %v80, 52
    %vm1758 = vcmp.gt.s32.totalorder %v81, 52
    %vm1759 = vcmp.gt.s32.totalorder %v82, 52
    %vm1760 = vcmp.gt.s32.totalorder %v83, 52
    %vm1761 = vmand %vm1753, %vm1757
    %vm1762 = vmand %vm1754, %vm1758
    %vm1763 = vmand %vm1755, %vm1759
    %vm1764 = vmand %vm1756, %vm1760
    %vm1765 = vmor %vm1749, %vm1761
    %vm1766 = vmor %vm1750, %vm1762
    %vm1767 = vmor %vm1751, %vm1763
    %vm1768 = vmor %vm1752, %vm1764
    %v1769 = vsel %vm1765, 1, 0
    %v1770 = vsel %vm1766, 1, 0
    %v1771 = vsel %vm1767, 1, 0
    %v1772 = vsel %vm1768, 1, 0
    %v1773 = vadd.s32 %v1741, %v1769
    %v1774 = vadd.s32 %v1742, %v1770
    %v1775 = vadd.s32 %v1743, %v1771
    %v1776 = vadd.s32 %v1744, %v1772
    %1777 = vset.pattern.permute.xlu0 53
    %1778 = vperm.xlu0 %1777, %v50
    %v1779 = vpop.permute.xlu0 %1778
    %vm1781 = vcmp.lt.f32.partialorder %v1779, %v55
    %vm1782 = vcmp.lt.f32.partialorder %v1779, %v59
    %vm1783 = vcmp.lt.f32.partialorder %v1779, %v63
    %vm1784 = vcmp.lt.f32.partialorder %v1779, %v67
    %vm1785 = vcmp.eq.f32.partialorder %v1779, %v55
    %vm1786 = vcmp.eq.f32.partialorder %v1779, %v59
    %vm1787 = vcmp.eq.f32.partialorder %v1779, %v63
    %vm1788 = vcmp.eq.f32.partialorder %v1779, %v67
    %vm1789 = vcmp.gt.s32.totalorder %v80, 53
    %vm1790 = vcmp.gt.s32.totalorder %v81, 53
    %vm1791 = vcmp.gt.s32.totalorder %v82, 53
    %vm1792 = vcmp.gt.s32.totalorder %v83, 53
    %vm1793 = vmand %vm1785, %vm1789
    %vm1794 = vmand %vm1786, %vm1790
    %vm1795 = vmand %vm1787, %vm1791
    %vm1796 = vmand %vm1788, %vm1792
    %vm1797 = vmor %vm1781, %vm1793
    %vm1798 = vmor %vm1782, %vm1794
    %vm1799 = vmor %vm1783, %vm1795
    %vm1800 = vmor %vm1784, %vm1796
    %v1801 = vsel %vm1797, 1, 0
    %v1802 = vsel %vm1798, 1, 0
    %v1803 = vsel %vm1799, 1, 0
    %v1804 = vsel %vm1800, 1, 0
    %v1805 = vadd.s32 %v1773, %v1801
    %v1806 = vadd.s32 %v1774, %v1802
    %v1807 = vadd.s32 %v1775, %v1803
    %v1808 = vadd.s32 %v1776, %v1804
    %1809 = vset.pattern.permute.xlu0 54
    %1810 = vperm.xlu0 %1809, %v50
    %v1811 = vpop.permute.xlu0 %1810
    %vm1813 = vcmp.lt.f32.partialorder %v1811, %v55
    %vm1814 = vcmp.lt.f32.partialorder %v1811, %v59
    %vm1815 = vcmp.lt.f32.partialorder %v1811, %v63
    %vm1816 = vcmp.lt.f32.partialorder %v1811, %v67
    %vm1817 = vcmp.eq.f32.partialorder %v1811, %v55
    %vm1818 = vcmp.eq.f32.partialorder %v1811, %v59
    %vm1819 = vcmp.eq.f32.partialorder %v1811, %v63
    %vm1820 = vcmp.eq.f32.partialorder %v1811, %v67
    %vm1821 = vcmp.gt.s32.totalorder %v80, 54
    %vm1822 = vcmp.gt.s32.totalorder %v81, 54
    %vm1823 = vcmp.gt.s32.totalorder %v82, 54
    %vm1824 = vcmp.gt.s32.totalorder %v83, 54
    %vm1825 = vmand %vm1817, %vm1821
    %vm1826 = vmand %vm1818, %vm1822
    %vm1827 = vmand %vm1819, %vm1823
    %vm1828 = vmand %vm1820, %vm1824
    %vm1829 = vmor %vm1813, %vm1825
    %vm1830 = vmor %vm1814, %vm1826
    %vm1831 = vmor %vm1815, %vm1827
    %vm1832 = vmor %vm1816, %vm1828
    %v1833 = vsel %vm1829, 1, 0
    %v1834 = vsel %vm1830, 1, 0
    %v1835 = vsel %vm1831, 1, 0
    %v1836 = vsel %vm1832, 1, 0
    %v1837 = vadd.s32 %v1805, %v1833
    %v1838 = vadd.s32 %v1806, %v1834
    %v1839 = vadd.s32 %v1807, %v1835
    %v1840 = vadd.s32 %v1808, %v1836
    %1841 = vset.pattern.permute.xlu0 55
    %1842 = vperm.xlu0 %1841, %v50
    %v1843 = vpop.permute.xlu0 %1842
    %vm1845 = vcmp.lt.f32.partialorder %v1843, %v55
    %vm1846 = vcmp.lt.f32.partialorder %v1843, %v59
    %vm1847 = vcmp.lt.f32.partialorder %v1843, %v63
    %vm1848 = vcmp.lt.f32.partialorder %v1843, %v67
    %vm1849 = vcmp.eq.f32.partialorder %v1843, %v55
    %vm1850 = vcmp.eq.f32.partialorder %v1843, %v59
    %vm1851 = vcmp.eq.f32.partialorder %v1843, %v63
    %vm1852 = vcmp.eq.f32.partialorder %v1843, %v67
    %vm1853 = vcmp.gt.s32.totalorder %v80, 55
    %vm1854 = vcmp.gt.s32.totalorder %v81, 55
    %vm1855 = vcmp.gt.s32.totalorder %v82, 55
    %vm1856 = vcmp.gt.s32.totalorder %v83, 55
    %vm1857 = vmand %vm1849, %vm1853
    %vm1858 = vmand %vm1850, %vm1854
    %vm1859 = vmand %vm1851, %vm1855
    %vm1860 = vmand %vm1852, %vm1856
    %vm1861 = vmor %vm1845, %vm1857
    %vm1862 = vmor %vm1846, %vm1858
    %vm1863 = vmor %vm1847, %vm1859
    %vm1864 = vmor %vm1848, %vm1860
    %v1865 = vsel %vm1861, 1, 0
    %v1866 = vsel %vm1862, 1, 0
    %v1867 = vsel %vm1863, 1, 0
    %v1868 = vsel %vm1864, 1, 0
    %v1869 = vadd.s32 %v1837, %v1865
    %v1870 = vadd.s32 %v1838, %v1866
    %v1871 = vadd.s32 %v1839, %v1867
    %v1872 = vadd.s32 %v1840, %v1868
    %1873 = vset.pattern.permute.xlu0 56
    %1874 = vperm.xlu0 %1873, %v50
    %v1875 = vpop.permute.xlu0 %1874
    %vm1877 = vcmp.lt.f32.partialorder %v1875, %v55
    %vm1878 = vcmp.lt.f32.partialorder %v1875, %v59
    %vm1879 = vcmp.lt.f32.partialorder %v1875, %v63
    %vm1880 = vcmp.lt.f32.partialorder %v1875, %v67
    %vm1881 = vcmp.eq.f32.partialorder %v1875, %v55
    %vm1882 = vcmp.eq.f32.partialorder %v1875, %v59
    %vm1883 = vcmp.eq.f32.partialorder %v1875, %v63
    %vm1884 = vcmp.eq.f32.partialorder %v1875, %v67
    %vm1885 = vcmp.gt.s32.totalorder %v80, 56
    %vm1886 = vcmp.gt.s32.totalorder %v81, 56
    %vm1887 = vcmp.gt.s32.totalorder %v82, 56
    %vm1888 = vcmp.gt.s32.totalorder %v83, 56
    %vm1889 = vmand %vm1881, %vm1885
    %vm1890 = vmand %vm1882, %vm1886
    %vm1891 = vmand %vm1883, %vm1887
    %vm1892 = vmand %vm1884, %vm1888
    %vm1893 = vmor %vm1877, %vm1889
    %vm1894 = vmor %vm1878, %vm1890
    %vm1895 = vmor %vm1879, %vm1891
    %vm1896 = vmor %vm1880, %vm1892
    %v1897 = vsel %vm1893, 1, 0
    %v1898 = vsel %vm1894, 1, 0
    %v1899 = vsel %vm1895, 1, 0
    %v1900 = vsel %vm1896, 1, 0
    %v1901 = vadd.s32 %v1869, %v1897
    %v1902 = vadd.s32 %v1870, %v1898
    %v1903 = vadd.s32 %v1871, %v1899
    %v1904 = vadd.s32 %v1872, %v1900
    %1905 = vset.pattern.permute.xlu0 57
    %1906 = vperm.xlu0 %1905, %v50
    %v1907 = vpop.permute.xlu0 %1906
    %vm1909 = vcmp.lt.f32.partialorder %v1907, %v55
    %vm1910 = vcmp.lt.f32.partialorder %v1907, %v59
    %vm1911 = vcmp.lt.f32.partialorder %v1907, %v63
    %vm1912 = vcmp.lt.f32.partialorder %v1907, %v67
    %vm1913 = vcmp.eq.f32.partialorder %v1907, %v55
    %vm1914 = vcmp.eq.f32.partialorder %v1907, %v59
    %vm1915 = vcmp.eq.f32.partialorder %v1907, %v63
    %vm1916 = vcmp.eq.f32.partialorder %v1907, %v67
    %vm1917 = vcmp.gt.s32.totalorder %v80, 57
    %vm1918 = vcmp.gt.s32.totalorder %v81, 57
    %vm1919 = vcmp.gt.s32.totalorder %v82, 57
    %vm1920 = vcmp.gt.s32.totalorder %v83, 57
    %vm1921 = vmand %vm1913, %vm1917
    %vm1922 = vmand %vm1914, %vm1918
    %vm1923 = vmand %vm1915, %vm1919
    %vm1924 = vmand %vm1916, %vm1920
    %vm1925 = vmor %vm1909, %vm1921
    %vm1926 = vmor %vm1910, %vm1922
    %vm1927 = vmor %vm1911, %vm1923
    %vm1928 = vmor %vm1912, %vm1924
    %v1929 = vsel %vm1925, 1, 0
    %v1930 = vsel %vm1926, 1, 0
    %v1931 = vsel %vm1927, 1, 0
    %v1932 = vsel %vm1928, 1, 0
    %v1933 = vadd.s32 %v1901, %v1929
    %v1934 = vadd.s32 %v1902, %v1930
    %v1935 = vadd.s32 %v1903, %v1931
    %v1936 = vadd.s32 %v1904, %v1932
    %1937 = vset.pattern.permute.xlu0 58
    %1938 = vperm.xlu0 %1937, %v50
    %v1939 = vpop.permute.xlu0 %1938
    %vm1941 = vcmp.lt.f32.partialorder %v1939, %v55
    %vm1942 = vcmp.lt.f32.partialorder %v1939, %v59
    %vm1943 = vcmp.lt.f32.partialorder %v1939, %v63
    %vm1944 = vcmp.lt.f32.partialorder %v1939, %v67
    %vm1945 = vcmp.eq.f32.partialorder %v1939, %v55
    %vm1946 = vcmp.eq.f32.partialorder %v1939, %v59
    %vm1947 = vcmp.eq.f32.partialorder %v1939, %v63
    %vm1948 = vcmp.eq.f32.partialorder %v1939, %v67
    %vm1949 = vcmp.gt.s32.totalorder %v80, 58
    %vm1950 = vcmp.gt.s32.totalorder %v81, 58
    %vm1951 = vcmp.gt.s32.totalorder %v82, 58
    %vm1952 = vcmp.gt.s32.totalorder %v83, 58
    %vm1953 = vmand %vm1945, %vm1949
    %vm1954 = vmand %vm1946, %vm1950
    %vm1955 = vmand %vm1947, %vm1951
    %vm1956 = vmand %vm1948, %vm1952
    %vm1957 = vmor %vm1941, %vm1953
    %vm1958 = vmor %vm1942, %vm1954
    %vm1959 = vmor %vm1943, %vm1955
    %vm1960 = vmor %vm1944, %vm1956
    %v1961 = vsel %vm1957, 1, 0
    %v1962 = vsel %vm1958, 1, 0
    %v1963 = vsel %vm1959, 1, 0
    %v1964 = vsel %vm1960, 1, 0
    %v1965 = vadd.s32 %v1933, %v1961
    %v1966 = vadd.s32 %v1934, %v1962
    %v1967 = vadd.s32 %v1935, %v1963
    %v1968 = vadd.s32 %v1936, %v1964
    %1969 = vset.pattern.permute.xlu0 59
    %1970 = vperm.xlu0 %1969, %v50
    %v1971 = vpop.permute.xlu0 %1970
    %vm1973 = vcmp.lt.f32.partialorder %v1971, %v55
    %vm1974 = vcmp.lt.f32.partialorder %v1971, %v59
    %vm1975 = vcmp.lt.f32.partialorder %v1971, %v63
    %vm1976 = vcmp.lt.f32.partialorder %v1971, %v67
    %vm1977 = vcmp.eq.f32.partialorder %v1971, %v55
    %vm1978 = vcmp.eq.f32.partialorder %v1971, %v59
    %vm1979 = vcmp.eq.f32.partialorder %v1971, %v63
    %vm1980 = vcmp.eq.f32.partialorder %v1971, %v67
    %vm1981 = vcmp.gt.s32.totalorder %v80, 59
    %vm1982 = vcmp.gt.s32.totalorder %v81, 59
    %vm1983 = vcmp.gt.s32.totalorder %v82, 59
    %vm1984 = vcmp.gt.s32.totalorder %v83, 59
    %vm1985 = vmand %vm1977, %vm1981
    %vm1986 = vmand %vm1978, %vm1982
    %vm1987 = vmand %vm1979, %vm1983
    %vm1988 = vmand %vm1980, %vm1984
    %vm1989 = vmor %vm1973, %vm1985
    %vm1990 = vmor %vm1974, %vm1986
    %vm1991 = vmor %vm1975, %vm1987
    %vm1992 = vmor %vm1976, %vm1988
    %v1993 = vsel %vm1989, 1, 0
    %v1994 = vsel %vm1990, 1, 0
    %v1995 = vsel %vm1991, 1, 0
    %v1996 = vsel %vm1992, 1, 0
    %v1997 = vadd.s32 %v1965, %v1993
    %v1998 = vadd.s32 %v1966, %v1994
    %v1999 = vadd.s32 %v1967, %v1995
    %v2000 = vadd.s32 %v1968, %v1996
    %2001 = vset.pattern.permute.xlu0 60
    %2002 = vperm.xlu0 %2001, %v50
    %v2003 = vpop.permute.xlu0 %2002
    %vm2005 = vcmp.lt.f32.partialorder %v2003, %v55
    %vm2006 = vcmp.lt.f32.partialorder %v2003, %v59
    %vm2007 = vcmp.lt.f32.partialorder %v2003, %v63
    %vm2008 = vcmp.lt.f32.partialorder %v2003, %v67
    %vm2009 = vcmp.eq.f32.partialorder %v2003, %v55
    %vm2010 = vcmp.eq.f32.partialorder %v2003, %v59
    %vm2011 = vcmp.eq.f32.partialorder %v2003, %v63
    %vm2012 = vcmp.eq.f32.partialorder %v2003, %v67
    %vm2013 = vcmp.gt.s32.totalorder %v80, 60
    %vm2014 = vcmp.gt.s32.totalorder %v81, 60
    %vm2015 = vcmp.gt.s32.totalorder %v82, 60
    %vm2016 = vcmp.gt.s32.totalorder %v83, 60
    %vm2017 = vmand %vm2009, %vm2013
    %vm2018 = vmand %vm2010, %vm2014
    %vm2019 = vmand %vm2011, %vm2015
    %vm2020 = vmand %vm2012, %vm2016
    %vm2021 = vmor %vm2005, %vm2017
    %vm2022 = vmor %vm2006, %vm2018
    %vm2023 = vmor %vm2007, %vm2019
    %vm2024 = vmor %vm2008, %vm2020
    %v2025 = vsel %vm2021, 1, 0
    %v2026 = vsel %vm2022, 1, 0
    %v2027 = vsel %vm2023, 1, 0
    %v2028 = vsel %vm2024, 1, 0
    %v2029 = vadd.s32 %v1997, %v2025
    %v2030 = vadd.s32 %v1998, %v2026
    %v2031 = vadd.s32 %v1999, %v2027
    %v2032 = vadd.s32 %v2000, %v2028
    %2033 = vset.pattern.permute.xlu0 61
    %2034 = vperm.xlu0 %2033, %v50
    %v2035 = vpop.permute.xlu0 %2034
    %vm2037 = vcmp.lt.f32.partialorder %v2035, %v55
    %vm2038 = vcmp.lt.f32.partialorder %v2035, %v59
    %vm2039 = vcmp.lt.f32.partialorder %v2035, %v63
    %vm2040 = vcmp.lt.f32.partialorder %v2035, %v67
    %vm2041 = vcmp.eq.f32.partialorder %v2035, %v55
    %vm2042 = vcmp.eq.f32.partialorder %v2035, %v59
    %vm2043 = vcmp.eq.f32.partialorder %v2035, %v63
    %vm2044 = vcmp.eq.f32.partialorder %v2035, %v67
    %vm2045 = vcmp.gt.s32.totalorder %v80, 61
    %vm2046 = vcmp.gt.s32.totalorder %v81, 61
    %vm2047 = vcmp.gt.s32.totalorder %v82, 61
    %vm2048 = vcmp.gt.s32.totalorder %v83, 61
    %vm2049 = vmand %vm2041, %vm2045
    %vm2050 = vmand %vm2042, %vm2046
    %vm2051 = vmand %vm2043, %vm2047
    %vm2052 = vmand %vm2044, %vm2048
    %vm2053 = vmor %vm2037, %vm2049
    %vm2054 = vmor %vm2038, %vm2050
    %vm2055 = vmor %vm2039, %vm2051
    %vm2056 = vmor %vm2040, %vm2052
    %v2057 = vsel %vm2053, 1, 0
    %v2058 = vsel %vm2054, 1, 0
    %v2059 = vsel %vm2055, 1, 0
    %v2060 = vsel %vm2056, 1, 0
    %v2061 = vadd.s32 %v2029, %v2057
    %v2062 = vadd.s32 %v2030, %v2058
    %v2063 = vadd.s32 %v2031, %v2059
    %v2064 = vadd.s32 %v2032, %v2060
    %2065 = vset.pattern.permute.xlu0 62
    %2066 = vperm.xlu0 %2065, %v50
    %v2067 = vpop.permute.xlu0 %2066
    %vm2069 = vcmp.lt.f32.partialorder %v2067, %v55
    %vm2070 = vcmp.lt.f32.partialorder %v2067, %v59
    %vm2071 = vcmp.lt.f32.partialorder %v2067, %v63
    %vm2072 = vcmp.lt.f32.partialorder %v2067, %v67
    %vm2073 = vcmp.eq.f32.partialorder %v2067, %v55
    %vm2074 = vcmp.eq.f32.partialorder %v2067, %v59
    %vm2075 = vcmp.eq.f32.partialorder %v2067, %v63
    %vm2076 = vcmp.eq.f32.partialorder %v2067, %v67
    %vm2077 = vcmp.gt.s32.totalorder %v80, 62
    %vm2078 = vcmp.gt.s32.totalorder %v81, 62
    %vm2079 = vcmp.gt.s32.totalorder %v82, 62
    %vm2080 = vcmp.gt.s32.totalorder %v83, 62
    %vm2081 = vmand %vm2073, %vm2077
    %vm2082 = vmand %vm2074, %vm2078
    %vm2083 = vmand %vm2075, %vm2079
    %vm2084 = vmand %vm2076, %vm2080
    %vm2085 = vmor %vm2069, %vm2081
    %vm2086 = vmor %vm2070, %vm2082
    %vm2087 = vmor %vm2071, %vm2083
    %vm2088 = vmor %vm2072, %vm2084
    %v2089 = vsel %vm2085, 1, 0
    %v2090 = vsel %vm2086, 1, 0
    %v2091 = vsel %vm2087, 1, 0
    %v2092 = vsel %vm2088, 1, 0
    %v2093 = vadd.s32 %v2061, %v2089
    %v2094 = vadd.s32 %v2062, %v2090
    %v2095 = vadd.s32 %v2063, %v2091
    %v2096 = vadd.s32 %v2064, %v2092
    %2097 = vset.pattern.permute.xlu0 63
    %2098 = vperm.xlu0 %2097, %v50
    %v2099 = vpop.permute.xlu0 %2098
    %vm2101 = vcmp.lt.f32.partialorder %v2099, %v55
    %vm2102 = vcmp.lt.f32.partialorder %v2099, %v59
    %vm2103 = vcmp.lt.f32.partialorder %v2099, %v63
    %vm2104 = vcmp.lt.f32.partialorder %v2099, %v67
    %vm2105 = vcmp.eq.f32.partialorder %v2099, %v55
    %vm2106 = vcmp.eq.f32.partialorder %v2099, %v59
    %vm2107 = vcmp.eq.f32.partialorder %v2099, %v63
    %vm2108 = vcmp.eq.f32.partialorder %v2099, %v67
    %vm2109 = vcmp.gt.s32.totalorder %v80, 63
    %vm2110 = vcmp.gt.s32.totalorder %v81, 63
    %vm2111 = vcmp.gt.s32.totalorder %v82, 63
    %vm2112 = vcmp.gt.s32.totalorder %v83, 63
    %vm2113 = vmand %vm2105, %vm2109
    %vm2114 = vmand %vm2106, %vm2110
    %vm2115 = vmand %vm2107, %vm2111
    %vm2116 = vmand %vm2108, %vm2112
    %vm2117 = vmor %vm2101, %vm2113
    %vm2118 = vmor %vm2102, %vm2114
    %vm2119 = vmor %vm2103, %vm2115
    %vm2120 = vmor %vm2104, %vm2116
    %v2121 = vsel %vm2117, 1, 0
    %v2122 = vsel %vm2118, 1, 0
    %v2123 = vsel %vm2119, 1, 0
    %v2124 = vsel %vm2120, 1, 0
    %v2125 = vadd.s32 %v2093, %v2121
    %v2126 = vadd.s32 %v2094, %v2122
    %v2127 = vadd.s32 %v2095, %v2123
    %v2128 = vadd.s32 %v2096, %v2124
    %v2129 = vrot.slane %v2125, 4
    %v2130 = vadd.s32 %v2125, %v2129
    %v2131 = vrot.slane %v2130, 2
    %v2132 = vadd.s32 %v2130, %v2131
    %v2133 = vrot.slane %v2132, 1
    %v2134 = vadd.s32 %v2132, %v2133
    %v2135 = vrot.slane %v2126, 4
    %v2136 = vadd.s32 %v2126, %v2135
    %v2137 = vrot.slane %v2136, 2
    %v2138 = vadd.s32 %v2136, %v2137
    %v2139 = vrot.slane %v2138, 1
    %v2140 = vadd.s32 %v2138, %v2139
    %v2141 = vrot.slane %v2127, 4
    %v2142 = vadd.s32 %v2127, %v2141
    %v2143 = vrot.slane %v2142, 2
    %v2144 = vadd.s32 %v2142, %v2143
    %v2145 = vrot.slane %v2144, 1
    %v2146 = vadd.s32 %v2144, %v2145
    %v2147 = vrot.slane %v2128, 4
    %v2148 = vadd.s32 %v2128, %v2147
    %v2149 = vrot.slane %v2148, 2
    %v2150 = vadd.s32 %v2148, %v2149
    %v2151 = vrot.slane %v2150, 1
    %v2152 = vadd.s32 %v2150, %v2151
    %vm2153 = vcmp.ge.s32.totalorder %v2134, 384
    %vm2154 = vcmp.ge.s32.totalorder %v2140, 384
    %vm2155 = vcmp.ge.s32.totalorder %v2146, 384
    %vm2156 = vcmp.ge.s32.totalorder %v2152, 384
    %v2157 = vsel %vm2153, 1, 0
    %v2158 = vsel %vm2154, 1, 0
    %v2159 = vsel %vm2155, 1, 0
    %v2160 = vsel %vm2156, 1, 0
    %v2161 = vcvt.s32.f32 %v2157
    %v2162 = vcvt.s32.f32 %v2158
    %v2163 = vcvt.s32.f32 %v2159
    %v2164 = vcvt.s32.f32 %v2160
    %v2169 = vcombine.low %v2161, %v2162
    %v2170 = vcombine.low %v2163, %v2164
    %v2172 = vunpack.c.l.s4 1966171168
    %v2173 = vunpack.c.0.s8 %v2172
    %v2174 = vlaneseq
    %v2175 = vshrl.u32 %v2174, 7
    %v2176 = vsub.s32 %v2173, %v2175
    %v2177 = vrot.slane %v2169, %v2176
    %v2179 = vunpack.c.l.s4 1966171168
    %v2180 = vunpack.c.0.s8 %v2179
    %v2181 = vlaneseq
    %v2182 = vshrl.u32 %v2181, 7
    %v2183 = vsub.s32 %v2180, %v2182
    %v2184 = vrot.slane %v2170, %v2183
    %v2185 = vcombine.low %v2177, %v2184
    %v2187 = vunpack.c.l.s4 1966171168
    %v2188 = vunpack.c.0.s8 %v2187
    %v2189 = vlaneseq
    %v2190 = vshrl.u32 %v2189, 7
    %v2191 = vsub.s32 %v2188, %v2190
    %v2192 = vrot.slane %v2185, %v2191
    %v2194 = vlaneseq
    %vm2195 = vcmp.ge.s32.totalorder %v2194, 0
    %vm2196 = vcmp.lt.s32.totalorder %v2194, 512
    %vm2197 = vmand %vm2195, %vm2196
    %2198 = vst.msk [vmem:[#allocation9] sm:$0xf] %vm2197, %v2192
    // Predicated region
    $region18: #{tpu_custom_call.1} parent=1 // pred_check
      _
    $region19: #{tpu_custom_call.1} parent=1 // pred_check_branch
      %2200 = sbr.rel (0) target = $region21
    $region20: #{tpu_custom_call.1} parent=1 // pred_region
      %s2202 = ssub.s32 64, 64
      %2203 = vsyncadd [#allocation6], %s2202
      %s2205 = sshll.u32 [#allocation9], 4
      %s2206 = int_to_ptr.vmem [resolvable:$true] %s2205
      %2208 = dma.vmem_to_hbm [thread:$0]  %s2206, 64, %s3, [#allocation6]
    $region21: #{tpu_custom_call.1} parent=1 // pred_fallthru
      _
    // Predicated region
    $region22: #{tpu_custom_call.1} parent=1 // pred_check
      _
    $region23: #{tpu_custom_call.1} parent=1 // pred_check_branch
      %2210 = sbr.rel (0) target = $region25
    $region24: #{tpu_custom_call.1} parent=1 // pred_region
      %2211 = dma.done [#allocation6], 64
    $region25: #{tpu_custom_call.1} parent=1 // pred_fallthru
      _
    %2212 = vsyncpa [#allocation5], 1
    %2213 = vsyncpa [#allocation8], 1
    %2214 = vsyncpa [#allocation6], 1

</llo_original>
